<compile_context>
chip_gen: v7x
topology: tpu7x:2x2x1
jax: 0.10.0
libtpu: 0.0.40
codegen_flags: <defaults>
</compile_context>

<pallas_src>
import math
from functools import partial

import jax
import jax.numpy as jnp
from jax.experimental import pallas as pl
from jax.experimental.pallas import tpu as pltpu


# ----------------------------- in-kernel helpers ----------------------------

def _softmax_last(x):
    m = jnp.max(x, axis=-1, keepdims=True)
    e = jnp.exp(x - m)
    return e / jnp.sum(e, axis=-1, keepdims=True)


def _layer_norm(x, gamma, beta, eps=1e-5):
    mu = jnp.mean(x, axis=-1, keepdims=True)
    xc = x - mu
    var = jnp.mean(xc * xc, axis=-1, keepdims=True)
    return xc * jax.lax.rsqrt(var + eps) * gamma + beta


def _attention(q3, k3, v3, wo, acc0, h, d_k, d_v):
    """q3:(B,Sq,h*dk) k3:(B,Sk,h*dk) v3:(B,Sk,h*dv) wo:(h*dv,D) acc0:(B*Sq,D).

    Per-head scores / PV are batched over B via dot_general (no .T, no XLU
    transpose).  Per-head outputs are accumulated into W_O row blocks starting
    from acc0 (the residual), so no jnp.concatenate and no extra add.
    1/sqrt(d_k) is already folded into W_Q.
    """
    B, Sq, _ = q3.shape
    out = acc0
    for i in range(h):                       # h is small & static -> unrolled
        qh = q3[:, :, i * d_k:(i + 1) * d_k]
        kh = k3[:, :, i * d_k:(i + 1) * d_k]
        vh = v3[:, :, i * d_v:(i + 1) * d_v]
        s = jnp.einsum('bqd,bkd->bqk', qh, kh,
                       preferred_element_type=jnp.float32)
        p = _softmax_last(s)
        ctx = jnp.einsum('bqk,bkd->bqd', p, vh,
                         preferred_element_type=jnp.float32)
        out = out + jnp.dot(ctx.reshape(B * Sq, d_v),
                            wo[i * d_v:(i + 1) * d_v, :],
                            preferred_element_type=jnp.float32)
    return out


# ------------------------------ Pallas kernel -------------------------------

def decoder_stack_kernel(x_ref, k_ref, v_ref,
                         wqkv1_ref, wo1_ref,
                         wq2_ref, wk2_ref, wv2_ref, wo2_ref,
                         w1_ref, b1_ref, w2_ref, b2_ref,
                         g1_ref, be1_ref, g2_ref, be2_ref, g3_ref, be3_ref,
                         out_ref, x_vmem, *, B, S, Sk, h, d_k, d_v):
    layer = pl.program_id(0)
    hk, hv = h * d_k, h * d_v

    @pl.when(layer == 0)
    def _():
        x_vmem[...] = x_ref[...]

    x2 = x_vmem[...]                                    # (B*S, D), f32 carry

    # --- "masked" self-attention (reference applies no mask) + add & LN ---
    # TODO(synk): nn.Dropout(0.1) is identity here (eval-mode semantics).
    qkv = jnp.dot(x2, wqkv1_ref[0], preferred_element_type=jnp.float32)
    sa = _attention(qkv[:, :hk].reshape(B, S, hk),
                    qkv[:, hk:2 * hk].reshape(B, S, hk),
                    qkv[:, 2 * hk:].reshape(B, S, hv),
                    wo1_ref[0], x2, h, d_k, d_v)
    x2 = _layer_norm(sa, g1_ref[0], be1_ref[0])

    # --- cross-attention + add & LN ---
    q3 = jnp.dot(x2, wq2_ref[0],
                 preferred_element_type=jnp.float32).reshape(B, S, hk)
    k3 = jnp.dot(k_ref[...], wk2_ref[0],
                 preferred_element_type=jnp.float32).reshape(B, Sk, hk)
    v3 = jnp.dot(v_ref[...], wv2_ref[0],
                 preferred_element_type=jnp.float32).reshape(B, Sk, hv)
    ca = _attention(q3, k3, v3, wo2_ref[0], x2, h, d_k, d_v)
    x2 = _layer_norm(ca, g2_ref[0], be2_ref[0])

    # --- feed-forward + add & LN ---
    h1 = jnp.maximum(
        jnp.dot(x2, w1_ref[0], preferred_element_type=jnp.float32) + b1_ref[0],
        0.0)
    ff = jnp.dot(h1, w2_ref[0], preferred_element_type=jnp.float32) + b2_ref[0]
    x2 = _layer_norm(ff + x2, g3_ref[0], be3_ref[0])

    x_vmem[...] = x2                                    # carry to next layer

    @pl.when(layer == pl.num_programs(0) - 1)
    def _():
        out_ref[...] = x2                               # single HBM write-back


# ------------------------- parameter packing (wrapper) ----------------------

_PACKED_ORDER = ("wqkv1", "wo1", "wq2", "wk2", "wv2", "wo2",
                 "w1", "b1", "w2", "b2",
                 "g1", "be1", "g2", "be2", "g3", "be3")


def _heads_to_cols(w):
    """(h, D, dh) -> (D, h*dh) so that x @ W gives [head0 | head1 | ...]."""
    h_, D_, dh = w.shape
    return jnp.transpose(w, (1, 0, 2)).reshape(D_, h_ * dh)


def pack_decoder_params(layer_params, h, d_k, d_v):
    inv_sqrt_dk = 1.0 / math.sqrt(d_k)

    def per_layer(p):
        wq1 = _heads_to_cols(p["wq1"]) * inv_sqrt_dk    # fold score scale
        wk1 = _heads_to_cols(p["wk1"])
        wv1 = _heads_to_cols(p["wv1"])
        return {
            "wqkv1": jnp.concatenate([wq1, wk1, wv1], axis=-1),
            "wo1": p["wo1"],
            "wq2": _heads_to_cols(p["wq2"]) * inv_sqrt_dk,
            "wk2": _heads_to_cols(p["wk2"]),
            "wv2": _heads_to_cols(p["wv2"]),
            "wo2": p["wo2"],
            "w1": p["w1"], "b1": p["b1"], "w2": p["w2"], "b2": p["b2"],
            "g1": p["g1"], "be1": p["be1"],
            "g2": p["g2"], "be2": p["be2"],
            "g3": p["g3"], "be3": p["be3"],
        }

    per = [per_layer(p) for p in layer_params]
    return {n: jnp.stack([q[n] for q in per], axis=0) for n in _PACKED_ORDER}


def decoder_forward(x, k, v, layer_params):
    B, S, D = x.shape
    Sk = k.shape[1]
    L = len(layer_params)
    h, _, d_k = layer_params[0]["wq1"].shape
    d_v = layer_params[0]["wv1"].shape[-1]

    stacked = pack_decoder_params(layer_params, h, d_k, d_v)
    weights = [stacked[n] for n in _PACKED_ORDER]

    x2d = x.reshape(B * S, D)
    k2d = k.reshape(B * Sk, D)
    v2d = v.reshape(B * Sk, D)

    in_specs = [
        pl.BlockSpec((B * S, D), lambda l: (0, 0)),        # x (read at layer 0)
        pl.BlockSpec((B * Sk, D), lambda l: (0, 0)),       # encoder k
        pl.BlockSpec((B * Sk, D), lambda l: (0, 0)),       # encoder v
    ] + [
        pl.BlockSpec((1,) + w.shape[1:],
                     lambda l, _nd=w.ndim - 1: (l,) + (0,) * _nd)
        for w in weights
    ]
    out_spec = pl.BlockSpec((B * S, D), lambda l: (0, 0))

    kernel = partial(decoder_stack_kernel,
                     B=B, S=S, Sk=Sk, h=h, d_k=d_k, d_v=d_v)
    out2d = pl.pallas_call(
        kernel,
        out_shape=jax.ShapeDtypeStruct((B * S, D), jnp.float32),
        grid=(L,),
        in_specs=in_specs,
        out_specs=out_spec,
        scratch_shapes=[pltpu.VMEM((B * S, D), jnp.float32)],
        compiler_params=pltpu.CompilerParams(
            dimension_semantics=("arbitrary",)),
    )(x2d, k2d, v2d, *weights)
    return out2d.reshape(B, S, D)


# ------------------------- parameter initialization -------------------------

def _xavier(key, shape, fan_in, fan_out):
    bound = math.sqrt(6.0 / (fan_in + fan_out))
    return jax.random.uniform(key, shape, jnp.float32, -bound, bound)


def init_decoder_params(key, n_layer, h, d_model, d_k, d_v, d_ff):
    layers = []
    for _ in range(n_layer):
        keys = jax.random.split(key, 13)
        key = keys[0]
        p = {
            # self-attention
            "wq1": _xavier(keys[1], (h, d_model, d_k), d_model, d_k),
            "wk1": _xavier(keys[2], (h, d_model, d_k), d_model, d_k),
            "wv1": _xavier(keys[3], (h, d_model, d_v), d_model, d_v),
            "wo1": _xavier(keys[4], (h * d_v, d_model), h * d_v, d_model),
            # cross-attention
            "wq2": _xavier(keys[5], (h, d_model, d_k), d_model, d_k),
            "wk2": _xavier(keys[6], (h, d_model, d_k), d_model, d_k),
            "wv2": _xavier(keys[7], (h, d_model, d_v), d_model, d_v),
            "wo2": _xavier(keys[8], (h * d_v, d_model), h * d_v, d_model),
            # feed-forward (stored transposed: x @ W + b)
            "w1": _xavier(keys[9], (d_model, d_ff), d_model, d_ff),
            "b1": jax.random.uniform(keys[10], (1, d_ff), jnp.float32, -0.1, 0.1),
            "w2": _xavier(keys[11], (d_ff, d_model), d_ff, d_model),
            "b2": jax.random.uniform(keys[12], (1, d_model), jnp.float32, -0.1, 0.1),
            # layer norms (PyTorch defaults: weight=1, bias=0)
            "g1": jnp.ones((1, d_model), jnp.float32),
            "be1": jnp.zeros((1, d_model), jnp.float32),
            "g2": jnp.ones((1, d_model), jnp.float32),
            "be2": jnp.zeros((1, d_model), jnp.float32),
            "g3": jnp.ones((1, d_model), jnp.float32),
            "be3": jnp.zeros((1, d_model), jnp.float32),
        }
        layers.append(p)
    return layers


# --------------------------- pure-JAX reference ------------------------------

def _ref_mha(xq, xk, xv, wq, wk, wv, wo, h):
    heads = []
    d_k = wq.shape[-1]
    for i in range(h):
        qh = xq @ wq[i]
        kh = xk @ wk[i]
        vh = xv @ wv[i]
        s = (qh @ kh.swapaxes(-1, -2)) / math.sqrt(d_k)
        a = jax.nn.softmax(s, axis=-1)
        heads.append(a @ vh)
    return jnp.concatenate(heads, axis=-1) @ wo


def _ref_ln(x, g, b, eps=1e-5):
    mu = jnp.mean(x, axis=-1, keepdims=True)
    var = jnp.mean((x - mu) ** 2, axis=-1, keepdims=True)
    return (x - mu) / jnp.sqrt(var + eps) * g + b


def ref_forward(x, k, v, layer_params, h):
    for p in layer_params:
        x = _ref_ln(_ref_mha(x, x, x, p["wq1"], p["wk1"], p["wv1"], p["wo1"], h) + x,
                    p["g1"], p["be1"])
        x = _ref_ln(_ref_mha(x, k, v, p["wq2"], p["wk2"], p["wv2"], p["wo2"], h) + x,
                    p["g2"], p["be2"])
        ff = jnp.maximum(x @ p["w1"] + p["b1"], 0.0) @ p["w2"] + p["b2"]
        x = _ref_ln(ff + x, p["g3"], p["be3"])
    return x


# ---------------------------------- main -------------------------------------

if __name__ == "__main__":
    n_layer, h = 2, 4
    d_model, d_k, d_v, d_ff = 32, 8, 8, 64
    B, S, Sk = 2, 8, 8

    key = jax.random.PRNGKey(0)
    kx, kk, kv, kp = jax.random.split(key, 4)
    x = jax.random.normal(kx, (B, S, d_model), jnp.float32)
    k = jax.random.normal(kk, (B, Sk, d_model), jnp.float32)
    v = jax.random.normal(kv, (B, Sk, d_model), jnp.float32)

    params = init_decoder_params(kp, n_layer, h, d_model, d_k, d_v, d_ff)

    out = decoder_forward(x, k, v, params)
    out = jax.block_until_ready(out)

    ref = ref_forward(x, k, v, params, h)
    assert out.shape == (B, S, d_model)
    err = jnp.max(jnp.abs(out - ref))
    assert jnp.allclose(out, ref, atol=1e-4, rtol=1e-4), f"max err {err}"

    print("KERNEL_OK")
</pallas_src>

<mosaic_0001>
module attributes {stable_mosaic.version = 11 : i64} {
  func.func @decoder_stack_kernel(%arg0: i32, %arg1: memref<16x32xf32, #tpu.memory_space<vmem>>, %arg2: memref<16x32xf32, #tpu.memory_space<vmem>>, %arg3: memref<16x32xf32, #tpu.memory_space<vmem>>, %arg4: memref<1x32x96xf32, #tpu.memory_space<vmem>>, %arg5: memref<1x32x32xf32, #tpu.memory_space<vmem>>, %arg6: memref<1x32x32xf32, #tpu.memory_space<vmem>>, %arg7: memref<1x32x32xf32, #tpu.memory_space<vmem>>, %arg8: memref<1x32x32xf32, #tpu.memory_space<vmem>>, %arg9: memref<1x32x32xf32, #tpu.memory_space<vmem>>, %arg10: memref<1x32x64xf32, #tpu.memory_space<vmem>>, %arg11: memref<1x1x64xf32, #tpu.memory_space<vmem>>, %arg12: memref<1x64x32xf32, #tpu.memory_space<vmem>>, %arg13: memref<1x1x32xf32, #tpu.memory_space<vmem>>, %arg14: memref<1x1x32xf32, #tpu.memory_space<vmem>>, %arg15: memref<1x1x32xf32, #tpu.memory_space<vmem>>, %arg16: memref<1x1x32xf32, #tpu.memory_space<vmem>>, %arg17: memref<1x1x32xf32, #tpu.memory_space<vmem>>, %arg18: memref<1x1x32xf32, #tpu.memory_space<vmem>>, %arg19: memref<1x1x32xf32, #tpu.memory_space<vmem>>, %arg20: memref<16x32xf32, #tpu.memory_space<vmem>>, %arg21: memref<16x32xf32, #tpu.memory_space<vmem>>) attributes {dimension_semantics = [#tpu.dimension_semantics<arbitrary>], iteration_bounds = array<i64: 2>, scalar_prefetch = 0 : i64, scratch_operands = 1 : i64, tpu.core_type = #tpu.core_type<tc>, window_params = [{pipeline_mode = #tpu.pipeline_mode<synchronous>, transform_indices = @transform_0, window_bounds = array<i64: 16, 32>}, {pipeline_mode = #tpu.pipeline_mode<synchronous>, transform_indices = @transform_1, window_bounds = array<i64: 16, 32>}, {pipeline_mode = #tpu.pipeline_mode<synchronous>, transform_indices = @transform_2, window_bounds = array<i64: 16, 32>}, {transform_indices = @transform_3, window_bounds = array<i64: 1, 32, 96>}, {transform_indices = @transform_4, window_bounds = array<i64: 1, 32, 32>}, {transform_indices = @transform_5, window_bounds = array<i64: 1, 32, 32>}, {transform_indices = @transform_6, window_bounds = array<i64: 1, 32, 32>}, {transform_indices = @transform_7, window_bounds = array<i64: 1, 32, 32>}, {transform_indices = @transform_8, window_bounds = array<i64: 1, 32, 32>}, {transform_indices = @transform_9, window_bounds = array<i64: 1, 32, 64>}, {transform_indices = @transform_10, window_bounds = array<i64: 1, 1, 64>}, {transform_indices = @transform_11, window_bounds = array<i64: 1, 64, 32>}, {transform_indices = @transform_12, window_bounds = array<i64: 1, 1, 32>}, {transform_indices = @transform_13, window_bounds = array<i64: 1, 1, 32>}, {transform_indices = @transform_14, window_bounds = array<i64: 1, 1, 32>}, {transform_indices = @transform_15, window_bounds = array<i64: 1, 1, 32>}, {transform_indices = @transform_16, window_bounds = array<i64: 1, 1, 32>}, {transform_indices = @transform_17, window_bounds = array<i64: 1, 1, 32>}, {transform_indices = @transform_18, window_bounds = array<i64: 1, 1, 32>}, {pipeline_mode = #tpu.pipeline_mode<synchronous>, transform_indices = @transform_19, window_bounds = array<i64: 16, 32>}]} {
    %c0_i32 = arith.constant 0 : i32
    %0 = arith.cmpi eq, %arg0, %c0_i32 : i32
    %1 = arith.extui %0 : i1 to i32
    %c0_i32_0 = arith.constant 0 : i32
    %2 = arith.cmpi ne, %1, %c0_i32_0 : i32
    scf.if %2 {
      %c0_118 = arith.constant 0 : index
      %c0_119 = arith.constant 0 : index
      %268 = vector.load %arg1[%c0_118, %c0_119] : memref<16x32xf32, #tpu.memory_space<vmem>>, vector<16x32xf32>
      %c0_120 = arith.constant 0 : index
      %c0_121 = arith.constant 0 : index
      %269 = vector.load %arg21[%c0_120, %c0_121] : memref<16x32xf32, #tpu.memory_space<vmem>>, vector<16x32xf32>
      tpu.vector_store %arg21[%c0_120, %c0_121], %268 {strides = array<i32>} : memref<16x32xf32, #tpu.memory_space<vmem>>, vector<16x32xf32>,
    } else {
    }
    %c0 = arith.constant 0 : index
    %c0_1 = arith.constant 0 : index
    %3 = vector.load %arg21[%c0, %c0_1] : memref<16x32xf32, #tpu.memory_space<vmem>>, vector<16x32xf32>
    %c0_2 = arith.constant 0 : index
    %c0_3 = arith.constant 0 : index
    %c0_4 = arith.constant 0 : index
    %4 = vector.load %arg4[%c0_2, %c0_3, %c0_4] : memref<1x32x96xf32, #tpu.memory_space<vmem>>, vector<1x32x96xf32>
    %5 = vector.shape_cast %4 : vector<1x32x96xf32> to vector<32x96xf32>
    %cst = arith.constant dense<0.000000e+00> : vector<16x96xf32>
    %6 = tpu.matmul %3, %5, %cst {dimension_numbers = #tpu.dot_dimension_numbers<[1], [0], [0], [1], [0, 0, 1, 1], [], []>} : vector<16x32xf32>, vector<32x96xf32>, vector<16x96xf32> -> vector<16x96xf32>
    %7 = vector.extract_strided_slice %6 {offsets = [0, 0], sizes = [16, 32], strides = [1, 1]} : vector<16x96xf32> to vector<16x32xf32>
    %8 = vector.shape_cast %7 : vector<16x32xf32> to vector<2x8x32xf32>
    %9 = vector.extract_strided_slice %6 {offsets = [0, 32], sizes = [16, 32], strides = [1, 1]} : vector<16x96xf32> to vector<16x32xf32>
    %10 = vector.shape_cast %9 : vector<16x32xf32> to vector<2x8x32xf32>
    %11 = vector.extract_strided_slice %6 {offsets = [0, 64], sizes = [16, 32], strides = [1, 1]} : vector<16x96xf32> to vector<16x32xf32>
    %12 = vector.shape_cast %11 : vector<16x32xf32> to vector<2x8x32xf32>
    %c0_5 = arith.constant 0 : index
    %c0_6 = arith.constant 0 : index
    %c0_7 = arith.constant 0 : index
    %13 = vector.load %arg5[%c0_5, %c0_6, %c0_7] : memref<1x32x32xf32, #tpu.memory_space<vmem>>, vector<1x32x32xf32>
    %14 = vector.shape_cast %13 : vector<1x32x32xf32> to vector<32x32xf32>
    %15 = vector.extract_strided_slice %8 {offsets = [0, 0, 0], sizes = [2, 8, 8], strides = [1, 1, 1]} : vector<2x8x32xf32> to vector<2x8x8xf32>
    %16 = vector.extract_strided_slice %10 {offsets = [0, 0, 0], sizes = [2, 8, 8], strides = [1, 1, 1]} : vector<2x8x32xf32> to vector<2x8x8xf32>
    %17 = vector.extract_strided_slice %12 {offsets = [0, 0, 0], sizes = [2, 8, 8], strides = [1, 1, 1]} : vector<2x8x32xf32> to vector<2x8x8xf32>
    "tpu.trace_start"() <{level = 10 : i32, message = "bqd,bkd->bqk"}> : () -> ()
    %cst_8 = arith.constant dense<0.000000e+00> : vector<2x8x8xf32>
    %18 = tpu.matmul %15, %16, %cst_8 {dimension_numbers = #tpu.dot_dimension_numbers<[2], [2], [1], [1], [0, 0, 0, 1, 1, 1], [0], [0]>} : vector<2x8x8xf32>, vector<2x8x8xf32>, vector<2x8x8xf32> -> vector<2x8x8xf32>
    "tpu.trace_stop"() : () -> ()
    %cst_9 = arith.constant dense<0xFF800000> : vector<2x8xf32>
    %19 = vector.multi_reduction <maximumf>, %18, %cst_9 [2] : vector<2x8x8xf32> to vector<2x8xf32>
    %20 = vector.shape_cast %19 : vector<2x8xf32> to vector<2x8x1xf32>
    %21 = vector.broadcast %20 : vector<2x8x1xf32> to vector<2x8x8xf32>
    %22 = arith.subf %18, %21 : vector<2x8x8xf32>
    %23 = math.exp %22 : vector<2x8x8xf32>
    %cst_10 = arith.constant dense<0.000000e+00> : vector<2x8xf32>
    %24 = vector.multi_reduction <add>, %23, %cst_10 [2] : vector<2x8x8xf32> to vector<2x8xf32>
    %25 = vector.shape_cast %24 : vector<2x8xf32> to vector<2x8x1xf32>
    %26 = vector.broadcast %25 : vector<2x8x1xf32> to vector<2x8x8xf32>
    %27 = arith.divf %23, %26 : vector<2x8x8xf32>
    "tpu.trace_start"() <{level = 10 : i32, message = "bqk,bkd->bqd"}> : () -> ()
    %cst_11 = arith.constant dense<0.000000e+00> : vector<2x8x8xf32>
    %28 = tpu.matmul %27, %17, %cst_11 {dimension_numbers = #tpu.dot_dimension_numbers<[2], [1], [1], [2], [0, 0, 0, 1, 1, 2], [0], [0]>} : vector<2x8x8xf32>, vector<2x8x8xf32>, vector<2x8x8xf32> -> vector<2x8x8xf32>
    "tpu.trace_stop"() : () -> ()
    %29 = vector.shape_cast %28 : vector<2x8x8xf32> to vector<16x8xf32>
    %30 = vector.extract_strided_slice %14 {offsets = [0, 0], sizes = [8, 32], strides = [1, 1]} : vector<32x32xf32> to vector<8x32xf32>
    %cst_12 = arith.constant dense<0.000000e+00> : vector<16x32xf32>
    %31 = tpu.matmul %29, %30, %cst_12 {dimension_numbers = #tpu.dot_dimension_numbers<[1], [0], [0], [1], [0, 0, 1, 1], [], []>} : vector<16x8xf32>, vector<8x32xf32>, vector<16x32xf32> -> vector<16x32xf32>
    %32 = arith.addf %3, %31 : vector<16x32xf32>
    %33 = vector.extract_strided_slice %8 {offsets = [0, 0, 8], sizes = [2, 8, 8], strides = [1, 1, 1]} : vector<2x8x32xf32> to vector<2x8x8xf32>
    %34 = vector.extract_strided_slice %10 {offsets = [0, 0, 8], sizes = [2, 8, 8], strides = [1, 1, 1]} : vector<2x8x32xf32> to vector<2x8x8xf32>
    %35 = vector.extract_strided_slice %12 {offsets = [0, 0, 8], sizes = [2, 8, 8], strides = [1, 1, 1]} : vector<2x8x32xf32> to vector<2x8x8xf32>
    "tpu.trace_start"() <{level = 10 : i32, message = "bqd,bkd->bqk"}> : () -> ()
    %cst_13 = arith.constant dense<0.000000e+00> : vector<2x8x8xf32>
    %36 = tpu.matmul %33, %34, %cst_13 {dimension_numbers = #tpu.dot_dimension_numbers<[2], [2], [1], [1], [0, 0, 0, 1, 1, 1], [0], [0]>} : vector<2x8x8xf32>, vector<2x8x8xf32>, vector<2x8x8xf32> -> vector<2x8x8xf32>
    "tpu.trace_stop"() : () -> ()
    %cst_14 = arith.constant dense<0xFF800000> : vector<2x8xf32>
    %37 = vector.multi_reduction <maximumf>, %36, %cst_14 [2] : vector<2x8x8xf32> to vector<2x8xf32>
    %38 = vector.shape_cast %37 : vector<2x8xf32> to vector<2x8x1xf32>
    %39 = vector.broadcast %38 : vector<2x8x1xf32> to vector<2x8x8xf32>
    %40 = arith.subf %36, %39 : vector<2x8x8xf32>
    %41 = math.exp %40 : vector<2x8x8xf32>
    %cst_15 = arith.constant dense<0.000000e+00> : vector<2x8xf32>
    %42 = vector.multi_reduction <add>, %41, %cst_15 [2] : vector<2x8x8xf32> to vector<2x8xf32>
    %43 = vector.shape_cast %42 : vector<2x8xf32> to vector<2x8x1xf32>
    %44 = vector.broadcast %43 : vector<2x8x1xf32> to vector<2x8x8xf32>
    %45 = arith.divf %41, %44 : vector<2x8x8xf32>
    "tpu.trace_start"() <{level = 10 : i32, message = "bqk,bkd->bqd"}> : () -> ()
    %cst_16 = arith.constant dense<0.000000e+00> : vector<2x8x8xf32>
    %46 = tpu.matmul %45, %35, %cst_16 {dimension_numbers = #tpu.dot_dimension_numbers<[2], [1], [1], [2], [0, 0, 0, 1, 1, 2], [0], [0]>} : vector<2x8x8xf32>, vector<2x8x8xf32>, vector<2x8x8xf32> -> vector<2x8x8xf32>
    "tpu.trace_stop"() : () -> ()
    %47 = vector.shape_cast %46 : vector<2x8x8xf32> to vector<16x8xf32>
    %48 = vector.extract_strided_slice %14 {offsets = [8, 0], sizes = [8, 32], strides = [1, 1]} : vector<32x32xf32> to vector<8x32xf32>
    %cst_17 = arith.constant dense<0.000000e+00> : vector<16x32xf32>
    %49 = tpu.matmul %47, %48, %cst_17 {dimension_numbers = #tpu.dot_dimension_numbers<[1], [0], [0], [1], [0, 0, 1, 1], [], []>} : vector<16x8xf32>, vector<8x32xf32>, vector<16x32xf32> -> vector<16x32xf32>
    %50 = arith.addf %32, %49 : vector<16x32xf32>
    %51 = vector.extract_strided_slice %8 {offsets = [0, 0, 16], sizes = [2, 8, 8], strides = [1, 1, 1]} : vector<2x8x32xf32> to vector<2x8x8xf32>
    %52 = vector.extract_strided_slice %10 {offsets = [0, 0, 16], sizes = [2, 8, 8], strides = [1, 1, 1]} : vector<2x8x32xf32> to vector<2x8x8xf32>
    %53 = vector.extract_strided_slice %12 {offsets = [0, 0, 16], sizes = [2, 8, 8], strides = [1, 1, 1]} : vector<2x8x32xf32> to vector<2x8x8xf32>
    "tpu.trace_start"() <{level = 10 : i32, message = "bqd,bkd->bqk"}> : () -> ()
    %cst_18 = arith.constant dense<0.000000e+00> : vector<2x8x8xf32>
    %54 = tpu.matmul %51, %52, %cst_18 {dimension_numbers = #tpu.dot_dimension_numbers<[2], [2], [1], [1], [0, 0, 0, 1, 1, 1], [0], [0]>} : vector<2x8x8xf32>, vector<2x8x8xf32>, vector<2x8x8xf32> -> vector<2x8x8xf32>
    "tpu.trace_stop"() : () -> ()
    %cst_19 = arith.constant dense<0xFF800000> : vector<2x8xf32>
    %55 = vector.multi_reduction <maximumf>, %54, %cst_19 [2] : vector<2x8x8xf32> to vector<2x8xf32>
    %56 = vector.shape_cast %55 : vector<2x8xf32> to vector<2x8x1xf32>
    %57 = vector.broadcast %56 : vector<2x8x1xf32> to vector<2x8x8xf32>
    %58 = arith.subf %54, %57 : vector<2x8x8xf32>
    %59 = math.exp %58 : vector<2x8x8xf32>
    %cst_20 = arith.constant dense<0.000000e+00> : vector<2x8xf32>
    %60 = vector.multi_reduction <add>, %59, %cst_20 [2] : vector<2x8x8xf32> to vector<2x8xf32>
    %61 = vector.shape_cast %60 : vector<2x8xf32> to vector<2x8x1xf32>
    %62 = vector.broadcast %61 : vector<2x8x1xf32> to vector<2x8x8xf32>
    %63 = arith.divf %59, %62 : vector<2x8x8xf32>
    "tpu.trace_start"() <{level = 10 : i32, message = "bqk,bkd->bqd"}> : () -> ()
    %cst_21 = arith.constant dense<0.000000e+00> : vector<2x8x8xf32>
    %64 = tpu.matmul %63, %53, %cst_21 {dimension_numbers = #tpu.dot_dimension_numbers<[2], [1], [1], [2], [0, 0, 0, 1, 1, 2], [0], [0]>} : vector<2x8x8xf32>, vector<2x8x8xf32>, vector<2x8x8xf32> -> vector<2x8x8xf32>
    "tpu.trace_stop"() : () -> ()
    %65 = vector.shape_cast %64 : vector<2x8x8xf32> to vector<16x8xf32>
    %66 = vector.extract_strided_slice %14 {offsets = [16, 0], sizes = [8, 32], strides = [1, 1]} : vector<32x32xf32> to vector<8x32xf32>
    %cst_22 = arith.constant dense<0.000000e+00> : vector<16x32xf32>
    %67 = tpu.matmul %65, %66, %cst_22 {dimension_numbers = #tpu.dot_dimension_numbers<[1], [0], [0], [1], [0, 0, 1, 1], [], []>} : vector<16x8xf32>, vector<8x32xf32>, vector<16x32xf32> -> vector<16x32xf32>
    %68 = arith.addf %50, %67 : vector<16x32xf32>
    %69 = vector.extract_strided_slice %8 {offsets = [0, 0, 24], sizes = [2, 8, 8], strides = [1, 1, 1]} : vector<2x8x32xf32> to vector<2x8x8xf32>
    %70 = vector.extract_strided_slice %10 {offsets = [0, 0, 24], sizes = [2, 8, 8], strides = [1, 1, 1]} : vector<2x8x32xf32> to vector<2x8x8xf32>
    %71 = vector.extract_strided_slice %12 {offsets = [0, 0, 24], sizes = [2, 8, 8], strides = [1, 1, 1]} : vector<2x8x32xf32> to vector<2x8x8xf32>
    "tpu.trace_start"() <{level = 10 : i32, message = "bqd,bkd->bqk"}> : () -> ()
    %cst_23 = arith.constant dense<0.000000e+00> : vector<2x8x8xf32>
    %72 = tpu.matmul %69, %70, %cst_23 {dimension_numbers = #tpu.dot_dimension_numbers<[2], [2], [1], [1], [0, 0, 0, 1, 1, 1], [0], [0]>} : vector<2x8x8xf32>, vector<2x8x8xf32>, vector<2x8x8xf32> -> vector<2x8x8xf32>
    "tpu.trace_stop"() : () -> ()
    %cst_24 = arith.constant dense<0xFF800000> : vector<2x8xf32>
    %73 = vector.multi_reduction <maximumf>, %72, %cst_24 [2] : vector<2x8x8xf32> to vector<2x8xf32>
    %74 = vector.shape_cast %73 : vector<2x8xf32> to vector<2x8x1xf32>
    %75 = vector.broadcast %74 : vector<2x8x1xf32> to vector<2x8x8xf32>
    %76 = arith.subf %72, %75 : vector<2x8x8xf32>
    %77 = math.exp %76 : vector<2x8x8xf32>
    %cst_25 = arith.constant dense<0.000000e+00> : vector<2x8xf32>
    %78 = vector.multi_reduction <add>, %77, %cst_25 [2] : vector<2x8x8xf32> to vector<2x8xf32>
    %79 = vector.shape_cast %78 : vector<2x8xf32> to vector<2x8x1xf32>
    %80 = vector.broadcast %79 : vector<2x8x1xf32> to vector<2x8x8xf32>
    %81 = arith.divf %77, %80 : vector<2x8x8xf32>
    "tpu.trace_start"() <{level = 10 : i32, message = "bqk,bkd->bqd"}> : () -> ()
    %cst_26 = arith.constant dense<0.000000e+00> : vector<2x8x8xf32>
    %82 = tpu.matmul %81, %71, %cst_26 {dimension_numbers = #tpu.dot_dimension_numbers<[2], [1], [1], [2], [0, 0, 0, 1, 1, 2], [0], [0]>} : vector<2x8x8xf32>, vector<2x8x8xf32>, vector<2x8x8xf32> -> vector<2x8x8xf32>
    "tpu.trace_stop"() : () -> ()
    %83 = vector.shape_cast %82 : vector<2x8x8xf32> to vector<16x8xf32>
    %84 = vector.extract_strided_slice %14 {offsets = [24, 0], sizes = [8, 32], strides = [1, 1]} : vector<32x32xf32> to vector<8x32xf32>
    %cst_27 = arith.constant dense<0.000000e+00> : vector<16x32xf32>
    %85 = tpu.matmul %83, %84, %cst_27 {dimension_numbers = #tpu.dot_dimension_numbers<[1], [0], [0], [1], [0, 0, 1, 1], [], []>} : vector<16x8xf32>, vector<8x32xf32>, vector<16x32xf32> -> vector<16x32xf32>
    %86 = arith.addf %68, %85 : vector<16x32xf32>
    %c0_28 = arith.constant 0 : index
    %c0_29 = arith.constant 0 : index
    %c0_30 = arith.constant 0 : index
    %87 = vector.load %arg14[%c0_28, %c0_29, %c0_30] : memref<1x1x32xf32, #tpu.memory_space<vmem>>, vector<1x1x32xf32>
    %88 = vector.shape_cast %87 : vector<1x1x32xf32> to vector<1x32xf32>
    %c0_31 = arith.constant 0 : index
    %c0_32 = arith.constant 0 : index
    %c0_33 = arith.constant 0 : index
    %89 = vector.load %arg15[%c0_31, %c0_32, %c0_33] : memref<1x1x32xf32, #tpu.memory_space<vmem>>, vector<1x1x32xf32>
    %90 = vector.shape_cast %89 : vector<1x1x32xf32> to vector<1x32xf32>
    %cst_34 = arith.constant dense<0.000000e+00> : vector<16xf32>
    %91 = vector.multi_reduction <add>, %86, %cst_34 [1] : vector<16x32xf32> to vector<16xf32>
    %92 = vector.shape_cast %91 : vector<16xf32> to vector<16x1xf32>
    %cst_35 = arith.constant 3.200000e+01 : f32
    %93 = vector.broadcast %cst_35 : f32 to vector<16x1xf32>
    %94 = arith.divf %92, %93 : vector<16x1xf32>
    %95 = vector.broadcast %94 : vector<16x1xf32> to vector<16x32xf32>
    %96 = arith.subf %86, %95 : vector<16x32xf32>
    %97 = arith.mulf %96, %96 : vector<16x32xf32>
    %cst_36 = arith.constant dense<0.000000e+00> : vector<16xf32>
    %98 = vector.multi_reduction <add>, %97, %cst_36 [1] : vector<16x32xf32> to vector<16xf32>
    %99 = vector.shape_cast %98 : vector<16xf32> to vector<16x1xf32>
    %cst_37 = arith.constant 3.200000e+01 : f32
    %100 = vector.broadcast %cst_37 : f32 to vector<16x1xf32>
    %101 = arith.divf %99, %100 : vector<16x1xf32>
    %cst_38 = arith.constant 9.99999974E-6 : f32
    %102 = vector.broadcast %cst_38 : f32 to vector<16x1xf32>
    %103 = arith.addf %101, %102 : vector<16x1xf32>
    %104 = math.rsqrt %103 : vector<16x1xf32>
    %105 = vector.broadcast %104 : vector<16x1xf32> to vector<16x32xf32>
    %106 = arith.mulf %96, %105 : vector<16x32xf32>
    %107 = vector.broadcast %88 : vector<1x32xf32> to vector<16x32xf32>
    %108 = arith.mulf %106, %107 : vector<16x32xf32>
    %109 = vector.broadcast %90 : vector<1x32xf32> to vector<16x32xf32>
    %110 = arith.addf %108, %109 : vector<16x32xf32>
    %c0_39 = arith.constant 0 : index
    %c0_40 = arith.constant 0 : index
    %c0_41 = arith.constant 0 : index
    %111 = vector.load %arg6[%c0_39, %c0_40, %c0_41] : memref<1x32x32xf32, #tpu.memory_space<vmem>>, vector<1x32x32xf32>
    %112 = vector.shape_cast %111 : vector<1x32x32xf32> to vector<32x32xf32>
    %cst_42 = arith.constant dense<0.000000e+00> : vector<16x32xf32>
    %113 = tpu.matmul %110, %112, %cst_42 {dimension_numbers = #tpu.dot_dimension_numbers<[1], [0], [0], [1], [0, 0, 1, 1], [], []>} : vector<16x32xf32>, vector<32x32xf32>, vector<16x32xf32> -> vector<16x32xf32>
    %114 = vector.shape_cast %113 : vector<16x32xf32> to vector<2x8x32xf32>
    %c0_43 = arith.constant 0 : index
    %c0_44 = arith.constant 0 : index
    %115 = vector.load %arg2[%c0_43, %c0_44] : memref<16x32xf32, #tpu.memory_space<vmem>>, vector<16x32xf32>
    %c0_45 = arith.constant 0 : index
    %c0_46 = arith.constant 0 : index
    %c0_47 = arith.constant 0 : index
    %116 = vector.load %arg7[%c0_45, %c0_46, %c0_47] : memref<1x32x32xf32, #tpu.memory_space<vmem>>, vector<1x32x32xf32>
    %117 = vector.shape_cast %116 : vector<1x32x32xf32> to vector<32x32xf32>
    %cst_48 = arith.constant dense<0.000000e+00> : vector<16x32xf32>
    %118 = tpu.matmul %115, %117, %cst_48 {dimension_numbers = #tpu.dot_dimension_numbers<[1], [0], [0], [1], [0, 0, 1, 1], [], []>} : vector<16x32xf32>, vector<32x32xf32>, vector<16x32xf32> -> vector<16x32xf32>
    %119 = vector.shape_cast %118 : vector<16x32xf32> to vector<2x8x32xf32>
    %c0_49 = arith.constant 0 : index
    %c0_50 = arith.constant 0 : index
    %120 = vector.load %arg3[%c0_49, %c0_50] : memref<16x32xf32, #tpu.memory_space<vmem>>, vector<16x32xf32>
    %c0_51 = arith.constant 0 : index
    %c0_52 = arith.constant 0 : index
    %c0_53 = arith.constant 0 : index
    %121 = vector.load %arg8[%c0_51, %c0_52, %c0_53] : memref<1x32x32xf32, #tpu.memory_space<vmem>>, vector<1x32x32xf32>
    %122 = vector.shape_cast %121 : vector<1x32x32xf32> to vector<32x32xf32>
    %cst_54 = arith.constant dense<0.000000e+00> : vector<16x32xf32>
    %123 = tpu.matmul %120, %122, %cst_54 {dimension_numbers = #tpu.dot_dimension_numbers<[1], [0], [0], [1], [0, 0, 1, 1], [], []>} : vector<16x32xf32>, vector<32x32xf32>, vector<16x32xf32> -> vector<16x32xf32>
    %124 = vector.shape_cast %123 : vector<16x32xf32> to vector<2x8x32xf32>
    %c0_55 = arith.constant 0 : index
    %c0_56 = arith.constant 0 : index
    %c0_57 = arith.constant 0 : index
    %125 = vector.load %arg9[%c0_55, %c0_56, %c0_57] : memref<1x32x32xf32, #tpu.memory_space<vmem>>, vector<1x32x32xf32>
    %126 = vector.shape_cast %125 : vector<1x32x32xf32> to vector<32x32xf32>
    %127 = vector.extract_strided_slice %114 {offsets = [0, 0, 0], sizes = [2, 8, 8], strides = [1, 1, 1]} : vector<2x8x32xf32> to vector<2x8x8xf32>
    %128 = vector.extract_strided_slice %119 {offsets = [0, 0, 0], sizes = [2, 8, 8], strides = [1, 1, 1]} : vector<2x8x32xf32> to vector<2x8x8xf32>
    %129 = vector.extract_strided_slice %124 {offsets = [0, 0, 0], sizes = [2, 8, 8], strides = [1, 1, 1]} : vector<2x8x32xf32> to vector<2x8x8xf32>
    "tpu.trace_start"() <{level = 10 : i32, message = "bqd,bkd->bqk"}> : () -> ()
    %cst_58 = arith.constant dense<0.000000e+00> : vector<2x8x8xf32>
    %130 = tpu.matmul %127, %128, %cst_58 {dimension_numbers = #tpu.dot_dimension_numbers<[2], [2], [1], [1], [0, 0, 0, 1, 1, 1], [0], [0]>} : vector<2x8x8xf32>, vector<2x8x8xf32>, vector<2x8x8xf32> -> vector<2x8x8xf32>
    "tpu.trace_stop"() : () -> ()
    %cst_59 = arith.constant dense<0xFF800000> : vector<2x8xf32>
    %131 = vector.multi_reduction <maximumf>, %130, %cst_59 [2] : vector<2x8x8xf32> to vector<2x8xf32>
    %132 = vector.shape_cast %131 : vector<2x8xf32> to vector<2x8x1xf32>
    %133 = vector.broadcast %132 : vector<2x8x1xf32> to vector<2x8x8xf32>
    %134 = arith.subf %130, %133 : vector<2x8x8xf32>
    %135 = math.exp %134 : vector<2x8x8xf32>
    %cst_60 = arith.constant dense<0.000000e+00> : vector<2x8xf32>
    %136 = vector.multi_reduction <add>, %135, %cst_60 [2] : vector<2x8x8xf32> to vector<2x8xf32>
    %137 = vector.shape_cast %136 : vector<2x8xf32> to vector<2x8x1xf32>
    %138 = vector.broadcast %137 : vector<2x8x1xf32> to vector<2x8x8xf32>
    %139 = arith.divf %135, %138 : vector<2x8x8xf32>
    "tpu.trace_start"() <{level = 10 : i32, message = "bqk,bkd->bqd"}> : () -> ()
    %cst_61 = arith.constant dense<0.000000e+00> : vector<2x8x8xf32>
    %140 = tpu.matmul %139, %129, %cst_61 {dimension_numbers = #tpu.dot_dimension_numbers<[2], [1], [1], [2], [0, 0, 0, 1, 1, 2], [0], [0]>} : vector<2x8x8xf32>, vector<2x8x8xf32>, vector<2x8x8xf32> -> vector<2x8x8xf32>
    "tpu.trace_stop"() : () -> ()
    %141 = vector.shape_cast %140 : vector<2x8x8xf32> to vector<16x8xf32>
    %142 = vector.extract_strided_slice %126 {offsets = [0, 0], sizes = [8, 32], strides = [1, 1]} : vector<32x32xf32> to vector<8x32xf32>
    %cst_62 = arith.constant dense<0.000000e+00> : vector<16x32xf32>
    %143 = tpu.matmul %141, %142, %cst_62 {dimension_numbers = #tpu.dot_dimension_numbers<[1], [0], [0], [1], [0, 0, 1, 1], [], []>} : vector<16x8xf32>, vector<8x32xf32>, vector<16x32xf32> -> vector<16x32xf32>
    %144 = arith.addf %110, %143 : vector<16x32xf32>
    %145 = vector.extract_strided_slice %114 {offsets = [0, 0, 8], sizes = [2, 8, 8], strides = [1, 1, 1]} : vector<2x8x32xf32> to vector<2x8x8xf32>
    %146 = vector.extract_strided_slice %119 {offsets = [0, 0, 8], sizes = [2, 8, 8], strides = [1, 1, 1]} : vector<2x8x32xf32> to vector<2x8x8xf32>
    %147 = vector.extract_strided_slice %124 {offsets = [0, 0, 8], sizes = [2, 8, 8], strides = [1, 1, 1]} : vector<2x8x32xf32> to vector<2x8x8xf32>
    "tpu.trace_start"() <{level = 10 : i32, message = "bqd,bkd->bqk"}> : () -> ()
    %cst_63 = arith.constant dense<0.000000e+00> : vector<2x8x8xf32>
    %148 = tpu.matmul %145, %146, %cst_63 {dimension_numbers = #tpu.dot_dimension_numbers<[2], [2], [1], [1], [0, 0, 0, 1, 1, 1], [0], [0]>} : vector<2x8x8xf32>, vector<2x8x8xf32>, vector<2x8x8xf32> -> vector<2x8x8xf32>
    "tpu.trace_stop"() : () -> ()
    %cst_64 = arith.constant dense<0xFF800000> : vector<2x8xf32>
    %149 = vector.multi_reduction <maximumf>, %148, %cst_64 [2] : vector<2x8x8xf32> to vector<2x8xf32>
    %150 = vector.shape_cast %149 : vector<2x8xf32> to vector<2x8x1xf32>
    %151 = vector.broadcast %150 : vector<2x8x1xf32> to vector<2x8x8xf32>
    %152 = arith.subf %148, %151 : vector<2x8x8xf32>
    %153 = math.exp %152 : vector<2x8x8xf32>
    %cst_65 = arith.constant dense<0.000000e+00> : vector<2x8xf32>
    %154 = vector.multi_reduction <add>, %153, %cst_65 [2] : vector<2x8x8xf32> to vector<2x8xf32>
    %155 = vector.shape_cast %154 : vector<2x8xf32> to vector<2x8x1xf32>
    %156 = vector.broadcast %155 : vector<2x8x1xf32> to vector<2x8x8xf32>
    %157 = arith.divf %153, %156 : vector<2x8x8xf32>
    "tpu.trace_start"() <{level = 10 : i32, message = "bqk,bkd->bqd"}> : () -> ()
    %cst_66 = arith.constant dense<0.000000e+00> : vector<2x8x8xf32>
    %158 = tpu.matmul %157, %147, %cst_66 {dimension_numbers = #tpu.dot_dimension_numbers<[2], [1], [1], [2], [0, 0, 0, 1, 1, 2], [0], [0]>} : vector<2x8x8xf32>, vector<2x8x8xf32>, vector<2x8x8xf32> -> vector<2x8x8xf32>
    "tpu.trace_stop"() : () -> ()
    %159 = vector.shape_cast %158 : vector<2x8x8xf32> to vector<16x8xf32>
    %160 = vector.extract_strided_slice %126 {offsets = [8, 0], sizes = [8, 32], strides = [1, 1]} : vector<32x32xf32> to vector<8x32xf32>
    %cst_67 = arith.constant dense<0.000000e+00> : vector<16x32xf32>
    %161 = tpu.matmul %159, %160, %cst_67 {dimension_numbers = #tpu.dot_dimension_numbers<[1], [0], [0], [1], [0, 0, 1, 1], [], []>} : vector<16x8xf32>, vector<8x32xf32>, vector<16x32xf32> -> vector<16x32xf32>
    %162 = arith.addf %144, %161 : vector<16x32xf32>
    %163 = vector.extract_strided_slice %114 {offsets = [0, 0, 16], sizes = [2, 8, 8], strides = [1, 1, 1]} : vector<2x8x32xf32> to vector<2x8x8xf32>
    %164 = vector.extract_strided_slice %119 {offsets = [0, 0, 16], sizes = [2, 8, 8], strides = [1, 1, 1]} : vector<2x8x32xf32> to vector<2x8x8xf32>
    %165 = vector.extract_strided_slice %124 {offsets = [0, 0, 16], sizes = [2, 8, 8], strides = [1, 1, 1]} : vector<2x8x32xf32> to vector<2x8x8xf32>
    "tpu.trace_start"() <{level = 10 : i32, message = "bqd,bkd->bqk"}> : () -> ()
    %cst_68 = arith.constant dense<0.000000e+00> : vector<2x8x8xf32>
    %166 = tpu.matmul %163, %164, %cst_68 {dimension_numbers = #tpu.dot_dimension_numbers<[2], [2], [1], [1], [0, 0, 0, 1, 1, 1], [0], [0]>} : vector<2x8x8xf32>, vector<2x8x8xf32>, vector<2x8x8xf32> -> vector<2x8x8xf32>
    "tpu.trace_stop"() : () -> ()
    %cst_69 = arith.constant dense<0xFF800000> : vector<2x8xf32>
    %167 = vector.multi_reduction <maximumf>, %166, %cst_69 [2] : vector<2x8x8xf32> to vector<2x8xf32>
    %168 = vector.shape_cast %167 : vector<2x8xf32> to vector<2x8x1xf32>
    %169 = vector.broadcast %168 : vector<2x8x1xf32> to vector<2x8x8xf32>
    %170 = arith.subf %166, %169 : vector<2x8x8xf32>
    %171 = math.exp %170 : vector<2x8x8xf32>
    %cst_70 = arith.constant dense<0.000000e+00> : vector<2x8xf32>
    %172 = vector.multi_reduction <add>, %171, %cst_70 [2] : vector<2x8x8xf32> to vector<2x8xf32>
    %173 = vector.shape_cast %172 : vector<2x8xf32> to vector<2x8x1xf32>
    %174 = vector.broadcast %173 : vector<2x8x1xf32> to vector<2x8x8xf32>
    %175 = arith.divf %171, %174 : vector<2x8x8xf32>
    "tpu.trace_start"() <{level = 10 : i32, message = "bqk,bkd->bqd"}> : () -> ()
    %cst_71 = arith.constant dense<0.000000e+00> : vector<2x8x8xf32>
    %176 = tpu.matmul %175, %165, %cst_71 {dimension_numbers = #tpu.dot_dimension_numbers<[2], [1], [1], [2], [0, 0, 0, 1, 1, 2], [0], [0]>} : vector<2x8x8xf32>, vector<2x8x8xf32>, vector<2x8x8xf32> -> vector<2x8x8xf32>
    "tpu.trace_stop"() : () -> ()
    %177 = vector.shape_cast %176 : vector<2x8x8xf32> to vector<16x8xf32>
    %178 = vector.extract_strided_slice %126 {offsets = [16, 0], sizes = [8, 32], strides = [1, 1]} : vector<32x32xf32> to vector<8x32xf32>
    %cst_72 = arith.constant dense<0.000000e+00> : vector<16x32xf32>
    %179 = tpu.matmul %177, %178, %cst_72 {dimension_numbers = #tpu.dot_dimension_numbers<[1], [0], [0], [1], [0, 0, 1, 1], [], []>} : vector<16x8xf32>, vector<8x32xf32>, vector<16x32xf32> -> vector<16x32xf32>
    %180 = arith.addf %162, %179 : vector<16x32xf32>
    %181 = vector.extract_strided_slice %114 {offsets = [0, 0, 24], sizes = [2, 8, 8], strides = [1, 1, 1]} : vector<2x8x32xf32> to vector<2x8x8xf32>
    %182 = vector.extract_strided_slice %119 {offsets = [0, 0, 24], sizes = [2, 8, 8], strides = [1, 1, 1]} : vector<2x8x32xf32> to vector<2x8x8xf32>
    %183 = vector.extract_strided_slice %124 {offsets = [0, 0, 24], sizes = [2, 8, 8], strides = [1, 1, 1]} : vector<2x8x32xf32> to vector<2x8x8xf32>
    "tpu.trace_start"() <{level = 10 : i32, message = "bqd,bkd->bqk"}> : () -> ()
    %cst_73 = arith.constant dense<0.000000e+00> : vector<2x8x8xf32>
    %184 = tpu.matmul %181, %182, %cst_73 {dimension_numbers = #tpu.dot_dimension_numbers<[2], [2], [1], [1], [0, 0, 0, 1, 1, 1], [0], [0]>} : vector<2x8x8xf32>, vector<2x8x8xf32>, vector<2x8x8xf32> -> vector<2x8x8xf32>
    "tpu.trace_stop"() : () -> ()
    %cst_74 = arith.constant dense<0xFF800000> : vector<2x8xf32>
    %185 = vector.multi_reduction <maximumf>, %184, %cst_74 [2] : vector<2x8x8xf32> to vector<2x8xf32>
    %186 = vector.shape_cast %185 : vector<2x8xf32> to vector<2x8x1xf32>
    %187 = vector.broadcast %186 : vector<2x8x1xf32> to vector<2x8x8xf32>
    %188 = arith.subf %184, %187 : vector<2x8x8xf32>
    %189 = math.exp %188 : vector<2x8x8xf32>
    %cst_75 = arith.constant dense<0.000000e+00> : vector<2x8xf32>
    %190 = vector.multi_reduction <add>, %189, %cst_75 [2] : vector<2x8x8xf32> to vector<2x8xf32>
    %191 = vector.shape_cast %190 : vector<2x8xf32> to vector<2x8x1xf32>
    %192 = vector.broadcast %191 : vector<2x8x1xf32> to vector<2x8x8xf32>
    %193 = arith.divf %189, %192 : vector<2x8x8xf32>
    "tpu.trace_start"() <{level = 10 : i32, message = "bqk,bkd->bqd"}> : () -> ()
    %cst_76 = arith.constant dense<0.000000e+00> : vector<2x8x8xf32>
    %194 = tpu.matmul %193, %183, %cst_76 {dimension_numbers = #tpu.dot_dimension_numbers<[2], [1], [1], [2], [0, 0, 0, 1, 1, 2], [0], [0]>} : vector<2x8x8xf32>, vector<2x8x8xf32>, vector<2x8x8xf32> -> vector<2x8x8xf32>
    "tpu.trace_stop"() : () -> ()
    %195 = vector.shape_cast %194 : vector<2x8x8xf32> to vector<16x8xf32>
    %196 = vector.extract_strided_slice %126 {offsets = [24, 0], sizes = [8, 32], strides = [1, 1]} : vector<32x32xf32> to vector<8x32xf32>
    %cst_77 = arith.constant dense<0.000000e+00> : vector<16x32xf32>
    %197 = tpu.matmul %195, %196, %cst_77 {dimension_numbers = #tpu.dot_dimension_numbers<[1], [0], [0], [1], [0, 0, 1, 1], [], []>} : vector<16x8xf32>, vector<8x32xf32>, vector<16x32xf32> -> vector<16x32xf32>
    %198 = arith.addf %180, %197 : vector<16x32xf32>
    %c0_78 = arith.constant 0 : index
    %c0_79 = arith.constant 0 : index
    %c0_80 = arith.constant 0 : index
    %199 = vector.load %arg16[%c0_78, %c0_79, %c0_80] : memref<1x1x32xf32, #tpu.memory_space<vmem>>, vector<1x1x32xf32>
    %200 = vector.shape_cast %199 : vector<1x1x32xf32> to vector<1x32xf32>
    %c0_81 = arith.constant 0 : index
    %c0_82 = arith.constant 0 : index
    %c0_83 = arith.constant 0 : index
    %201 = vector.load %arg17[%c0_81, %c0_82, %c0_83] : memref<1x1x32xf32, #tpu.memory_space<vmem>>, vector<1x1x32xf32>
    %202 = vector.shape_cast %201 : vector<1x1x32xf32> to vector<1x32xf32>
    %cst_84 = arith.constant dense<0.000000e+00> : vector<16xf32>
    %203 = vector.multi_reduction <add>, %198, %cst_84 [1] : vector<16x32xf32> to vector<16xf32>
    %204 = vector.shape_cast %203 : vector<16xf32> to vector<16x1xf32>
    %cst_85 = arith.constant 3.200000e+01 : f32
    %205 = vector.broadcast %cst_85 : f32 to vector<16x1xf32>
    %206 = arith.divf %204, %205 : vector<16x1xf32>
    %207 = vector.broadcast %206 : vector<16x1xf32> to vector<16x32xf32>
    %208 = arith.subf %198, %207 : vector<16x32xf32>
    %209 = arith.mulf %208, %208 : vector<16x32xf32>
    %cst_86 = arith.constant dense<0.000000e+00> : vector<16xf32>
    %210 = vector.multi_reduction <add>, %209, %cst_86 [1] : vector<16x32xf32> to vector<16xf32>
    %211 = vector.shape_cast %210 : vector<16xf32> to vector<16x1xf32>
    %cst_87 = arith.constant 3.200000e+01 : f32
    %212 = vector.broadcast %cst_87 : f32 to vector<16x1xf32>
    %213 = arith.divf %211, %212 : vector<16x1xf32>
    %cst_88 = arith.constant 9.99999974E-6 : f32
    %214 = vector.broadcast %cst_88 : f32 to vector<16x1xf32>
    %215 = arith.addf %213, %214 : vector<16x1xf32>
    %216 = math.rsqrt %215 : vector<16x1xf32>
    %217 = vector.broadcast %216 : vector<16x1xf32> to vector<16x32xf32>
    %218 = arith.mulf %208, %217 : vector<16x32xf32>
    %219 = vector.broadcast %200 : vector<1x32xf32> to vector<16x32xf32>
    %220 = arith.mulf %218, %219 : vector<16x32xf32>
    %221 = vector.broadcast %202 : vector<1x32xf32> to vector<16x32xf32>
    %222 = arith.addf %220, %221 : vector<16x32xf32>
    %c0_89 = arith.constant 0 : index
    %c0_90 = arith.constant 0 : index
    %c0_91 = arith.constant 0 : index
    %223 = vector.load %arg10[%c0_89, %c0_90, %c0_91] : memref<1x32x64xf32, #tpu.memory_space<vmem>>, vector<1x32x64xf32>
    %224 = vector.shape_cast %223 : vector<1x32x64xf32> to vector<32x64xf32>
    %cst_92 = arith.constant dense<0.000000e+00> : vector<16x64xf32>
    %225 = tpu.matmul %222, %224, %cst_92 {dimension_numbers = #tpu.dot_dimension_numbers<[1], [0], [0], [1], [0, 0, 1, 1], [], []>} : vector<16x32xf32>, vector<32x64xf32>, vector<16x64xf32> -> vector<16x64xf32>
    %c0_93 = arith.constant 0 : index
    %c0_94 = arith.constant 0 : index
    %c0_95 = arith.constant 0 : index
    %226 = vector.load %arg11[%c0_93, %c0_94, %c0_95] : memref<1x1x64xf32, #tpu.memory_space<vmem>>, vector<1x1x64xf32>
    %227 = vector.shape_cast %226 : vector<1x1x64xf32> to vector<1x64xf32>
    %228 = vector.broadcast %227 : vector<1x64xf32> to vector<16x64xf32>
    %229 = arith.addf %225, %228 : vector<16x64xf32>
    %cst_96 = arith.constant 0.000000e+00 : f32
    %230 = vector.broadcast %cst_96 : f32 to vector<16x64xf32>
    %231 = arith.maximumf %229, %230 : vector<16x64xf32>
    %c0_97 = arith.constant 0 : index
    %c0_98 = arith.constant 0 : index
    %c0_99 = arith.constant 0 : index
    %232 = vector.load %arg12[%c0_97, %c0_98, %c0_99] : memref<1x64x32xf32, #tpu.memory_space<vmem>>, vector<1x64x32xf32>
    %233 = vector.shape_cast %232 : vector<1x64x32xf32> to vector<64x32xf32>
    %cst_100 = arith.constant dense<0.000000e+00> : vector<16x32xf32>
    %234 = tpu.matmul %231, %233, %cst_100 {dimension_numbers = #tpu.dot_dimension_numbers<[1], [0], [0], [1], [0, 0, 1, 1], [], []>} : vector<16x64xf32>, vector<64x32xf32>, vector<16x32xf32> -> vector<16x32xf32>
    %c0_101 = arith.constant 0 : index
    %c0_102 = arith.constant 0 : index
    %c0_103 = arith.constant 0 : index
    %235 = vector.load %arg13[%c0_101, %c0_102, %c0_103] : memref<1x1x32xf32, #tpu.memory_space<vmem>>, vector<1x1x32xf32>
    %236 = vector.shape_cast %235 : vector<1x1x32xf32> to vector<1x32xf32>
    %237 = vector.broadcast %236 : vector<1x32xf32> to vector<16x32xf32>
    %238 = arith.addf %234, %237 : vector<16x32xf32>
    %239 = arith.addf %238, %222 : vector<16x32xf32>
    %c0_104 = arith.constant 0 : index
    %c0_105 = arith.constant 0 : index
    %c0_106 = arith.constant 0 : index
    %240 = vector.load %arg18[%c0_104, %c0_105, %c0_106] : memref<1x1x32xf32, #tpu.memory_space<vmem>>, vector<1x1x32xf32>
    %241 = vector.shape_cast %240 : vector<1x1x32xf32> to vector<1x32xf32>
    %c0_107 = arith.constant 0 : index
    %c0_108 = arith.constant 0 : index
    %c0_109 = arith.constant 0 : index
    %242 = vector.load %arg19[%c0_107, %c0_108, %c0_109] : memref<1x1x32xf32, #tpu.memory_space<vmem>>, vector<1x1x32xf32>
    %243 = vector.shape_cast %242 : vector<1x1x32xf32> to vector<1x32xf32>
    %cst_110 = arith.constant dense<0.000000e+00> : vector<16xf32>
    %244 = vector.multi_reduction <add>, %239, %cst_110 [1] : vector<16x32xf32> to vector<16xf32>
    %245 = vector.shape_cast %244 : vector<16xf32> to vector<16x1xf32>
    %cst_111 = arith.constant 3.200000e+01 : f32
    %246 = vector.broadcast %cst_111 : f32 to vector<16x1xf32>
    %247 = arith.divf %245, %246 : vector<16x1xf32>
    %248 = vector.broadcast %247 : vector<16x1xf32> to vector<16x32xf32>
    %249 = arith.subf %239, %248 : vector<16x32xf32>
    %250 = arith.mulf %249, %249 : vector<16x32xf32>
    %cst_112 = arith.constant dense<0.000000e+00> : vector<16xf32>
    %251 = vector.multi_reduction <add>, %250, %cst_112 [1] : vector<16x32xf32> to vector<16xf32>
    %252 = vector.shape_cast %251 : vector<16xf32> to vector<16x1xf32>
    %cst_113 = arith.constant 3.200000e+01 : f32
    %253 = vector.broadcast %cst_113 : f32 to vector<16x1xf32>
    %254 = arith.divf %252, %253 : vector<16x1xf32>
    %cst_114 = arith.constant 9.99999974E-6 : f32
    %255 = vector.broadcast %cst_114 : f32 to vector<16x1xf32>
    %256 = arith.addf %254, %255 : vector<16x1xf32>
    %257 = math.rsqrt %256 : vector<16x1xf32>
    %258 = vector.broadcast %257 : vector<16x1xf32> to vector<16x32xf32>
    %259 = arith.mulf %249, %258 : vector<16x32xf32>
    %260 = vector.broadcast %241 : vector<1x32xf32> to vector<16x32xf32>
    %261 = arith.mulf %259, %260 : vector<16x32xf32>
    %262 = vector.broadcast %243 : vector<1x32xf32> to vector<16x32xf32>
    %263 = arith.addf %261, %262 : vector<16x32xf32>
    %c0_115 = arith.constant 0 : index
    %c0_116 = arith.constant 0 : index
    %264 = vector.load %arg21[%c0_115, %c0_116] : memref<16x32xf32, #tpu.memory_space<vmem>>, vector<16x32xf32>
    tpu.vector_store %arg21[%c0_115, %c0_116], %263 {strides = array<i32>} : memref<16x32xf32, #tpu.memory_space<vmem>>, vector<16x32xf32>,
    %c1_i32 = arith.constant 1 : i32
    %265 = arith.cmpi eq, %arg0, %c1_i32 : i32
    %266 = arith.extui %265 : i1 to i32
    %c0_i32_117 = arith.constant 0 : i32
    %267 = arith.cmpi ne, %266, %c0_i32_117 : i32
    scf.if %267 {
      %c0_118 = arith.constant 0 : index
      %c0_119 = arith.constant 0 : index
      %268 = vector.load %arg20[%c0_118, %c0_119] : memref<16x32xf32, #tpu.memory_space<vmem>>, vector<16x32xf32>
      tpu.vector_store %arg20[%c0_118, %c0_119], %263 {strides = array<i32>} : memref<16x32xf32, #tpu.memory_space<vmem>>, vector<16x32xf32>,
    } else {
    }
    return
  }
  func.func @transform_0(%arg0: i32) -> (i32, i32) {
    %c0_i32 = arith.constant 0 : i32
    %c0_i32_0 = arith.constant 0 : i32
    %c0_i32_1 = arith.constant 0 : i32
    return %c0_i32, %c0_i32_0 : i32, i32
  }
  func.func @transform_1(%arg0: i32) -> (i32, i32) {
    %c0_i32 = arith.constant 0 : i32
    %c0_i32_0 = arith.constant 0 : i32
    %c0_i32_1 = arith.constant 0 : i32
    return %c0_i32, %c0_i32_0 : i32, i32
  }
  func.func @transform_2(%arg0: i32) -> (i32, i32) {
    %c0_i32 = arith.constant 0 : i32
    %c0_i32_0 = arith.constant 0 : i32
    %c0_i32_1 = arith.constant 0 : i32
    return %c0_i32, %c0_i32_0 : i32, i32
  }
  func.func @transform_3(%arg0: i32) -> (i32, i32, i32) {
    %c0_i32 = arith.constant 0 : i32
    %c0_i32_0 = arith.constant 0 : i32
    %c0_i32_1 = arith.constant 0 : i32
    return %arg0, %c0_i32, %c0_i32_0 : i32, i32, i32
  }
  func.func @transform_4(%arg0: i32) -> (i32, i32, i32) {
    %c0_i32 = arith.constant 0 : i32
    %c0_i32_0 = arith.constant 0 : i32
    %c0_i32_1 = arith.constant 0 : i32
    return %arg0, %c0_i32, %c0_i32_0 : i32, i32, i32
  }
  func.func @transform_5(%arg0: i32) -> (i32, i32, i32) {
    %c0_i32 = arith.constant 0 : i32
    %c0_i32_0 = arith.constant 0 : i32
    %c0_i32_1 = arith.constant 0 : i32
    return %arg0, %c0_i32, %c0_i32_0 : i32, i32, i32
  }
  func.func @transform_6(%arg0: i32) -> (i32, i32, i32) {
    %c0_i32 = arith.constant 0 : i32
    %c0_i32_0 = arith.constant 0 : i32
    %c0_i32_1 = arith.constant 0 : i32
    return %arg0, %c0_i32, %c0_i32_0 : i32, i32, i32
  }
  func.func @transform_7(%arg0: i32) -> (i32, i32, i32) {
    %c0_i32 = arith.constant 0 : i32
    %c0_i32_0 = arith.constant 0 : i32
    %c0_i32_1 = arith.constant 0 : i32
    return %arg0, %c0_i32, %c0_i32_0 : i32, i32, i32
  }
  func.func @transform_8(%arg0: i32) -> (i32, i32, i32) {
    %c0_i32 = arith.constant 0 : i32
    %c0_i32_0 = arith.constant 0 : i32
    %c0_i32_1 = arith.constant 0 : i32
    return %arg0, %c0_i32, %c0_i32_0 : i32, i32, i32
  }
  func.func @transform_9(%arg0: i32) -> (i32, i32, i32) {
    %c0_i32 = arith.constant 0 : i32
    %c0_i32_0 = arith.constant 0 : i32
    %c0_i32_1 = arith.constant 0 : i32
    return %arg0, %c0_i32, %c0_i32_0 : i32, i32, i32
  }
  func.func @transform_10(%arg0: i32) -> (i32, i32, i32) {
    %c0_i32 = arith.constant 0 : i32
    %c0_i32_0 = arith.constant 0 : i32
    %c0_i32_1 = arith.constant 0 : i32
    return %arg0, %c0_i32, %c0_i32_0 : i32, i32, i32
  }
  func.func @transform_11(%arg0: i32) -> (i32, i32, i32) {
    %c0_i32 = arith.constant 0 : i32
    %c0_i32_0 = arith.constant 0 : i32
    %c0_i32_1 = arith.constant 0 : i32
    return %arg0, %c0_i32, %c0_i32_0 : i32, i32, i32
  }
  func.func @transform_12(%arg0: i32) -> (i32, i32, i32) {
    %c0_i32 = arith.constant 0 : i32
    %c0_i32_0 = arith.constant 0 : i32
    %c0_i32_1 = arith.constant 0 : i32
    return %arg0, %c0_i32, %c0_i32_0 : i32, i32, i32
  }
  func.func @transform_13(%arg0: i32) -> (i32, i32, i32) {
    %c0_i32 = arith.constant 0 : i32
    %c0_i32_0 = arith.constant 0 : i32
    %c0_i32_1 = arith.constant 0 : i32
    return %arg0, %c0_i32, %c0_i32_0 : i32, i32, i32
  }
  func.func @transform_14(%arg0: i32) -> (i32, i32, i32) {
    %c0_i32 = arith.constant 0 : i32
    %c0_i32_0 = arith.constant 0 : i32
    %c0_i32_1 = arith.constant 0 : i32
    return %arg0, %c0_i32, %c0_i32_0 : i32, i32, i32
  }
  func.func @transform_15(%arg0: i32) -> (i32, i32, i32) {
    %c0_i32 = arith.constant 0 : i32
    %c0_i32_0 = arith.constant 0 : i32
    %c0_i32_1 = arith.constant 0 : i32
    return %arg0, %c0_i32, %c0_i32_0 : i32, i32, i32
  }
  func.func @transform_16(%arg0: i32) -> (i32, i32, i32) {
    %c0_i32 = arith.constant 0 : i32
    %c0_i32_0 = arith.constant 0 : i32
    %c0_i32_1 = arith.constant 0 : i32
    return %arg0, %c0_i32, %c0_i32_0 : i32, i32, i32
  }
  func.func @transform_17(%arg0: i32) -> (i32, i32, i32) {
    %c0_i32 = arith.constant 0 : i32
    %c0_i32_0 = arith.constant 0 : i32
    %c0_i32_1 = arith.constant 0 : i32
    return %arg0, %c0_i32, %c0_i32_0 : i32, i32, i32
  }
  func.func @transform_18(%arg0: i32) -> (i32, i32, i32) {
    %c0_i32 = arith.constant 0 : i32
    %c0_i32_0 = arith.constant 0 : i32
    %c0_i32_1 = arith.constant 0 : i32
    return %arg0, %c0_i32, %c0_i32_0 : i32, i32, i32
  }
  func.func @transform_19(%arg0: i32) -> (i32, i32) {
    %c0_i32 = arith.constant 0 : i32
    %c0_i32_0 = arith.constant 0 : i32
    %c0_i32_1 = arith.constant 0 : i32
    return %c0_i32, %c0_i32_0 : i32, i32
  }
}

</mosaic_0001>

<llo_original>
// kernel: tpu_custom_call.1
$region0: #{tpu_custom_call.1}
  #allocation0 [shape = 'u32[]', space=smem, size = 0x4, offset = 0x4, fixed_abs, tag = 'smem constant byte address 0x4 - core index']
  #allocation1 [shape = 'u32[144,128]{1,0:T(1,128)}', space=vmem, size = 0x12000, scoped, tag = 'internal scratch']
  #allocation2 [shape = 'f32[16,32]{1,0:T(8,128)}', space=vmem, size = 0x2000, scoped, tag = 'scratch operand']
  %s0 = inlined_call_operand.hbm [shape: f32[16,32], index: 0, kind: input, shape index: {}]
  %s1 = inlined_call_operand.hbm [shape: f32[16,32], index: 1, kind: input, shape index: {}]
  %s2 = inlined_call_operand.hbm [shape: f32[16,32], index: 2, kind: input, shape index: {}]
  %s3 = inlined_call_operand.vmem [shape: f32[2,32,96], index: 3, kind: input, shape index: {}]
  %s4 = inlined_call_operand.vmem [shape: f32[2,32,32], index: 4, kind: input, shape index: {}]
  %s5 = inlined_call_operand.vmem [shape: f32[2,32,32], index: 5, kind: input, shape index: {}]
  %s6 = inlined_call_operand.hbm [shape: f32[2,32,32], index: 6, kind: input, shape index: {}]
  %s7 = inlined_call_operand.hbm [shape: f32[2,32,32], index: 7, kind: input, shape index: {}]
  %s8 = inlined_call_operand.hbm [shape: f32[2,32,32], index: 8, kind: input, shape index: {}]
  %s9 = inlined_call_operand.hbm [shape: f32[2,32,64], index: 9, kind: input, shape index: {}]
  %s10 = inlined_call_operand.vmem [shape: f32[2,1,64], index: 10, kind: input, shape index: {}]
  %s11 = inlined_call_operand.vmem [shape: f32[2,64,32], index: 11, kind: input, shape index: {}]
  %s12 = inlined_call_operand.vmem [shape: f32[2,1,32], index: 12, kind: input, shape index: {}]
  %s13 = inlined_call_operand.vmem [shape: f32[2,1,32], index: 13, kind: input, shape index: {}]
  %s14 = inlined_call_operand.vmem [shape: f32[2,1,32], index: 14, kind: input, shape index: {}]
  %s15 = inlined_call_operand.vmem [shape: f32[2,1,32], index: 15, kind: input, shape index: {}]
  %s16 = inlined_call_operand.vmem [shape: f32[2,1,32], index: 16, kind: input, shape index: {}]
  %s17 = inlined_call_operand.vmem [shape: f32[2,1,32], index: 17, kind: input, shape index: {}]
  %s18 = inlined_call_operand.vmem [shape: f32[2,1,32], index: 18, kind: input, shape index: {}]
  %s19 = inlined_call_operand.hbm [shape: f32[16,32], index: 19, kind: output, shape index: {}]
  %s20 = sld [smem:[#allocation0]]
  $region145: #{tpu_custom_call.1} parent=0
    _
  %s22 = ssub.s32 1, %s20
  %s23 = scalar_select 0, %s22, %s20
  $region1: #{tpu_custom_call.1} parent=0
    #allocation3 [shape = 'u8[8192]{0}', space=vmem, size = 0x2000, scoped, tag = 'input window, operand 0, single buffered']
    #allocation4 [shape = 's32[2]{0}', space=sflag, size = 0x8, scoped, tag = 'scoped memory for tpu_custom_call.1']
    #allocation5 [shape = 's32[2]{0}', space=sflag, size = 0x8, scoped, tag = 'scoped memory for tpu_custom_call.1']
    #allocation6 [shape = 'u8[8192]{0}', space=vmem, size = 0x2000, scoped, tag = 'input window, operand 1, single buffered']
    #allocation7 [shape = 's32[1]{0}', space=sflag, size = 0x4, scoped, tag = 'scoped memory for tpu_custom_call.1']
    #allocation8 [shape = 'u8[8192]{0}', space=vmem, size = 0x2000, scoped, tag = 'input window, operand 2, single buffered']
    #allocation9 [shape = 'u8[32768]{0}', space=vmem, size = 0x8000, scoped, tag = 'input window, operand 6']
    #allocation10 [shape = 's32[2]{0}', space=sflag, size = 0x8, scoped, tag = 'scoped memory for tpu_custom_call.1']
    #allocation11 [shape = 'u8[32768]{0}', space=vmem, size = 0x8000, scoped, tag = 'input window, operand 7']
    #allocation12 [shape = 'u8[32768]{0}', space=vmem, size = 0x8000, scoped, tag = 'input window, operand 8']
    #allocation13 [shape = 's32[2]{0}', space=sflag, size = 0x8, scoped, tag = 'scoped memory for tpu_custom_call.1']
    #allocation14 [shape = 'u8[32768]{0}', space=vmem, size = 0x8000, scoped, tag = 'input window, operand 9']
    #allocation15 [shape = 'u8[8192]{0}', space=vmem, size = 0x2000, scoped, tag = 'output window, operand 0, single buffered']
    %24 = vsyncpa [#allocation4], 0
    %25 = vsyncpa [#allocation7], 0
    %26 = vsyncpa [#allocation10], 0
    %s27 = scalar_lea.sflag [#allocation10], 1
    %28 = vsyncpa %s27, 0
    %29 = vsyncpa [#allocation13], 0
    %s30 = scalar_lea.sflag [#allocation13], 1
    %31 = vsyncpa %s30, 0
    %32 = vsyncpa [#allocation5], 0
    loop: start=0, step=1, limit=4
    $region2: #{tpu_custom_call.1} parent=1 // loop_pre_header
      _
    $region3: #{tpu_custom_call.1} parent=1 // loop_header
      %s34 = sphi 0, %s38
      %p35 = scmp.ge.s32.totalorder %s34, 4
      %s42 = sphi 0, %s42
      %s44 = sphi 0, %s42
      %s45 = sphi 0, %s44
      %s59 = sphi 0, %s45
      %s63 = sphi 0, %s63
      %s65 = sphi 0, %s63
      %s66 = sphi 0, %s65
      %s80 = sphi 0, %s66
      %s84 = sphi 0, %s84
      %s86 = sphi 0, %s84
      %s87 = sphi 0, %s86
      %s101 = sphi 0, %s87
      %s107 = sphi 0, %s109
      %s110 = sphi 0, %s107
      %s111 = sphi 0, %s110
      %s127 = sphi 0, %s111
      %s133 = sphi 0, %s135
      %s136 = sphi 0, %s133
      %s137 = sphi 0, %s136
      %s153 = sphi 0, %s137
      %s159 = sphi 0, %s161
      %s162 = sphi 0, %s159
      %s163 = sphi 0, %s162
      %s179 = sphi 0, %s163
      %s185 = sphi 0, %s187
      %s188 = sphi 0, %s185
      %s189 = sphi 0, %s188
      %s205 = sphi 0, %s189
      %s211 = sphi 0, %s213
      %s214 = sphi 0, %s211
      %s215 = sphi 0, %s214
      %s231 = sphi 0, %s215
      %s237 = sphi 0, %s239
      %s240 = sphi 0, %s237
      %s241 = sphi 0, %s240
      %s257 = sphi 0, %s241
      %s263 = sphi 0, %s265
      %s266 = sphi 0, %s263
      %s267 = sphi 0, %s266
      %s283 = sphi 0, %s267
      %s289 = sphi 0, %s291
      %s292 = sphi 0, %s289
      %s293 = sphi 0, %s292
      %s309 = sphi 0, %s293
      %s315 = sphi 0, %s317
      %s318 = sphi 0, %s315
      %s319 = sphi 0, %s318
      %s335 = sphi 0, %s319
      %s341 = sphi 0, %s343
      %s344 = sphi 0, %s341
      %s345 = sphi 0, %s344
      %s361 = sphi 0, %s345
      %s367 = sphi 0, %s369
      %s370 = sphi 0, %s367
      %s371 = sphi 0, %s370
      %s387 = sphi 0, %s371
      %s393 = sphi 0, %s395
      %s396 = sphi 0, %s393
      %s397 = sphi 0, %s396
      %s413 = sphi 0, %s397
      %s419 = sphi 0, %s421
      %s422 = sphi 0, %s419
      %s423 = sphi 0, %s422
      %s439 = sphi 0, %s423
      %s445 = sphi 0, %s447
      %s448 = sphi 0, %s445
      %s449 = sphi 0, %s448
      %s465 = sphi 0, %s449
      %s471 = sphi 0, %s473
      %s474 = sphi 0, %s471
      %s475 = sphi 0, %s474
      %s491 = sphi 0, %s475
      %s497 = sphi 0, %s499
      %s500 = sphi 0, %s497
      %s501 = sphi 0, %s500
      %s517 = sphi 0, %s501
      %s521 = sphi 0, %s521
      %s523 = sphi 0, %s521
      %s524 = sphi 0, %s523
      %s538 = sphi 0, %s524
    $region4: #{tpu_custom_call.1} parent=1 // loop_header_branch
      %37 = sbr.rel (%p35) target = $region8
    $region5: #{tpu_custom_call.1} parent=1 // loop_body
      %s39 = ssub.s32 %s34, 1
      %s40 = ssub.s32 %s34, 2
      %s41 = sadd.s32 %s34, 1
      %s43 = sadd.s32 %s42, 1
      %p46 = scmp.eq.s32.totalorder %s34, 1
      %p47 = scmp.ne.s32.totalorder %s42, %s44
      %p48 = scmp.eq.s32.totalorder %s34, 0
      %p49 = por %p47, %p48
      %p50 = scmp.ne.s32.totalorder %s42, %s44
      %p51 = scmp.eq.s32.totalorder %s39, 1
      %p52 = por %p50, %p51
      %p53 = scmp.ne.s32.totalorder %s44, %s45
      %p54 = scmp.eq.s32.totalorder %s39, 0
      %p55 = por %p53, %p54
      %p56 = scmp.ne.s32.totalorder %s44, %s45
      %p57 = scmp.eq.s32.totalorder %s40, 1
      %p58 = por %p56, %p57
      %p60 = scmp.ne.s32.totalorder %s45, %s59
      %p61 = scmp.eq.s32.totalorder %s40, 0
      %p62 = por %p60, %p61
      %s64 = sadd.s32 %s63, 1
      %p67 = scmp.eq.s32.totalorder %s34, 1
      %p68 = scmp.ne.s32.totalorder %s63, %s65
      %p69 = scmp.eq.s32.totalorder %s34, 0
      %p70 = por %p68, %p69
      %p71 = scmp.ne.s32.totalorder %s63, %s65
      %p72 = scmp.eq.s32.totalorder %s39, 1
      %p73 = por %p71, %p72
      %p74 = scmp.ne.s32.totalorder %s65, %s66
      %p75 = scmp.eq.s32.totalorder %s39, 0
      %p76 = por %p74, %p75
      %p77 = scmp.ne.s32.totalorder %s65, %s66
      %p78 = scmp.eq.s32.totalorder %s40, 1
      %p79 = por %p77, %p78
      %p81 = scmp.ne.s32.totalorder %s66, %s80
      %p82 = scmp.eq.s32.totalorder %s40, 0
      %p83 = por %p81, %p82
      %s85 = sadd.s32 %s84, 1
      %p88 = scmp.eq.s32.totalorder %s34, 1
      %p89 = scmp.ne.s32.totalorder %s84, %s86
      %p90 = scmp.eq.s32.totalorder %s34, 0
      %p91 = por %p89, %p90
      %p92 = scmp.ne.s32.totalorder %s84, %s86
      %p93 = scmp.eq.s32.totalorder %s39, 1
      %p94 = por %p92, %p93
      %p95 = scmp.ne.s32.totalorder %s86, %s87
      %p96 = scmp.eq.s32.totalorder %s39, 0
      %p97 = por %p95, %p96
      %p98 = scmp.ne.s32.totalorder %s86, %s87
      %p99 = scmp.eq.s32.totalorder %s40, 1
      %p100 = por %p98, %p99
      %p102 = scmp.ne.s32.totalorder %s87, %s101
      %p103 = scmp.eq.s32.totalorder %s40, 0
      %p104 = por %p102, %p103
      %s105 = ssub.s32 %s34, %s41
      %p106 = scmp.eq.s32.totalorder %s105, 0
      %s108 = sadd.s32 %s107, 1
      %s109 = scalar_select %p106, %s107, %s108
      %p112 = pneg %p106
      %p113 = scmp.eq.s32.totalorder %s34, 1
      %p114 = por %p112, %p113
      %p115 = scmp.ne.s32.totalorder %s107, %s110
      %p116 = scmp.eq.s32.totalorder %s34, 0
      %p117 = por %p115, %p116
      %p118 = scmp.ne.s32.totalorder %s107, %s110
      %p119 = scmp.eq.s32.totalorder %s39, 1
      %p120 = por %p118, %p119
      %p121 = scmp.ne.s32.totalorder %s110, %s111
      %p122 = scmp.eq.s32.totalorder %s39, 0
      %p123 = por %p121, %p122
      %p124 = scmp.ne.s32.totalorder %s110, %s111
      %p125 = scmp.eq.s32.totalorder %s40, 1
      %p126 = por %p124, %p125
      %p128 = scmp.ne.s32.totalorder %s111, %s127
      %p129 = scmp.eq.s32.totalorder %s40, 0
      %p130 = por %p128, %p129
      %s131 = ssub.s32 %s34, %s41
      %p132 = scmp.eq.s32.totalorder %s131, 0
      %s134 = sadd.s32 %s133, 1
      %s135 = scalar_select %p132, %s133, %s134
      %p138 = pneg %p132
      %p139 = scmp.eq.s32.totalorder %s34, 1
      %p140 = por %p138, %p139
      %p141 = scmp.ne.s32.totalorder %s133, %s136
      %p142 = scmp.eq.s32.totalorder %s34, 0
      %p143 = por %p141, %p142
      %p144 = scmp.ne.s32.totalorder %s133, %s136
      %p145 = scmp.eq.s32.totalorder %s39, 1
      %p146 = por %p144, %p145
      %p147 = scmp.ne.s32.totalorder %s136, %s137
      %p148 = scmp.eq.s32.totalorder %s39, 0
      %p149 = por %p147, %p148
      %p150 = scmp.ne.s32.totalorder %s136, %s137
      %p151 = scmp.eq.s32.totalorder %s40, 1
      %p152 = por %p150, %p151
      %p154 = scmp.ne.s32.totalorder %s137, %s153
      %p155 = scmp.eq.s32.totalorder %s40, 0
      %p156 = por %p154, %p155
      %s157 = ssub.s32 %s34, %s41
      %p158 = scmp.eq.s32.totalorder %s157, 0
      %s160 = sadd.s32 %s159, 1
      %s161 = scalar_select %p158, %s159, %s160
      %p164 = pneg %p158
      %p165 = scmp.eq.s32.totalorder %s34, 1
      %p166 = por %p164, %p165
      %p167 = scmp.ne.s32.totalorder %s159, %s162
      %p168 = scmp.eq.s32.totalorder %s34, 0
      %p169 = por %p167, %p168
      %p170 = scmp.ne.s32.totalorder %s159, %s162
      %p171 = scmp.eq.s32.totalorder %s39, 1
      %p172 = por %p170, %p171
      %p173 = scmp.ne.s32.totalorder %s162, %s163
      %p174 = scmp.eq.s32.totalorder %s39, 0
      %p175 = por %p173, %p174
      %p176 = scmp.ne.s32.totalorder %s162, %s163
      %p177 = scmp.eq.s32.totalorder %s40, 1
      %p178 = por %p176, %p177
      %p180 = scmp.ne.s32.totalorder %s163, %s179
      %p181 = scmp.eq.s32.totalorder %s40, 0
      %p182 = por %p180, %p181
      %s183 = ssub.s32 %s34, %s41
      %p184 = scmp.eq.s32.totalorder %s183, 0
      %s186 = sadd.s32 %s185, 1
      %s187 = scalar_select %p184, %s185, %s186
      %p190 = pneg %p184
      %p191 = scmp.eq.s32.totalorder %s34, 1
      %p192 = por %p190, %p191
      %p193 = scmp.ne.s32.totalorder %s185, %s188
      %p194 = scmp.eq.s32.totalorder %s34, 0
      %p195 = por %p193, %p194
      %p196 = scmp.ne.s32.totalorder %s185, %s188
      %p197 = scmp.eq.s32.totalorder %s39, 1
      %p198 = por %p196, %p197
      %p199 = scmp.ne.s32.totalorder %s188, %s189
      %p200 = scmp.eq.s32.totalorder %s39, 0
      %p201 = por %p199, %p200
      %p202 = scmp.ne.s32.totalorder %s188, %s189
      %p203 = scmp.eq.s32.totalorder %s40, 1
      %p204 = por %p202, %p203
      %p206 = scmp.ne.s32.totalorder %s189, %s205
      %p207 = scmp.eq.s32.totalorder %s40, 0
      %p208 = por %p206, %p207
      %s209 = ssub.s32 %s34, %s41
      %p210 = scmp.eq.s32.totalorder %s209, 0
      %s212 = sadd.s32 %s211, 1
      %s213 = scalar_select %p210, %s211, %s212
      %p216 = pneg %p210
      %p217 = scmp.eq.s32.totalorder %s34, 1
      %p218 = por %p216, %p217
      %p219 = scmp.ne.s32.totalorder %s211, %s214
      %p220 = scmp.eq.s32.totalorder %s34, 0
      %p221 = por %p219, %p220
      %p222 = scmp.ne.s32.totalorder %s211, %s214
      %p223 = scmp.eq.s32.totalorder %s39, 1
      %p224 = por %p222, %p223
      %p225 = scmp.ne.s32.totalorder %s214, %s215
      %p226 = scmp.eq.s32.totalorder %s39, 0
      %p227 = por %p225, %p226
      %p228 = scmp.ne.s32.totalorder %s214, %s215
      %p229 = scmp.eq.s32.totalorder %s40, 1
      %p230 = por %p228, %p229
      %p232 = scmp.ne.s32.totalorder %s215, %s231
      %p233 = scmp.eq.s32.totalorder %s40, 0
      %p234 = por %p232, %p233
      %s235 = ssub.s32 %s34, %s41
      %p236 = scmp.eq.s32.totalorder %s235, 0
      %s238 = sadd.s32 %s237, 1
      %s239 = scalar_select %p236, %s237, %s238
      %p242 = pneg %p236
      %p243 = scmp.eq.s32.totalorder %s34, 1
      %p244 = por %p242, %p243
      %p245 = scmp.ne.s32.totalorder %s237, %s240
      %p246 = scmp.eq.s32.totalorder %s34, 0
      %p247 = por %p245, %p246
      %p248 = scmp.ne.s32.totalorder %s237, %s240
      %p249 = scmp.eq.s32.totalorder %s39, 1
      %p250 = por %p248, %p249
      %p251 = scmp.ne.s32.totalorder %s240, %s241
      %p252 = scmp.eq.s32.totalorder %s39, 0
      %p253 = por %p251, %p252
      %p254 = scmp.ne.s32.totalorder %s240, %s241
      %p255 = scmp.eq.s32.totalorder %s40, 1
      %p256 = por %p254, %p255
      %p258 = scmp.ne.s32.totalorder %s241, %s257
      %p259 = scmp.eq.s32.totalorder %s40, 0
      %p260 = por %p258, %p259
      %s261 = ssub.s32 %s34, %s41
      %p262 = scmp.eq.s32.totalorder %s261, 0
      %s264 = sadd.s32 %s263, 1
      %s265 = scalar_select %p262, %s263, %s264
      %p268 = pneg %p262
      %p269 = scmp.eq.s32.totalorder %s34, 1
      %p270 = por %p268, %p269
      %p271 = scmp.ne.s32.totalorder %s263, %s266
      %p272 = scmp.eq.s32.totalorder %s34, 0
      %p273 = por %p271, %p272
      %p274 = scmp.ne.s32.totalorder %s263, %s266
      %p275 = scmp.eq.s32.totalorder %s39, 1
      %p276 = por %p274, %p275
      %p277 = scmp.ne.s32.totalorder %s266, %s267
      %p278 = scmp.eq.s32.totalorder %s39, 0
      %p279 = por %p277, %p278
      %p280 = scmp.ne.s32.totalorder %s266, %s267
      %p281 = scmp.eq.s32.totalorder %s40, 1
      %p282 = por %p280, %p281
      %p284 = scmp.ne.s32.totalorder %s267, %s283
      %p285 = scmp.eq.s32.totalorder %s40, 0
      %p286 = por %p284, %p285
      %s287 = ssub.s32 %s34, %s41
      %p288 = scmp.eq.s32.totalorder %s287, 0
      %s290 = sadd.s32 %s289, 1
      %s291 = scalar_select %p288, %s289, %s290
      %p294 = pneg %p288
      %p295 = scmp.eq.s32.totalorder %s34, 1
      %p296 = por %p294, %p295
      %p297 = scmp.ne.s32.totalorder %s289, %s292
      %p298 = scmp.eq.s32.totalorder %s34, 0
      %p299 = por %p297, %p298
      %p300 = scmp.ne.s32.totalorder %s289, %s292
      %p301 = scmp.eq.s32.totalorder %s39, 1
      %p302 = por %p300, %p301
      %p303 = scmp.ne.s32.totalorder %s292, %s293
      %p304 = scmp.eq.s32.totalorder %s39, 0
      %p305 = por %p303, %p304
      %p306 = scmp.ne.s32.totalorder %s292, %s293
      %p307 = scmp.eq.s32.totalorder %s40, 1
      %p308 = por %p306, %p307
      %p310 = scmp.ne.s32.totalorder %s293, %s309
      %p311 = scmp.eq.s32.totalorder %s40, 0
      %p312 = por %p310, %p311
      %s313 = ssub.s32 %s34, %s41
      %p314 = scmp.eq.s32.totalorder %s313, 0
      %s316 = sadd.s32 %s315, 1
      %s317 = scalar_select %p314, %s315, %s316
      %p320 = pneg %p314
      %p321 = scmp.eq.s32.totalorder %s34, 1
      %p322 = por %p320, %p321
      %p323 = scmp.ne.s32.totalorder %s315, %s318
      %p324 = scmp.eq.s32.totalorder %s34, 0
      %p325 = por %p323, %p324
      %p326 = scmp.ne.s32.totalorder %s315, %s318
      %p327 = scmp.eq.s32.totalorder %s39, 1
      %p328 = por %p326, %p327
      %p329 = scmp.ne.s32.totalorder %s318, %s319
      %p330 = scmp.eq.s32.totalorder %s39, 0
      %p331 = por %p329, %p330
      %p332 = scmp.ne.s32.totalorder %s318, %s319
      %p333 = scmp.eq.s32.totalorder %s40, 1
      %p334 = por %p332, %p333
      %p336 = scmp.ne.s32.totalorder %s319, %s335
      %p337 = scmp.eq.s32.totalorder %s40, 0
      %p338 = por %p336, %p337
      %s339 = ssub.s32 %s34, %s41
      %p340 = scmp.eq.s32.totalorder %s339, 0
      %s342 = sadd.s32 %s341, 1
      %s343 = scalar_select %p340, %s341, %s342
      %p346 = pneg %p340
      %p347 = scmp.eq.s32.totalorder %s34, 1
      %p348 = por %p346, %p347
      %p349 = scmp.ne.s32.totalorder %s341, %s344
      %p350 = scmp.eq.s32.totalorder %s34, 0
      %p351 = por %p349, %p350
      %p352 = scmp.ne.s32.totalorder %s341, %s344
      %p353 = scmp.eq.s32.totalorder %s39, 1
      %p354 = por %p352, %p353
      %p355 = scmp.ne.s32.totalorder %s344, %s345
      %p356 = scmp.eq.s32.totalorder %s39, 0
      %p357 = por %p355, %p356
      %p358 = scmp.ne.s32.totalorder %s344, %s345
      %p359 = scmp.eq.s32.totalorder %s40, 1
      %p360 = por %p358, %p359
      %p362 = scmp.ne.s32.totalorder %s345, %s361
      %p363 = scmp.eq.s32.totalorder %s40, 0
      %p364 = por %p362, %p363
      %s365 = ssub.s32 %s34, %s41
      %p366 = scmp.eq.s32.totalorder %s365, 0
      %s368 = sadd.s32 %s367, 1
      %s369 = scalar_select %p366, %s367, %s368
      %p372 = pneg %p366
      %p373 = scmp.eq.s32.totalorder %s34, 1
      %p374 = por %p372, %p373
      %p375 = scmp.ne.s32.totalorder %s367, %s370
      %p376 = scmp.eq.s32.totalorder %s34, 0
      %p377 = por %p375, %p376
      %p378 = scmp.ne.s32.totalorder %s367, %s370
      %p379 = scmp.eq.s32.totalorder %s39, 1
      %p380 = por %p378, %p379
      %p381 = scmp.ne.s32.totalorder %s370, %s371
      %p382 = scmp.eq.s32.totalorder %s39, 0
      %p383 = por %p381, %p382
      %p384 = scmp.ne.s32.totalorder %s370, %s371
      %p385 = scmp.eq.s32.totalorder %s40, 1
      %p386 = por %p384, %p385
      %p388 = scmp.ne.s32.totalorder %s371, %s387
      %p389 = scmp.eq.s32.totalorder %s40, 0
      %p390 = por %p388, %p389
      %s391 = ssub.s32 %s34, %s41
      %p392 = scmp.eq.s32.totalorder %s391, 0
      %s394 = sadd.s32 %s393, 1
      %s395 = scalar_select %p392, %s393, %s394
      %p398 = pneg %p392
      %p399 = scmp.eq.s32.totalorder %s34, 1
      %p400 = por %p398, %p399
      %p401 = scmp.ne.s32.totalorder %s393, %s396
      %p402 = scmp.eq.s32.totalorder %s34, 0
      %p403 = por %p401, %p402
      %p404 = scmp.ne.s32.totalorder %s393, %s396
      %p405 = scmp.eq.s32.totalorder %s39, 1
      %p406 = por %p404, %p405
      %p407 = scmp.ne.s32.totalorder %s396, %s397
      %p408 = scmp.eq.s32.totalorder %s39, 0
      %p409 = por %p407, %p408
      %p410 = scmp.ne.s32.totalorder %s396, %s397
      %p411 = scmp.eq.s32.totalorder %s40, 1
      %p412 = por %p410, %p411
      %p414 = scmp.ne.s32.totalorder %s397, %s413
      %p415 = scmp.eq.s32.totalorder %s40, 0
      %p416 = por %p414, %p415
      %s417 = ssub.s32 %s34, %s41
      %p418 = scmp.eq.s32.totalorder %s417, 0
      %s420 = sadd.s32 %s419, 1
      %s421 = scalar_select %p418, %s419, %s420
      %p424 = pneg %p418
      %p425 = scmp.eq.s32.totalorder %s34, 1
      %p426 = por %p424, %p425
      %p427 = scmp.ne.s32.totalorder %s419, %s422
      %p428 = scmp.eq.s32.totalorder %s34, 0
      %p429 = por %p427, %p428
      %p430 = scmp.ne.s32.totalorder %s419, %s422
      %p431 = scmp.eq.s32.totalorder %s39, 1
      %p432 = por %p430, %p431
      %p433 = scmp.ne.s32.totalorder %s422, %s423
      %p434 = scmp.eq.s32.totalorder %s39, 0
      %p435 = por %p433, %p434
      %p436 = scmp.ne.s32.totalorder %s422, %s423
      %p437 = scmp.eq.s32.totalorder %s40, 1
      %p438 = por %p436, %p437
      %p440 = scmp.ne.s32.totalorder %s423, %s439
      %p441 = scmp.eq.s32.totalorder %s40, 0
      %p442 = por %p440, %p441
      %s443 = ssub.s32 %s34, %s41
      %p444 = scmp.eq.s32.totalorder %s443, 0
      %s446 = sadd.s32 %s445, 1
      %s447 = scalar_select %p444, %s445, %s446
      %p450 = pneg %p444
      %p451 = scmp.eq.s32.totalorder %s34, 1
      %p452 = por %p450, %p451
      %p453 = scmp.ne.s32.totalorder %s445, %s448
      %p454 = scmp.eq.s32.totalorder %s34, 0
      %p455 = por %p453, %p454
      %p456 = scmp.ne.s32.totalorder %s445, %s448
      %p457 = scmp.eq.s32.totalorder %s39, 1
      %p458 = por %p456, %p457
      %p459 = scmp.ne.s32.totalorder %s448, %s449
      %p460 = scmp.eq.s32.totalorder %s39, 0
      %p461 = por %p459, %p460
      %p462 = scmp.ne.s32.totalorder %s448, %s449
      %p463 = scmp.eq.s32.totalorder %s40, 1
      %p464 = por %p462, %p463
      %p466 = scmp.ne.s32.totalorder %s449, %s465
      %p467 = scmp.eq.s32.totalorder %s40, 0
      %p468 = por %p466, %p467
      %s469 = ssub.s32 %s34, %s41
      %p470 = scmp.eq.s32.totalorder %s469, 0
      %s472 = sadd.s32 %s471, 1
      %s473 = scalar_select %p470, %s471, %s472
      %p476 = pneg %p470
      %p477 = scmp.eq.s32.totalorder %s34, 1
      %p478 = por %p476, %p477
      %p479 = scmp.ne.s32.totalorder %s471, %s474
      %p480 = scmp.eq.s32.totalorder %s34, 0
      %p481 = por %p479, %p480
      %p482 = scmp.ne.s32.totalorder %s471, %s474
      %p483 = scmp.eq.s32.totalorder %s39, 1
      %p484 = por %p482, %p483
      %p485 = scmp.ne.s32.totalorder %s474, %s475
      %p486 = scmp.eq.s32.totalorder %s39, 0
      %p487 = por %p485, %p486
      %p488 = scmp.ne.s32.totalorder %s474, %s475
      %p489 = scmp.eq.s32.totalorder %s40, 1
      %p490 = por %p488, %p489
      %p492 = scmp.ne.s32.totalorder %s475, %s491
      %p493 = scmp.eq.s32.totalorder %s40, 0
      %p494 = por %p492, %p493
      %s495 = ssub.s32 %s34, %s41
      %p496 = scmp.eq.s32.totalorder %s495, 0
      %s498 = sadd.s32 %s497, 1
      %s499 = scalar_select %p496, %s497, %s498
      %p502 = pneg %p496
      %p503 = scmp.eq.s32.totalorder %s34, 1
      %p504 = por %p502, %p503
      %p505 = scmp.ne.s32.totalorder %s497, %s500
      %p506 = scmp.eq.s32.totalorder %s34, 0
      %p507 = por %p505, %p506
      %p508 = scmp.ne.s32.totalorder %s497, %s500
      %p509 = scmp.eq.s32.totalorder %s39, 1
      %p510 = por %p508, %p509
      %p511 = scmp.ne.s32.totalorder %s500, %s501
      %p512 = scmp.eq.s32.totalorder %s39, 0
      %p513 = por %p511, %p512
      %p514 = scmp.ne.s32.totalorder %s500, %s501
      %p515 = scmp.eq.s32.totalorder %s40, 1
      %p516 = por %p514, %p515
      %p518 = scmp.ne.s32.totalorder %s501, %s517
      %p519 = scmp.eq.s32.totalorder %s40, 0
      %p520 = por %p518, %p519
      %s522 = sadd.s32 %s521, 1
      %p525 = scmp.eq.s32.totalorder %s34, 1
      %p526 = scmp.ne.s32.totalorder %s521, %s523
      %p527 = scmp.eq.s32.totalorder %s34, 0
      %p528 = por %p526, %p527
      %p529 = scmp.ne.s32.totalorder %s521, %s523
      %p530 = scmp.eq.s32.totalorder %s39, 1
      %p531 = por %p529, %p530
      %p532 = scmp.ne.s32.totalorder %s523, %s524
      %p533 = scmp.eq.s32.totalorder %s39, 0
      %p534 = por %p532, %p533
      %p535 = scmp.ne.s32.totalorder %s523, %s524
      %p536 = scmp.eq.s32.totalorder %s40, 1
      %p537 = por %p535, %p536
      %p539 = scmp.ne.s32.totalorder %s524, %s538
      %p540 = scmp.eq.s32.totalorder %s40, 0
      %p541 = por %p539, %p540
      %p542 = scmp.le.s32.totalorder 1, %s34
      %p543 = scmp.lt.s32.totalorder %s34, 3
      %p544 = pnand %p542, %p543
      %p545 = pneg %p544
      // Predicated region
      $region9: #{tpu_custom_call.1} parent=5 // pred_check
        _
      $region10: #{tpu_custom_call.1} parent=5 // pred_check_branch
        %547 = sbr.rel (%p544) target = $region12
      $region11: #{tpu_custom_call.1} parent=5 // pred_region
        %s548 = ssub.s32 %s34, 1
        // Predicated region
        $region13: #{tpu_custom_call.1} parent=11 // pred_check
          %p549 = pneg %p55
        $region14: #{tpu_custom_call.1} parent=11 // pred_check_branch
          %551 = sbr.rel (%p549) target = $region16
        $region15: #{tpu_custom_call.1} parent=11 // pred_region
          %s553 = ssub.s32 256, 256
          %554 = vsyncadd [#allocation4], %s553
          %s555 = sshll.u32 [#allocation3], 4
          %s556 = int_to_ptr.vmem [resolvable:$true] %s555
          %561 = dma.hbm_to_vmem [thread:$0]  %s0, 256, %s556, [#allocation4], 128, 128, 8
        $region16: #{tpu_custom_call.1} parent=11 // pred_fallthru
          _
        // Predicated region
        $region17: #{tpu_custom_call.1} parent=11 // pred_check
          %p562 = pneg %p76
        $region18: #{tpu_custom_call.1} parent=11 // pred_check_branch
          %564 = sbr.rel (%p562) target = $region20
        $region19: #{tpu_custom_call.1} parent=11 // pred_region
          %s566 = ssub.s32 256, 256
          %567 = vsyncadd [#allocation7], %s566
          %s568 = sshll.u32 [#allocation6], 4
          %s569 = int_to_ptr.vmem [resolvable:$true] %s568
          %574 = dma.hbm_to_vmem [thread:$0]  %s1, 256, %s569, [#allocation7], 128, 128, 8
        $region20: #{tpu_custom_call.1} parent=11 // pred_fallthru
          _
        // Predicated region
        $region21: #{tpu_custom_call.1} parent=11 // pred_check
          %p575 = pneg %p97
        $region22: #{tpu_custom_call.1} parent=11 // pred_check_branch
          %577 = sbr.rel (%p575) target = $region24
        $region23: #{tpu_custom_call.1} parent=11 // pred_region
          %s579 = ssub.s32 256, 256
          %580 = vsyncadd [#allocation7], %s579
          %s581 = sshll.u32 [#allocation8], 4
          %s582 = int_to_ptr.vmem [resolvable:$true] %s581
          %587 = dma.hbm_to_vmem [thread:$0]  %s2, 256, %s582, [#allocation7], 128, 128, 8
        $region24: #{tpu_custom_call.1} parent=11 // pred_fallthru
          _
      $region12: #{tpu_custom_call.1} parent=5 // pred_fallthru
        _
      %p588 = scmp.lt.s32.totalorder %s34, 2
      // Predicated region
      $region25: #{tpu_custom_call.1} parent=5 // pred_check
        %p589 = pneg %p588
      $region26: #{tpu_custom_call.1} parent=5 // pred_check_branch
        %591 = sbr.rel (%p589) target = $region28
      $region27: #{tpu_custom_call.1} parent=5 // pred_region
        // Predicated region
        $region29: #{tpu_custom_call.1} parent=27 // pred_check
          %p592 = pneg %p117
        $region30: #{tpu_custom_call.1} parent=27 // pred_check_branch
          %594 = sbr.rel (%p592) target = $region32
        $region31: #{tpu_custom_call.1} parent=27 // pred_region
          %p595 = scmp.lt.s32.totalorder %s34, 1
          %s596 = scalar_select %p595, %s34, 1
          %s597 = smul.addr %s596, 4
          %s598 = smul.addr %s597, 8
          %s599 = scalar_lea.vmem %s3, %s598
        $region32: #{tpu_custom_call.1} parent=27 // pred_fallthru
          _
        // Predicated region
        $region33: #{tpu_custom_call.1} parent=27 // pred_check
          %p600 = pneg %p143
        $region34: #{tpu_custom_call.1} parent=27 // pred_check_branch
          %602 = sbr.rel (%p600) target = $region36
        $region35: #{tpu_custom_call.1} parent=27 // pred_region
          %p603 = scmp.lt.s32.totalorder %s34, 1
          %s604 = scalar_select %p603, %s34, 1
          %s605 = smul.addr %s604, 4
          %s606 = smul.addr %s605, 8
          %s607 = scalar_lea.vmem %s4, %s606
        $region36: #{tpu_custom_call.1} parent=27 // pred_fallthru
          _
        // Predicated region
        $region37: #{tpu_custom_call.1} parent=27 // pred_check
          %p608 = pneg %p169
        $region38: #{tpu_custom_call.1} parent=27 // pred_check_branch
          %610 = sbr.rel (%p608) target = $region40
        $region39: #{tpu_custom_call.1} parent=27 // pred_region
          %p611 = scmp.lt.s32.totalorder %s34, 1
          %s612 = scalar_select %p611, %s34, 1
          %s613 = smul.addr %s612, 4
          %s614 = smul.addr %s613, 8
          %s615 = scalar_lea.vmem %s5, %s614
        $region40: #{tpu_custom_call.1} parent=27 // pred_fallthru
          _
        // Predicated region
        $region41: #{tpu_custom_call.1} parent=27 // pred_check
          %p616 = pneg %p195
        $region42: #{tpu_custom_call.1} parent=27 // pred_check_branch
          %618 = sbr.rel (%p616) target = $region44
        $region43: #{tpu_custom_call.1} parent=27 // pred_region
          %s619 = sand.u32 %s34, 1
          %s620 = scalar_lea.sflag [#allocation10], %s619
          %s621 = sand.u32 %s185, 1
          %s622 = smul.addr %s621, 32
          %s623 = scalar_lea.vmem [#allocation9], %s622
          %s625 = ssub.s32 512, 512
          %626 = vsyncadd %s620, %s625
          %s627 = smul.addr %s34, 4
          %s628 = smul.addr %s627, 128
          %s629 = scalar_lea.hbm %s6, %s628
          %s630 = sshll.u32 %s623, 4
          %s631 = int_to_ptr.vmem [resolvable:$true] %s630
          %636 = dma.hbm_to_vmem [thread:$0]  %s629, 512, %s631, %s620, 128, 128, 8
        $region44: #{tpu_custom_call.1} parent=27 // pred_fallthru
          _
        // Predicated region
        $region45: #{tpu_custom_call.1} parent=27 // pred_check
          %p637 = pneg %p221
        $region46: #{tpu_custom_call.1} parent=27 // pred_check_branch
          %639 = sbr.rel (%p637) target = $region48
        $region47: #{tpu_custom_call.1} parent=27 // pred_region
          %s640 = sand.u32 %s34, 1
          %s641 = scalar_lea.sflag [#allocation10], %s640
          %s642 = sand.u32 %s211, 1
          %s643 = smul.addr %s642, 32
          %s644 = scalar_lea.vmem [#allocation11], %s643
          %s646 = ssub.s32 512, 512
          %647 = vsyncadd %s641, %s646
          %s648 = smul.addr %s34, 4
          %s649 = smul.addr %s648, 128
          %s650 = scalar_lea.hbm %s7, %s649
          %s651 = sshll.u32 %s644, 4
          %s652 = int_to_ptr.vmem [resolvable:$true] %s651
          %657 = dma.hbm_to_vmem [thread:$0]  %s650, 512, %s652, %s641, 128, 128, 8
        $region48: #{tpu_custom_call.1} parent=27 // pred_fallthru
          _
        // Predicated region
        $region49: #{tpu_custom_call.1} parent=27 // pred_check
          %p658 = pneg %p247
        $region50: #{tpu_custom_call.1} parent=27 // pred_check_branch
          %660 = sbr.rel (%p658) target = $region52
        $region51: #{tpu_custom_call.1} parent=27 // pred_region
          %s661 = sand.u32 %s34, 1
          %s662 = scalar_lea.sflag [#allocation13], %s661
          %s663 = sand.u32 %s237, 1
          %s664 = smul.addr %s663, 32
          %s665 = scalar_lea.vmem [#allocation12], %s664
          %s667 = ssub.s32 512, 512
          %668 = vsyncadd %s662, %s667
          %s669 = smul.addr %s34, 4
          %s670 = smul.addr %s669, 128
          %s671 = scalar_lea.hbm %s8, %s670
          %s672 = sshll.u32 %s665, 4
          %s673 = int_to_ptr.vmem [resolvable:$true] %s672
          %678 = dma.hbm_to_vmem [thread:$0]  %s671, 512, %s673, %s662, 128, 128, 8
        $region52: #{tpu_custom_call.1} parent=27 // pred_fallthru
          _
        // Predicated region
        $region53: #{tpu_custom_call.1} parent=27 // pred_check
          %p679 = pneg %p273
        $region54: #{tpu_custom_call.1} parent=27 // pred_check_branch
          %681 = sbr.rel (%p679) target = $region56
        $region55: #{tpu_custom_call.1} parent=27 // pred_region
          %s682 = sand.u32 %s34, 1
          %s683 = scalar_lea.sflag [#allocation13], %s682
          %s684 = sand.u32 %s263, 1
          %s685 = smul.addr %s684, 32
          %s686 = scalar_lea.vmem [#allocation14], %s685
          %s688 = ssub.s32 512, 512
          %689 = vsyncadd %s683, %s688
          %s690 = smul.addr %s34, 4
          %s691 = smul.addr %s690, 128
          %s692 = scalar_lea.hbm %s9, %s691
          %s693 = sshll.u32 %s686, 4
          %s694 = int_to_ptr.vmem [resolvable:$true] %s693
          %699 = dma.hbm_to_vmem [thread:$0]  %s692, 512, %s694, %s683, 128, 128, 8
        $region56: #{tpu_custom_call.1} parent=27 // pred_fallthru
          _
        // Predicated region
        $region57: #{tpu_custom_call.1} parent=27 // pred_check
          %p700 = pneg %p299
        $region58: #{tpu_custom_call.1} parent=27 // pred_check_branch
          %702 = sbr.rel (%p700) target = $region60
        $region59: #{tpu_custom_call.1} parent=27 // pred_region
          %p703 = scmp.lt.s32.totalorder %s34, 1
          %s704 = scalar_select %p703, %s34, 1
          %s705 = scalar_lea.vmem %s10, %s704
        $region60: #{tpu_custom_call.1} parent=27 // pred_fallthru
          _
        // Predicated region
        $region61: #{tpu_custom_call.1} parent=27 // pred_check
          %p706 = pneg %p325
        $region62: #{tpu_custom_call.1} parent=27 // pred_check_branch
          %708 = sbr.rel (%p706) target = $region64
        $region63: #{tpu_custom_call.1} parent=27 // pred_region
          %p709 = scmp.lt.s32.totalorder %s34, 1
          %s710 = scalar_select %p709, %s34, 1
          %s711 = smul.addr %s710, 8
          %s712 = smul.addr %s711, 8
          %s713 = scalar_lea.vmem %s11, %s712
        $region64: #{tpu_custom_call.1} parent=27 // pred_fallthru
          _
        // Predicated region
        $region65: #{tpu_custom_call.1} parent=27 // pred_check
          %p714 = pneg %p351
        $region66: #{tpu_custom_call.1} parent=27 // pred_check_branch
          %716 = sbr.rel (%p714) target = $region68
        $region67: #{tpu_custom_call.1} parent=27 // pred_region
          %p717 = scmp.lt.s32.totalorder %s34, 1
          %s718 = scalar_select %p717, %s34, 1
          %s719 = scalar_lea.vmem %s12, %s718
        $region68: #{tpu_custom_call.1} parent=27 // pred_fallthru
          _
        // Predicated region
        $region69: #{tpu_custom_call.1} parent=27 // pred_check
          %p720 = pneg %p377
        $region70: #{tpu_custom_call.1} parent=27 // pred_check_branch
          %722 = sbr.rel (%p720) target = $region72
        $region71: #{tpu_custom_call.1} parent=27 // pred_region
          %p723 = scmp.lt.s32.totalorder %s34, 1
          %s724 = scalar_select %p723, %s34, 1
          %s725 = scalar_lea.vmem %s13, %s724
        $region72: #{tpu_custom_call.1} parent=27 // pred_fallthru
          _
        // Predicated region
        $region73: #{tpu_custom_call.1} parent=27 // pred_check
          %p726 = pneg %p403
        $region74: #{tpu_custom_call.1} parent=27 // pred_check_branch
          %728 = sbr.rel (%p726) target = $region76
        $region75: #{tpu_custom_call.1} parent=27 // pred_region
          %p729 = scmp.lt.s32.totalorder %s34, 1
          %s730 = scalar_select %p729, %s34, 1
          %s731 = scalar_lea.vmem %s14, %s730
        $region76: #{tpu_custom_call.1} parent=27 // pred_fallthru
          _
        // Predicated region
        $region77: #{tpu_custom_call.1} parent=27 // pred_check
          %p732 = pneg %p429
        $region78: #{tpu_custom_call.1} parent=27 // pred_check_branch
          %734 = sbr.rel (%p732) target = $region80
        $region79: #{tpu_custom_call.1} parent=27 // pred_region
          %p735 = scmp.lt.s32.totalorder %s34, 1
          %s736 = scalar_select %p735, %s34, 1
          %s737 = scalar_lea.vmem %s15, %s736
        $region80: #{tpu_custom_call.1} parent=27 // pred_fallthru
          _
        // Predicated region
        $region81: #{tpu_custom_call.1} parent=27 // pred_check
          %p738 = pneg %p455
        $region82: #{tpu_custom_call.1} parent=27 // pred_check_branch
          %740 = sbr.rel (%p738) target = $region84
        $region83: #{tpu_custom_call.1} parent=27 // pred_region
          %p741 = scmp.lt.s32.totalorder %s34, 1
          %s742 = scalar_select %p741, %s34, 1
          %s743 = scalar_lea.vmem %s16, %s742
        $region84: #{tpu_custom_call.1} parent=27 // pred_fallthru
          _
        // Predicated region
        $region85: #{tpu_custom_call.1} parent=27 // pred_check
          %p744 = pneg %p481
        $region86: #{tpu_custom_call.1} parent=27 // pred_check_branch
          %746 = sbr.rel (%p744) target = $region88
        $region87: #{tpu_custom_call.1} parent=27 // pred_region
          %p747 = scmp.lt.s32.totalorder %s34, 1
          %s748 = scalar_select %p747, %s34, 1
          %s749 = scalar_lea.vmem %s17, %s748
        $region88: #{tpu_custom_call.1} parent=27 // pred_fallthru
          _
        // Predicated region
        $region89: #{tpu_custom_call.1} parent=27 // pred_check
          %p750 = pneg %p507
        $region90: #{tpu_custom_call.1} parent=27 // pred_check_branch
          %752 = sbr.rel (%p750) target = $region92
        $region91: #{tpu_custom_call.1} parent=27 // pred_region
          %p753 = scmp.lt.s32.totalorder %s34, 1
          %s754 = scalar_select %p753, %s34, 1
          %s755 = scalar_lea.vmem %s18, %s754
        $region92: #{tpu_custom_call.1} parent=27 // pred_fallthru
          _
      $region28: #{tpu_custom_call.1} parent=5 // pred_fallthru
        _
      %p756 = scmp.le.s32.totalorder 1, %s34
      %p757 = scmp.lt.s32.totalorder %s34, 3
      %p758 = pnand %p756, %p757
      %p759 = pneg %p758
      // Predicated region
      $region93: #{tpu_custom_call.1} parent=5 // pred_check
        _
      $region94: #{tpu_custom_call.1} parent=5 // pred_check_branch
        %761 = sbr.rel (%p758) target = $region96
      $region95: #{tpu_custom_call.1} parent=5 // pred_region
        %s762 = ssub.s32 %s34, 1
        // Predicated region
        $region97: #{tpu_custom_call.1} parent=95 // pred_check
          %p763 = pneg %p55
        $region98: #{tpu_custom_call.1} parent=95 // pred_check_branch
          %765 = sbr.rel (%p763) target = $region100
        $region99: #{tpu_custom_call.1} parent=95 // pred_region
          %766 = dma.done [#allocation4], 256
        $region100: #{tpu_custom_call.1} parent=95 // pred_fallthru
          _
        // Predicated region
        $region101: #{tpu_custom_call.1} parent=95 // pred_check
          %p767 = pneg %p76
        $region102: #{tpu_custom_call.1} parent=95 // pred_check_branch
          %769 = sbr.rel (%p767) target = $region104
        $region103: #{tpu_custom_call.1} parent=95 // pred_region
          %770 = dma.done [#allocation7], 256
        $region104: #{tpu_custom_call.1} parent=95 // pred_fallthru
          _
        // Predicated region
        $region105: #{tpu_custom_call.1} parent=95 // pred_check
          %p771 = pneg %p97
        $region106: #{tpu_custom_call.1} parent=95 // pred_check_branch
          %773 = sbr.rel (%p771) target = $region108
        $region107: #{tpu_custom_call.1} parent=95 // pred_region
          %774 = dma.done [#allocation7], 256
        $region108: #{tpu_custom_call.1} parent=95 // pred_fallthru
          _
        %s775 = sand.u32 %s39, 1
        %s776 = scalar_lea.sflag [#allocation10], %s775
        %s777 = sand.u32 %s188, 1
        %s778 = smul.addr %s777, 32
        %s779 = scalar_lea.vmem [#allocation9], %s778
        // Predicated region
        $region109: #{tpu_custom_call.1} parent=95 // pred_check
          %p780 = pneg %p201
        $region110: #{tpu_custom_call.1} parent=95 // pred_check_branch
          %782 = sbr.rel (%p780) target = $region112
        $region111: #{tpu_custom_call.1} parent=95 // pred_region
          %783 = dma.done %s776, 512
        $region112: #{tpu_custom_call.1} parent=95 // pred_fallthru
          _
        %s784 = sand.u32 %s39, 1
        %s785 = scalar_lea.sflag [#allocation10], %s784
        %s786 = sand.u32 %s214, 1
        %s787 = smul.addr %s786, 32
        %s788 = scalar_lea.vmem [#allocation11], %s787
        // Predicated region
        $region113: #{tpu_custom_call.1} parent=95 // pred_check
          %p789 = pneg %p227
        $region114: #{tpu_custom_call.1} parent=95 // pred_check_branch
          %791 = sbr.rel (%p789) target = $region116
        $region115: #{tpu_custom_call.1} parent=95 // pred_region
          %792 = dma.done %s785, 512
        $region116: #{tpu_custom_call.1} parent=95 // pred_fallthru
          _
        %s793 = sand.u32 %s39, 1
        %s794 = scalar_lea.sflag [#allocation13], %s793
        %s795 = sand.u32 %s240, 1
        %s796 = smul.addr %s795, 32
        %s797 = scalar_lea.vmem [#allocation12], %s796
        // Predicated region
        $region117: #{tpu_custom_call.1} parent=95 // pred_check
          %p798 = pneg %p253
        $region118: #{tpu_custom_call.1} parent=95 // pred_check_branch
          %800 = sbr.rel (%p798) target = $region120
        $region119: #{tpu_custom_call.1} parent=95 // pred_region
          %801 = dma.done %s794, 512
        $region120: #{tpu_custom_call.1} parent=95 // pred_fallthru
          _
        %s802 = sand.u32 %s39, 1
        %s803 = scalar_lea.sflag [#allocation13], %s802
        %s804 = sand.u32 %s266, 1
        %s805 = smul.addr %s804, 32
        %s806 = scalar_lea.vmem [#allocation14], %s805
        // Predicated region
        $region121: #{tpu_custom_call.1} parent=95 // pred_check
          %p807 = pneg %p279
        $region122: #{tpu_custom_call.1} parent=95 // pred_check_branch
          %809 = sbr.rel (%p807) target = $region124
        $region123: #{tpu_custom_call.1} parent=95 // pred_region
          %810 = dma.done %s803, 512
        $region124: #{tpu_custom_call.1} parent=95 // pred_fallthru
          _
        %p811 = pneg %p55
        %p812 = pneg %p52
        %p813 = pneg %p76
        %p814 = pneg %p73
        %p815 = pneg %p97
        %p816 = pneg %p94
        %p817 = scmp.lt.s32.totalorder %s39, 1
        %s818 = scalar_select %p817, %s39, 1
        %s819 = smul.addr %s818, 4
        %s820 = smul.addr %s819, 8
        %s821 = scalar_lea.vmem %s3, %s820
        %p822 = pneg %p123
        %p823 = pneg %p120
        %p824 = scmp.lt.s32.totalorder %s39, 1
        %s825 = scalar_select %p824, %s39, 1
        %s826 = smul.addr %s825, 4
        %s827 = smul.addr %s826, 8
        %s828 = scalar_lea.vmem %s4, %s827
        %p829 = pneg %p149
        %p830 = pneg %p146
        %p831 = scmp.lt.s32.totalorder %s39, 1
        %s832 = scalar_select %p831, %s39, 1
        %s833 = smul.addr %s832, 4
        %s834 = smul.addr %s833, 8
        %s835 = scalar_lea.vmem %s5, %s834
        %p836 = pneg %p175
        %p837 = pneg %p172
        %s838 = sand.u32 %s39, 1
        %s839 = scalar_lea.sflag [#allocation10], %s838
        %s840 = sand.u32 %s188, 1
        %s841 = smul.addr %s840, 32
        %s842 = scalar_lea.vmem [#allocation9], %s841
        %p843 = pneg %p201
        %p844 = pneg %p198
        %s845 = sand.u32 %s39, 1
        %s846 = scalar_lea.sflag [#allocation10], %s845
        %s847 = sand.u32 %s214, 1
        %s848 = smul.addr %s847, 32
        %s849 = scalar_lea.vmem [#allocation11], %s848
        %p850 = pneg %p227
        %p851 = pneg %p224
        %s852 = sand.u32 %s39, 1
        %s853 = scalar_lea.sflag [#allocation13], %s852
        %s854 = sand.u32 %s240, 1
        %s855 = smul.addr %s854, 32
        %s856 = scalar_lea.vmem [#allocation12], %s855
        %p857 = pneg %p253
        %p858 = pneg %p250
        %s859 = sand.u32 %s39, 1
        %s860 = scalar_lea.sflag [#allocation13], %s859
        %s861 = sand.u32 %s266, 1
        %s862 = smul.addr %s861, 32
        %s863 = scalar_lea.vmem [#allocation14], %s862
        %p864 = pneg %p279
        %p865 = pneg %p276
        %p866 = scmp.lt.s32.totalorder %s39, 1
        %s867 = scalar_select %p866, %s39, 1
        %s868 = scalar_lea.vmem %s10, %s867
        %p869 = pneg %p305
        %p870 = pneg %p302
        %p871 = scmp.lt.s32.totalorder %s39, 1
        %s872 = scalar_select %p871, %s39, 1
        %s873 = smul.addr %s872, 8
        %s874 = smul.addr %s873, 8
        %s875 = scalar_lea.vmem %s11, %s874
        %p876 = pneg %p331
        %p877 = pneg %p328
        %p878 = scmp.lt.s32.totalorder %s39, 1
        %s879 = scalar_select %p878, %s39, 1
        %s880 = scalar_lea.vmem %s12, %s879
        %p881 = pneg %p357
        %p882 = pneg %p354
        %p883 = scmp.lt.s32.totalorder %s39, 1
        %s884 = scalar_select %p883, %s39, 1
        %s885 = scalar_lea.vmem %s13, %s884
        %p886 = pneg %p383
        %p887 = pneg %p380
        %p888 = scmp.lt.s32.totalorder %s39, 1
        %s889 = scalar_select %p888, %s39, 1
        %s890 = scalar_lea.vmem %s14, %s889
        %p891 = pneg %p409
        %p892 = pneg %p406
        %p893 = scmp.lt.s32.totalorder %s39, 1
        %s894 = scalar_select %p893, %s39, 1
        %s895 = scalar_lea.vmem %s15, %s894
        %p896 = pneg %p435
        %p897 = pneg %p432
        %p898 = scmp.lt.s32.totalorder %s39, 1
        %s899 = scalar_select %p898, %s39, 1
        %s900 = scalar_lea.vmem %s16, %s899
        %p901 = pneg %p461
        %p902 = pneg %p458
        %p903 = scmp.lt.s32.totalorder %s39, 1
        %s904 = scalar_select %p903, %s39, 1
        %s905 = scalar_lea.vmem %s17, %s904
        %p906 = pneg %p487
        %p907 = pneg %p484
        %p908 = scmp.lt.s32.totalorder %s39, 1
        %s909 = scalar_select %p908, %s39, 1
        %s910 = scalar_lea.vmem %s18, %s909
        %p911 = pneg %p513
        %p912 = pneg %p510
        %p913 = pneg %p534
        %p914 = pneg %p531
        %p915 = scmp.lt.s32.totalorder %s39, 1
        %s916 = scalar_select %p915, %s39, 1
        %s917 = smul.addr %s916, 4
        %s918 = smul.addr %s917, 8
        %s919 = scalar_lea.vmem %s3, %s918
        %p920 = scmp.lt.s32.totalorder %s39, 1
        %s921 = scalar_select %p920, %s39, 1
        %s922 = smul.addr %s921, 4
        %s923 = smul.addr %s922, 8
        %s924 = scalar_lea.vmem %s4, %s923
        %p925 = scmp.lt.s32.totalorder %s39, 1
        %s926 = scalar_select %p925, %s39, 1
        %s927 = smul.addr %s926, 4
        %s928 = smul.addr %s927, 8
        %s929 = scalar_lea.vmem %s5, %s928
        %p930 = scmp.lt.s32.totalorder %s39, 1
        %s931 = scalar_select %p930, %s39, 1
        %s932 = scalar_lea.vmem %s10, %s931
        %p933 = scmp.lt.s32.totalorder %s39, 1
        %s934 = scalar_select %p933, %s39, 1
        %s935 = smul.addr %s934, 8
        %s936 = smul.addr %s935, 8
        %s937 = scalar_lea.vmem %s11, %s936
        %p938 = scmp.lt.s32.totalorder %s39, 1
        %s939 = scalar_select %p938, %s39, 1
        %s940 = scalar_lea.vmem %s12, %s939
        %p941 = scmp.lt.s32.totalorder %s39, 1
        %s942 = scalar_select %p941, %s39, 1
        %s943 = scalar_lea.vmem %s13, %s942
        %p944 = scmp.lt.s32.totalorder %s39, 1
        %s945 = scalar_select %p944, %s39, 1
        %s946 = scalar_lea.vmem %s14, %s945
        %p947 = scmp.lt.s32.totalorder %s39, 1
        %s948 = scalar_select %p947, %s39, 1
        %s949 = scalar_lea.vmem %s15, %s948
        %p950 = scmp.lt.s32.totalorder %s39, 1
        %s951 = scalar_select %p950, %s39, 1
        %s952 = scalar_lea.vmem %s16, %s951
        %p953 = scmp.lt.s32.totalorder %s39, 1
        %s954 = scalar_select %p953, %s39, 1
        %s955 = scalar_lea.vmem %s17, %s954
        %p956 = scmp.lt.s32.totalorder %s39, 1
        %s957 = scalar_select %p956, %s39, 1
        %s958 = scalar_lea.vmem %s18, %s957
        %p959 = scmp.eq.s32.totalorder %s39, 0
        // Predicated region
        $region125: #{tpu_custom_call.1} parent=95 // pred_check
          %p960 = pneg %p959
        $region126: #{tpu_custom_call.1} parent=95 // pred_check_branch
          %962 = sbr.rel (%p960) target = $region128
        $region127: #{tpu_custom_call.1} parent=95 // pred_region
          %v963 = vld [vmem:[#allocation3] sm:$0xff]
          %v964 = vld [vmem:[#allocation3 + $0x8] sm:$0xff]
          %vm965 = vcmask 261120
          %966 = vst.msk [vmem:[#allocation2] sm:$0xff] %vm965, %v963
          %967 = vst.msk [vmem:[#allocation2 + $0x8] sm:$0xff] %vm965, %v964
        $region128: #{tpu_custom_call.1} parent=95 // pred_fallthru
          _
        %v968 = vld [vmem:[#allocation2] sm:$0xff]
        %v969 = vld [vmem:[#allocation2 + $0x8] sm:$0xff]
        %v970 = vld [vmem:[%s919] sm:$0xff]
        %v971 = vld [vmem:[%s919 + $0x8] sm:$0xff]
        %v972 = vld [vmem:[%s919 + $0x10] sm:$0xff]
        %v973 = vld [vmem:[%s919 + $0x18] sm:$0xff]
        %vm974 = vcmask 261120
        %v976 = vsel %vm974, %v968, 0
        %v979 = vsel %vm974, %v969, 0
        %981 = vmatprep.subr.mxu0 0.0
        %982 = vmatpush1.msra.mxu0 %v970
        %983 = vmatprep.subr.mxu0 0.0
        %984 = vmatpush1.msra.mxu0 %v971
        %985 = vmatprep.subr.mxu0 0.0
        %986 = vmatpush1.msra.mxu0 %v972
        %987 = vmatprep.subr.mxu0 0.0
        %988 = vmatpush1.msra.mxu0 %v973
        %989 = vmatprep.subr.mxu0 0.0
        %990 = vmatpush1.msra.mxu0 0.0
        %991 = vmatprep.subr.mxu0 0.0
        %992 = vmatpush1.msra.mxu0 0.0
        %993 = vmatprep.subr.mxu0 0.0
        %994 = vmatpush1.msra.mxu0 0.0
        %995 = vmatprep.subr.mxu0 0.0
        %996 = vmatpush1.msra.mxu0 0.0
        %997 = vmatprep.subr.mxu0 0.0
        %998 = vmatpush1.msra.mxu0 0.0
        %999 = vmatprep.subr.mxu0 0.0
        %1000 = vmatpush1.msra.mxu0 0.0
        %1001 = vmatprep.subr.mxu0 0.0
        %1002 = vmatpush1.msra.mxu0 0.0
        %1003 = vmatprep.subr.mxu0 0.0
        %1004 = vmatpush1.msra.mxu0 0.0
        %1005 = vmatprep.subr.mxu0 0.0
        %1006 = vmatpush1.msra.mxu0 0.0
        %1007 = vmatprep.subr.mxu0 0.0
        %1008 = vmatpush1.msra.mxu0 0.0
        %1009 = vmatprep.subr.mxu0 0.0
        %1010 = vmatpush1.msra.mxu0 0.0
        %1011 = vmatprep.subr.mxu0 0.0
        %1012 = vmatpush1.msra.mxu0 0.0
        %1013 = vmatprep.subr.mxu0 0.0
        %1014 = vmatpush1.msra.mxu0 0.0
        %1015 = vmatprep.subr.mxu0 0.0
        %1016 = vmatpush1.msra.mxu0 0.0
        %1017 = vmatprep.subr.mxu0 0.0
        %1018 = vmatpush1.msra.mxu0 0.0
        %1019 = vmatprep.subr.mxu0 0.0
        %1020 = vmatpush1.msra.mxu0 0.0
        %1021 = vmatprep.subr.mxu0 0.0
        %1022 = vmatpush1.msra.mxu0 0.0
        %1023 = vmatprep.subr.mxu0 0.0
        %1024 = vmatpush1.msra.mxu0 0.0
        %1025 = vmatprep.subr.mxu0 0.0
        %1026 = vmatpush1.msra.mxu0 0.0
        %1027 = vmatprep.subr.mxu0 0.0
        %1028 = vmatpush1.msra.mxu0 0.0
        %1029 = vmatprep.subr.mxu0 0.0
        %1030 = vmatpush1.msra.mxu0 0.0
        %1031 = vmatprep.subr.mxu0 0.0
        %1032 = vmatpush1.msra.mxu0 0.0
        %1033 = vmatprep.subr.mxu0 0.0
        %1034 = vmatpush1.msra.mxu0 0.0
        %1035 = vmatprep.subr.mxu0 0.0
        %1036 = vmatpush1.msra.mxu0 0.0
        %1037 = vmatprep.subr.mxu0 0.0
        %1038 = vmatpush1.msra.mxu0 0.0
        %1039 = vmatprep.subr.mxu0 0.0
        %1040 = vmatpush1.msra.mxu0 0.0
        %1041 = vmatprep.subr.mxu0 0.0
        %1042 = vmatpush1.msra.mxu0 0.0
        %1043 = vmatprep.subr.mxu0 0.0
        %1044 = vmatpush1.msra.mxu0 0.0
        %1045 = vmatprep.mubr.f32.mxu0 0.0
        %1046 = vmatmul.mubr.f32.gmra.mrb[0].mxu0 %v976
        %v1047 = vpop.f32.mrb[0].mxu0
        %v1048 = vadd.f32 0.0, %v1047
        %v1049 = vpop.f32.mrb[0].mxu0
        %1050 = vmatprep.mubr.f32.mxu0 0.0
        %1051 = vmatmul.mubr.f32.gmra.mrb[0].mxu0 %v979
        %v1052 = vpop.f32.mrb[0].mxu0
        %v1053 = vadd.f32 0.0, %v1052
        %v1054 = vpop.f32.mrb[0].mxu0
        %1055 = vdwg.mxu0
        %v1056 = vld [vmem:[%s924] sm:$0xff]
        %v1057 = vld [vmem:[%s924 + $0x8] sm:$0xff]
        %v1058 = vld [vmem:[%s924 + $0x10] sm:$0xff]
        %v1059 = vld [vmem:[%s924 + $0x18] sm:$0xff]
        %1061 = vrot.lane.b32.xlu0 %v1048, 96
        %v1062 = vpop.permute.xlu0 %1061
        %vm1063 = vcmask 64512
        %v1064 = vsel %vm1063, %v1048, 0
        %v1066 = vsel %vm1063, %v1062, 0
        %1068 = vmatprep.subr.mxu0 0.0
        %1069 = vmatpush1.xpose.msra.mxu0 %v1066
        %1070 = vmatprep.subr.mxu0 0.0
        %1071 = vmatpush1.xpose.msra.mxu0 0.0
        %1072 = vmatprep.subr.mxu0 0.0
        %1073 = vmatpush1.xpose.msra.mxu0 0.0
        %1074 = vmatprep.subr.mxu0 0.0
        %1075 = vmatpush1.xpose.msra.mxu0 0.0
        %1076 = vmatprep.subr.mxu0 0.0
        %1077 = vmatpush1.xpose.msra.mxu0 0.0
        %1078 = vmatprep.subr.mxu0 0.0
        %1079 = vmatpush1.xpose.msra.mxu0 0.0
        %1080 = vmatprep.subr.mxu0 0.0
        %1081 = vmatpush1.xpose.msra.mxu0 0.0
        %1082 = vmatprep.subr.mxu0 0.0
        %1083 = vmatpush1.xpose.msra.mxu0 0.0
        %1084 = vmatprep.subr.mxu0 0.0
        %1085 = vmatpush1.xpose.msra.mxu0 0.0
        %1086 = vmatprep.subr.mxu0 0.0
        %1087 = vmatpush1.xpose.msra.mxu0 0.0
        %1088 = vmatprep.subr.mxu0 0.0
        %1089 = vmatpush1.xpose.msra.mxu0 0.0
        %1090 = vmatprep.subr.mxu0 0.0
        %1091 = vmatpush1.xpose.msra.mxu0 0.0
        %1092 = vmatprep.subr.mxu0 0.0
        %1093 = vmatpush1.xpose.msra.mxu0 0.0
        %1094 = vmatprep.subr.mxu0 0.0
        %1095 = vmatpush1.xpose.msra.mxu0 0.0
        %1096 = vmatprep.subr.mxu0 0.0
        %1097 = vmatpush1.xpose.msra.mxu0 0.0
        %1098 = vmatprep.subr.mxu0 0.0
        %1099 = vmatpush1.xpose.msra.mxu0 0.0
        %1100 = vmatprep.subr.mxu0 0.0
        %1101 = vmatpush1.xpose.msra.mxu0 0.0
        %1102 = vmatprep.subr.mxu0 0.0
        %1103 = vmatpush1.xpose.msra.mxu0 0.0
        %1104 = vmatprep.subr.mxu0 0.0
        %1105 = vmatpush1.xpose.msra.mxu0 0.0
        %1106 = vmatprep.subr.mxu0 0.0
        %1107 = vmatpush1.xpose.msra.mxu0 0.0
        %1108 = vmatprep.subr.mxu0 0.0
        %1109 = vmatpush1.xpose.msra.mxu0 0.0
        %1110 = vmatprep.subr.mxu0 0.0
        %1111 = vmatpush1.xpose.msra.mxu0 0.0
        %1112 = vmatprep.subr.mxu0 0.0
        %1113 = vmatpush1.xpose.msra.mxu0 0.0
        %1114 = vmatprep.subr.mxu0 0.0
        %1115 = vmatpush1.xpose.msra.mxu0 0.0
        %1116 = vmatprep.subr.mxu0 0.0
        %1117 = vmatpush1.xpose.msra.mxu0 0.0
        %1118 = vmatprep.subr.mxu0 0.0
        %1119 = vmatpush1.xpose.msra.mxu0 0.0
        %1120 = vmatprep.subr.mxu0 0.0
        %1121 = vmatpush1.xpose.msra.mxu0 0.0
        %1122 = vmatprep.subr.mxu0 0.0
        %1123 = vmatpush1.xpose.msra.mxu0 0.0
        %1124 = vmatprep.subr.mxu0 0.0
        %1125 = vmatpush1.xpose.msra.mxu0 0.0
        %1126 = vmatprep.subr.mxu0 0.0
        %1127 = vmatpush1.xpose.msra.mxu0 0.0
        %1128 = vmatprep.subr.mxu0 0.0
        %1129 = vmatpush1.xpose.msra.mxu0 0.0
        %1130 = vmatprep.subr.mxu0 0.0
        %1131 = vmatpush1.xpose.msra.mxu0 0.0
        %1132 = vmatprep.mubr.f32.mxu0 0.0
        %1133 = vmatmul.mubr.f32.gmra.mrb[0].mxu0 %v1064
        %v1134 = vpop.f32.mrb[0].mxu0
        %v1135 = vadd.f32 0.0, %v1134
        %v1136 = vpop.f32.mrb[0].mxu0
        %1137 = vdwg.mxu0
        %1139 = vrot.lane.b32.xlu0 %v1053, 96
        %v1140 = vpop.permute.xlu0 %1139
        %v1141 = vsel %vm1063, %v1053, 0
        %v1143 = vsel %vm1063, %v1140, 0
        %1145 = vmatprep.subr.mxu0 0.0
        %1146 = vmatpush1.xpose.msra.mxu0 %v1143
        %1147 = vmatprep.subr.mxu0 0.0
        %1148 = vmatpush1.xpose.msra.mxu0 0.0
        %1149 = vmatprep.subr.mxu0 0.0
        %1150 = vmatpush1.xpose.msra.mxu0 0.0
        %1151 = vmatprep.subr.mxu0 0.0
        %1152 = vmatpush1.xpose.msra.mxu0 0.0
        %1153 = vmatprep.subr.mxu0 0.0
        %1154 = vmatpush1.xpose.msra.mxu0 0.0
        %1155 = vmatprep.subr.mxu0 0.0
        %1156 = vmatpush1.xpose.msra.mxu0 0.0
        %1157 = vmatprep.subr.mxu0 0.0
        %1158 = vmatpush1.xpose.msra.mxu0 0.0
        %1159 = vmatprep.subr.mxu0 0.0
        %1160 = vmatpush1.xpose.msra.mxu0 0.0
        %1161 = vmatprep.subr.mxu0 0.0
        %1162 = vmatpush1.xpose.msra.mxu0 0.0
        %1163 = vmatprep.subr.mxu0 0.0
        %1164 = vmatpush1.xpose.msra.mxu0 0.0
        %1165 = vmatprep.subr.mxu0 0.0
        %1166 = vmatpush1.xpose.msra.mxu0 0.0
        %1167 = vmatprep.subr.mxu0 0.0
        %1168 = vmatpush1.xpose.msra.mxu0 0.0
        %1169 = vmatprep.subr.mxu0 0.0
        %1170 = vmatpush1.xpose.msra.mxu0 0.0
        %1171 = vmatprep.subr.mxu0 0.0
        %1172 = vmatpush1.xpose.msra.mxu0 0.0
        %1173 = vmatprep.subr.mxu0 0.0
        %1174 = vmatpush1.xpose.msra.mxu0 0.0
        %1175 = vmatprep.subr.mxu0 0.0
        %1176 = vmatpush1.xpose.msra.mxu0 0.0
        %1177 = vmatprep.subr.mxu0 0.0
        %1178 = vmatpush1.xpose.msra.mxu0 0.0
        %1179 = vmatprep.subr.mxu0 0.0
        %1180 = vmatpush1.xpose.msra.mxu0 0.0
        %1181 = vmatprep.subr.mxu0 0.0
        %1182 = vmatpush1.xpose.msra.mxu0 0.0
        %1183 = vmatprep.subr.mxu0 0.0
        %1184 = vmatpush1.xpose.msra.mxu0 0.0
        %1185 = vmatprep.subr.mxu0 0.0
        %1186 = vmatpush1.xpose.msra.mxu0 0.0
        %1187 = vmatprep.subr.mxu0 0.0
        %1188 = vmatpush1.xpose.msra.mxu0 0.0
        %1189 = vmatprep.subr.mxu0 0.0
        %1190 = vmatpush1.xpose.msra.mxu0 0.0
        %1191 = vmatprep.subr.mxu0 0.0
        %1192 = vmatpush1.xpose.msra.mxu0 0.0
        %1193 = vmatprep.subr.mxu0 0.0
        %1194 = vmatpush1.xpose.msra.mxu0 0.0
        %1195 = vmatprep.subr.mxu0 0.0
        %1196 = vmatpush1.xpose.msra.mxu0 0.0
        %1197 = vmatprep.subr.mxu0 0.0
        %1198 = vmatpush1.xpose.msra.mxu0 0.0
        %1199 = vmatprep.subr.mxu0 0.0
        %1200 = vmatpush1.xpose.msra.mxu0 0.0
        %1201 = vmatprep.subr.mxu0 0.0
        %1202 = vmatpush1.xpose.msra.mxu0 0.0
        %1203 = vmatprep.subr.mxu0 0.0
        %1204 = vmatpush1.xpose.msra.mxu0 0.0
        %1205 = vmatprep.subr.mxu0 0.0
        %1206 = vmatpush1.xpose.msra.mxu0 0.0
        %1207 = vmatprep.subr.mxu0 0.0
        %1208 = vmatpush1.xpose.msra.mxu0 0.0
        %1209 = vmatprep.mubr.f32.mxu0 0.0
        %1210 = vmatmul.mubr.f32.gmra.mrb[0].mxu0 %v1141
        %v1211 = vpop.f32.mrb[0].mxu0
        %v1212 = vadd.f32 0.0, %v1211
        %v1213 = vpop.f32.mrb[0].mxu0
        %1214 = vdwg.mxu0
        %v1215 = vsel %vm1063, %v1135, -inf
        %1216 = vmax.xlane.f32.xlu0 %v1215
        %v1217 = vpop.xlane.xlu0 %1216
        %v1218 = vsel %vm1063, %v1212, -inf
        %1219 = vmax.xlane.f32.xlu0 %v1218
        %v1220 = vpop.xlane.xlu0 %1219
        %v1221 = vsub.f32 %v1135, %v1217
        %v1222 = vsub.f32 %v1212, %v1220
        %v1223 = vmul.f32 %v1221, 1.442695
        %v1224 = vpow.pop %v1223
        %v1225 = vmul.f32 %v1222, 1.442695
        %v1226 = vpow.pop %v1225
        %v1227 = vsel %vm1063, %v1224, 0.0
        %1228 = vadd.xlane.f32.xlu0 %v1227
        %v1229 = vpop.xlane.xlu0 %1228
        %v1230 = vsel %vm1063, %v1226, 0.0
        %1231 = vadd.xlane.f32.xlu0 %v1230
        %v1232 = vpop.xlane.xlu0 %1231
        %v1233 = vrcp.pop %v1229
        %v1234 = vmul.f32 %v1224, %v1233
        %v1235 = vrcp.pop %v1232
        %v1236 = vmul.f32 %v1226, %v1235
        %1237 = vrot.lane.b32.xlu0 %v1048, 64
        %v1238 = vpop.permute.xlu0 %1237
        %v1241 = vsel %vm1063, %v1234, 0
        %1243 = vmatprep.subr.mxu0 0.0
        %1244 = vmatpush1.msra.mxu0 %v1238
        %1245 = vmatprep.subr.mxu0 0.0
        %1246 = vmatpush1.msra.mxu0 0.0
        %1247 = vmatprep.subr.mxu0 0.0
        %1248 = vmatpush1.msra.mxu0 0.0
        %1249 = vmatprep.subr.mxu0 0.0
        %1250 = vmatpush1.msra.mxu0 0.0
        %1251 = vmatprep.subr.mxu0 0.0
        %1252 = vmatpush1.msra.mxu0 0.0
        %1253 = vmatprep.subr.mxu0 0.0
        %1254 = vmatpush1.msra.mxu0 0.0
        %1255 = vmatprep.subr.mxu0 0.0
        %1256 = vmatpush1.msra.mxu0 0.0
        %1257 = vmatprep.subr.mxu0 0.0
        %1258 = vmatpush1.msra.mxu0 0.0
        %1259 = vmatprep.subr.mxu0 0.0
        %1260 = vmatpush1.msra.mxu0 0.0
        %1261 = vmatprep.subr.mxu0 0.0
        %1262 = vmatpush1.msra.mxu0 0.0
        %1263 = vmatprep.subr.mxu0 0.0
        %1264 = vmatpush1.msra.mxu0 0.0
        %1265 = vmatprep.subr.mxu0 0.0
        %1266 = vmatpush1.msra.mxu0 0.0
        %1267 = vmatprep.subr.mxu0 0.0
        %1268 = vmatpush1.msra.mxu0 0.0
        %1269 = vmatprep.subr.mxu0 0.0
        %1270 = vmatpush1.msra.mxu0 0.0
        %1271 = vmatprep.subr.mxu0 0.0
        %1272 = vmatpush1.msra.mxu0 0.0
        %1273 = vmatprep.subr.mxu0 0.0
        %1274 = vmatpush1.msra.mxu0 0.0
        %1275 = vmatprep.subr.mxu0 0.0
        %1276 = vmatpush1.msra.mxu0 0.0
        %1277 = vmatprep.subr.mxu0 0.0
        %1278 = vmatpush1.msra.mxu0 0.0
        %1279 = vmatprep.subr.mxu0 0.0
        %1280 = vmatpush1.msra.mxu0 0.0
        %1281 = vmatprep.subr.mxu0 0.0
        %1282 = vmatpush1.msra.mxu0 0.0
        %1283 = vmatprep.subr.mxu0 0.0
        %1284 = vmatpush1.msra.mxu0 0.0
        %1285 = vmatprep.subr.mxu0 0.0
        %1286 = vmatpush1.msra.mxu0 0.0
        %1287 = vmatprep.subr.mxu0 0.0
        %1288 = vmatpush1.msra.mxu0 0.0
        %1289 = vmatprep.subr.mxu0 0.0
        %1290 = vmatpush1.msra.mxu0 0.0
        %1291 = vmatprep.subr.mxu0 0.0
        %1292 = vmatpush1.msra.mxu0 0.0
        %1293 = vmatprep.subr.mxu0 0.0
        %1294 = vmatpush1.msra.mxu0 0.0
        %1295 = vmatprep.subr.mxu0 0.0
        %1296 = vmatpush1.msra.mxu0 0.0
        %1297 = vmatprep.subr.mxu0 0.0
        %1298 = vmatpush1.msra.mxu0 0.0
        %1299 = vmatprep.subr.mxu0 0.0
        %1300 = vmatpush1.msra.mxu0 0.0
        %1301 = vmatprep.subr.mxu0 0.0
        %1302 = vmatpush1.msra.mxu0 0.0
        %1303 = vmatprep.subr.mxu0 0.0
        %1304 = vmatpush1.msra.mxu0 0.0
        %1305 = vmatprep.subr.mxu0 0.0
        %1306 = vmatpush1.msra.mxu0 0.0
        %1307 = vmatprep.mubr.f32.mxu0 0.0
        %1308 = vmatmul.mubr.f32.gmra.mrb[0].mxu0 %v1241
        %v1309 = vpop.f32.mrb[0].mxu0
        %v1310 = vadd.f32 0.0, %v1309
        %v1311 = vpop.f32.mrb[0].mxu0
        %1312 = vdwg.mxu0
        %1313 = vrot.lane.b32.xlu0 %v1053, 64
        %v1314 = vpop.permute.xlu0 %1313
        %v1317 = vsel %vm1063, %v1236, 0
        %1319 = vmatprep.subr.mxu0 0.0
        %1320 = vmatpush1.msra.mxu0 %v1314
        %1321 = vmatprep.subr.mxu0 0.0
        %1322 = vmatpush1.msra.mxu0 0.0
        %1323 = vmatprep.subr.mxu0 0.0
        %1324 = vmatpush1.msra.mxu0 0.0
        %1325 = vmatprep.subr.mxu0 0.0
        %1326 = vmatpush1.msra.mxu0 0.0
        %1327 = vmatprep.subr.mxu0 0.0
        %1328 = vmatpush1.msra.mxu0 0.0
        %1329 = vmatprep.subr.mxu0 0.0
        %1330 = vmatpush1.msra.mxu0 0.0
        %1331 = vmatprep.subr.mxu0 0.0
        %1332 = vmatpush1.msra.mxu0 0.0
        %1333 = vmatprep.subr.mxu0 0.0
        %1334 = vmatpush1.msra.mxu0 0.0
        %1335 = vmatprep.subr.mxu0 0.0
        %1336 = vmatpush1.msra.mxu0 0.0
        %1337 = vmatprep.subr.mxu0 0.0
        %1338 = vmatpush1.msra.mxu0 0.0
        %1339 = vmatprep.subr.mxu0 0.0
        %1340 = vmatpush1.msra.mxu0 0.0
        %1341 = vmatprep.subr.mxu0 0.0
        %1342 = vmatpush1.msra.mxu0 0.0
        %1343 = vmatprep.subr.mxu0 0.0
        %1344 = vmatpush1.msra.mxu0 0.0
        %1345 = vmatprep.subr.mxu0 0.0
        %1346 = vmatpush1.msra.mxu0 0.0
        %1347 = vmatprep.subr.mxu0 0.0
        %1348 = vmatpush1.msra.mxu0 0.0
        %1349 = vmatprep.subr.mxu0 0.0
        %1350 = vmatpush1.msra.mxu0 0.0
        %1351 = vmatprep.subr.mxu0 0.0
        %1352 = vmatpush1.msra.mxu0 0.0
        %1353 = vmatprep.subr.mxu0 0.0
        %1354 = vmatpush1.msra.mxu0 0.0
        %1355 = vmatprep.subr.mxu0 0.0
        %1356 = vmatpush1.msra.mxu0 0.0
        %1357 = vmatprep.subr.mxu0 0.0
        %1358 = vmatpush1.msra.mxu0 0.0
        %1359 = vmatprep.subr.mxu0 0.0
        %1360 = vmatpush1.msra.mxu0 0.0
        %1361 = vmatprep.subr.mxu0 0.0
        %1362 = vmatpush1.msra.mxu0 0.0
        %1363 = vmatprep.subr.mxu0 0.0
        %1364 = vmatpush1.msra.mxu0 0.0
        %1365 = vmatprep.subr.mxu0 0.0
        %1366 = vmatpush1.msra.mxu0 0.0
        %1367 = vmatprep.subr.mxu0 0.0
        %1368 = vmatpush1.msra.mxu0 0.0
        %1369 = vmatprep.subr.mxu0 0.0
        %1370 = vmatpush1.msra.mxu0 0.0
        %1371 = vmatprep.subr.mxu0 0.0
        %1372 = vmatpush1.msra.mxu0 0.0
        %1373 = vmatprep.subr.mxu0 0.0
        %1374 = vmatpush1.msra.mxu0 0.0
        %1375 = vmatprep.subr.mxu0 0.0
        %1376 = vmatpush1.msra.mxu0 0.0
        %1377 = vmatprep.subr.mxu0 0.0
        %1378 = vmatpush1.msra.mxu0 0.0
        %1379 = vmatprep.subr.mxu0 0.0
        %1380 = vmatpush1.msra.mxu0 0.0
        %1381 = vmatprep.subr.mxu0 0.0
        %1382 = vmatpush1.msra.mxu0 0.0
        %1383 = vmatprep.mubr.f32.mxu0 0.0
        %1384 = vmatmul.mubr.f32.gmra.mrb[0].mxu0 %v1317
        %v1385 = vpop.f32.mrb[0].mxu0
        %v1386 = vadd.f32 0.0, %v1385
        %v1387 = vpop.f32.mrb[0].mxu0
        %1388 = vdwg.mxu0
        %v1390 = vsel %vm1063, %v1310, 0
        %v1393 = vsel %vm1063, %v1386, 0
        %1395 = vmatprep.subr.mxu0 0.0
        %1396 = vmatpush1.msra.mxu0 %v1056
        %1397 = vmatprep.subr.mxu0 0.0
        %1398 = vmatpush1.msra.mxu0 0.0
        %1399 = vmatprep.subr.mxu0 0.0
        %1400 = vmatpush1.msra.mxu0 0.0
        %1401 = vmatprep.subr.mxu0 0.0
        %1402 = vmatpush1.msra.mxu0 0.0
        %1403 = vmatprep.subr.mxu0 0.0
        %1404 = vmatpush1.msra.mxu0 0.0
        %1405 = vmatprep.subr.mxu0 0.0
        %1406 = vmatpush1.msra.mxu0 0.0
        %1407 = vmatprep.subr.mxu0 0.0
        %1408 = vmatpush1.msra.mxu0 0.0
        %1409 = vmatprep.subr.mxu0 0.0
        %1410 = vmatpush1.msra.mxu0 0.0
        %1411 = vmatprep.subr.mxu0 0.0
        %1412 = vmatpush1.msra.mxu0 0.0
        %1413 = vmatprep.subr.mxu0 0.0
        %1414 = vmatpush1.msra.mxu0 0.0
        %1415 = vmatprep.subr.mxu0 0.0
        %1416 = vmatpush1.msra.mxu0 0.0
        %1417 = vmatprep.subr.mxu0 0.0
        %1418 = vmatpush1.msra.mxu0 0.0
        %1419 = vmatprep.subr.mxu0 0.0
        %1420 = vmatpush1.msra.mxu0 0.0
        %1421 = vmatprep.subr.mxu0 0.0
        %1422 = vmatpush1.msra.mxu0 0.0
        %1423 = vmatprep.subr.mxu0 0.0
        %1424 = vmatpush1.msra.mxu0 0.0
        %1425 = vmatprep.subr.mxu0 0.0
        %1426 = vmatpush1.msra.mxu0 0.0
        %1427 = vmatprep.subr.mxu0 0.0
        %1428 = vmatpush1.msra.mxu0 0.0
        %1429 = vmatprep.subr.mxu0 0.0
        %1430 = vmatpush1.msra.mxu0 0.0
        %1431 = vmatprep.subr.mxu0 0.0
        %1432 = vmatpush1.msra.mxu0 0.0
        %1433 = vmatprep.subr.mxu0 0.0
        %1434 = vmatpush1.msra.mxu0 0.0
        %1435 = vmatprep.subr.mxu0 0.0
        %1436 = vmatpush1.msra.mxu0 0.0
        %1437 = vmatprep.subr.mxu0 0.0
        %1438 = vmatpush1.msra.mxu0 0.0
        %1439 = vmatprep.subr.mxu0 0.0
        %1440 = vmatpush1.msra.mxu0 0.0
        %1441 = vmatprep.subr.mxu0 0.0
        %1442 = vmatpush1.msra.mxu0 0.0
        %1443 = vmatprep.subr.mxu0 0.0
        %1444 = vmatpush1.msra.mxu0 0.0
        %1445 = vmatprep.subr.mxu0 0.0
        %1446 = vmatpush1.msra.mxu0 0.0
        %1447 = vmatprep.subr.mxu0 0.0
        %1448 = vmatpush1.msra.mxu0 0.0
        %1449 = vmatprep.subr.mxu0 0.0
        %1450 = vmatpush1.msra.mxu0 0.0
        %1451 = vmatprep.subr.mxu0 0.0
        %1452 = vmatpush1.msra.mxu0 0.0
        %1453 = vmatprep.subr.mxu0 0.0
        %1454 = vmatpush1.msra.mxu0 0.0
        %1455 = vmatprep.subr.mxu0 0.0
        %1456 = vmatpush1.msra.mxu0 0.0
        %1457 = vmatprep.subr.mxu0 0.0
        %1458 = vmatpush1.msra.mxu0 0.0
        %1459 = vmatprep.mubr.f32.mxu0 0.0
        %1460 = vmatmul.mubr.f32.gmra.mrb[0].mxu0 %v1390
        %v1461 = vpop.f32.mrb[0].mxu0
        %v1462 = vadd.f32 0.0, %v1461
        %v1463 = vpop.f32.mrb[0].mxu0
        %1464 = vmatprep.mubr.f32.mxu0 0.0
        %1465 = vmatmul.mubr.f32.gmra.mrb[0].mxu0 %v1393
        %v1466 = vpop.f32.mrb[0].mxu0
        %v1467 = vadd.f32 0.0, %v1466
        %v1468 = vpop.f32.mrb[0].mxu0
        %1469 = vdwg.mxu0
        %v1470 = vadd.f32 %v968, %v1462
        %v1471 = vadd.f32 %v969, %v1467
        %1472 = vrot.lane.b32.xlu0 %v1048, 120
        %v1473 = vpop.permute.xlu0 %1472
        %1474 = vrot.lane.b32.xlu0 %v1048, 88
        %v1475 = vpop.permute.xlu0 %1474
        %v1476 = vsel %vm1063, %v1473, 0
        %v1478 = vsel %vm1063, %v1475, 0
        %1480 = vmatprep.subr.mxu0 0.0
        %1481 = vmatpush1.xpose.msra.mxu0 %v1478
        %1482 = vmatprep.subr.mxu0 0.0
        %1483 = vmatpush1.xpose.msra.mxu0 0.0
        %1484 = vmatprep.subr.mxu0 0.0
        %1485 = vmatpush1.xpose.msra.mxu0 0.0
        %1486 = vmatprep.subr.mxu0 0.0
        %1487 = vmatpush1.xpose.msra.mxu0 0.0
        %1488 = vmatprep.subr.mxu0 0.0
        %1489 = vmatpush1.xpose.msra.mxu0 0.0
        %1490 = vmatprep.subr.mxu0 0.0
        %1491 = vmatpush1.xpose.msra.mxu0 0.0
        %1492 = vmatprep.subr.mxu0 0.0
        %1493 = vmatpush1.xpose.msra.mxu0 0.0
        %1494 = vmatprep.subr.mxu0 0.0
        %1495 = vmatpush1.xpose.msra.mxu0 0.0
        %1496 = vmatprep.subr.mxu0 0.0
        %1497 = vmatpush1.xpose.msra.mxu0 0.0
        %1498 = vmatprep.subr.mxu0 0.0
        %1499 = vmatpush1.xpose.msra.mxu0 0.0
        %1500 = vmatprep.subr.mxu0 0.0
        %1501 = vmatpush1.xpose.msra.mxu0 0.0
        %1502 = vmatprep.subr.mxu0 0.0
        %1503 = vmatpush1.xpose.msra.mxu0 0.0
        %1504 = vmatprep.subr.mxu0 0.0
        %1505 = vmatpush1.xpose.msra.mxu0 0.0
        %1506 = vmatprep.subr.mxu0 0.0
        %1507 = vmatpush1.xpose.msra.mxu0 0.0
        %1508 = vmatprep.subr.mxu0 0.0
        %1509 = vmatpush1.xpose.msra.mxu0 0.0
        %1510 = vmatprep.subr.mxu0 0.0
        %1511 = vmatpush1.xpose.msra.mxu0 0.0
        %1512 = vmatprep.subr.mxu0 0.0
        %1513 = vmatpush1.xpose.msra.mxu0 0.0
        %1514 = vmatprep.subr.mxu0 0.0
        %1515 = vmatpush1.xpose.msra.mxu0 0.0
        %1516 = vmatprep.subr.mxu0 0.0
        %1517 = vmatpush1.xpose.msra.mxu0 0.0
        %1518 = vmatprep.subr.mxu0 0.0
        %1519 = vmatpush1.xpose.msra.mxu0 0.0
        %1520 = vmatprep.subr.mxu0 0.0
        %1521 = vmatpush1.xpose.msra.mxu0 0.0
        %1522 = vmatprep.subr.mxu0 0.0
        %1523 = vmatpush1.xpose.msra.mxu0 0.0
        %1524 = vmatprep.subr.mxu0 0.0
        %1525 = vmatpush1.xpose.msra.mxu0 0.0
        %1526 = vmatprep.subr.mxu0 0.0
        %1527 = vmatpush1.xpose.msra.mxu0 0.0
        %1528 = vmatprep.subr.mxu0 0.0
        %1529 = vmatpush1.xpose.msra.mxu0 0.0
        %1530 = vmatprep.subr.mxu0 0.0
        %1531 = vmatpush1.xpose.msra.mxu0 0.0
        %1532 = vmatprep.subr.mxu0 0.0
        %1533 = vmatpush1.xpose.msra.mxu0 0.0
        %1534 = vmatprep.subr.mxu0 0.0
        %1535 = vmatpush1.xpose.msra.mxu0 0.0
        %1536 = vmatprep.subr.mxu0 0.0
        %1537 = vmatpush1.xpose.msra.mxu0 0.0
        %1538 = vmatprep.subr.mxu0 0.0
        %1539 = vmatpush1.xpose.msra.mxu0 0.0
        %1540 = vmatprep.subr.mxu0 0.0
        %1541 = vmatpush1.xpose.msra.mxu0 0.0
        %1542 = vmatprep.subr.mxu0 0.0
        %1543 = vmatpush1.xpose.msra.mxu0 0.0
        %1544 = vmatprep.mubr.f32.mxu0 0.0
        %1545 = vmatmul.mubr.f32.gmra.mrb[0].mxu0 %v1476
        %v1546 = vpop.f32.mrb[0].mxu0
        %v1547 = vadd.f32 0.0, %v1546
        %v1548 = vpop.f32.mrb[0].mxu0
        %1549 = vdwg.mxu0
        %1550 = vrot.lane.b32.xlu0 %v1053, 120
        %v1551 = vpop.permute.xlu0 %1550
        %1552 = vrot.lane.b32.xlu0 %v1053, 88
        %v1553 = vpop.permute.xlu0 %1552
        %v1554 = vsel %vm1063, %v1551, 0
        %v1556 = vsel %vm1063, %v1553, 0
        %1558 = vmatprep.subr.mxu0 0.0
        %1559 = vmatpush1.xpose.msra.mxu0 %v1556
        %1560 = vmatprep.subr.mxu0 0.0
        %1561 = vmatpush1.xpose.msra.mxu0 0.0
        %1562 = vmatprep.subr.mxu0 0.0
        %1563 = vmatpush1.xpose.msra.mxu0 0.0
        %1564 = vmatprep.subr.mxu0 0.0
        %1565 = vmatpush1.xpose.msra.mxu0 0.0
        %1566 = vmatprep.subr.mxu0 0.0
        %1567 = vmatpush1.xpose.msra.mxu0 0.0
        %1568 = vmatprep.subr.mxu0 0.0
        %1569 = vmatpush1.xpose.msra.mxu0 0.0
        %1570 = vmatprep.subr.mxu0 0.0
        %1571 = vmatpush1.xpose.msra.mxu0 0.0
        %1572 = vmatprep.subr.mxu0 0.0
        %1573 = vmatpush1.xpose.msra.mxu0 0.0
        %1574 = vmatprep.subr.mxu0 0.0
        %1575 = vmatpush1.xpose.msra.mxu0 0.0
        %1576 = vmatprep.subr.mxu0 0.0
        %1577 = vmatpush1.xpose.msra.mxu0 0.0
        %1578 = vmatprep.subr.mxu0 0.0
        %1579 = vmatpush1.xpose.msra.mxu0 0.0
        %1580 = vmatprep.subr.mxu0 0.0
        %1581 = vmatpush1.xpose.msra.mxu0 0.0
        %1582 = vmatprep.subr.mxu0 0.0
        %1583 = vmatpush1.xpose.msra.mxu0 0.0
        %1584 = vmatprep.subr.mxu0 0.0
        %1585 = vmatpush1.xpose.msra.mxu0 0.0
        %1586 = vmatprep.subr.mxu0 0.0
        %1587 = vmatpush1.xpose.msra.mxu0 0.0
        %1588 = vmatprep.subr.mxu0 0.0
        %1589 = vmatpush1.xpose.msra.mxu0 0.0
        %1590 = vmatprep.subr.mxu0 0.0
        %1591 = vmatpush1.xpose.msra.mxu0 0.0
        %1592 = vmatprep.subr.mxu0 0.0
        %1593 = vmatpush1.xpose.msra.mxu0 0.0
        %1594 = vmatprep.subr.mxu0 0.0
        %1595 = vmatpush1.xpose.msra.mxu0 0.0
        %1596 = vmatprep.subr.mxu0 0.0
        %1597 = vmatpush1.xpose.msra.mxu0 0.0
        %1598 = vmatprep.subr.mxu0 0.0
        %1599 = vmatpush1.xpose.msra.mxu0 0.0
        %1600 = vmatprep.subr.mxu0 0.0
        %1601 = vmatpush1.xpose.msra.mxu0 0.0
        %1602 = vmatprep.subr.mxu0 0.0
        %1603 = vmatpush1.xpose.msra.mxu0 0.0
        %1604 = vmatprep.subr.mxu0 0.0
        %1605 = vmatpush1.xpose.msra.mxu0 0.0
        %1606 = vmatprep.subr.mxu0 0.0
        %1607 = vmatpush1.xpose.msra.mxu0 0.0
        %1608 = vmatprep.subr.mxu0 0.0
        %1609 = vmatpush1.xpose.msra.mxu0 0.0
        %1610 = vmatprep.subr.mxu0 0.0
        %1611 = vmatpush1.xpose.msra.mxu0 0.0
        %1612 = vmatprep.subr.mxu0 0.0
        %1613 = vmatpush1.xpose.msra.mxu0 0.0
        %1614 = vmatprep.subr.mxu0 0.0
        %1615 = vmatpush1.xpose.msra.mxu0 0.0
        %1616 = vmatprep.subr.mxu0 0.0
        %1617 = vmatpush1.xpose.msra.mxu0 0.0
        %1618 = vmatprep.subr.mxu0 0.0
        %1619 = vmatpush1.xpose.msra.mxu0 0.0
        %1620 = vmatprep.subr.mxu0 0.0
        %1621 = vmatpush1.xpose.msra.mxu0 0.0
        %1622 = vmatprep.mubr.f32.mxu0 0.0
        %1623 = vmatmul.mubr.f32.gmra.mrb[0].mxu0 %v1554
        %v1624 = vpop.f32.mrb[0].mxu0
        %v1625 = vadd.f32 0.0, %v1624
        %v1626 = vpop.f32.mrb[0].mxu0
        %1627 = vdwg.mxu0
        %v1628 = vsel %vm1063, %v1547, -inf
        %1629 = vmax.xlane.f32.xlu0 %v1628
        %v1630 = vpop.xlane.xlu0 %1629
        %v1631 = vsel %vm1063, %v1625, -inf
        %1632 = vmax.xlane.f32.xlu0 %v1631
        %v1633 = vpop.xlane.xlu0 %1632
        %v1634 = vsub.f32 %v1547, %v1630
        %v1635 = vsub.f32 %v1625, %v1633
        %v1636 = vmul.f32 %v1634, 1.442695
        %v1637 = vpow.pop %v1636
        %v1638 = vmul.f32 %v1635, 1.442695
        %v1639 = vpow.pop %v1638
        %v1640 = vsel %vm1063, %v1637, 0.0
        %1641 = vadd.xlane.f32.xlu0 %v1640
        %v1642 = vpop.xlane.xlu0 %1641
        %v1643 = vsel %vm1063, %v1639, 0.0
        %1644 = vadd.xlane.f32.xlu0 %v1643
        %v1645 = vpop.xlane.xlu0 %1644
        %v1646 = vrcp.pop %v1642
        %v1647 = vmul.f32 %v1637, %v1646
        %v1648 = vrcp.pop %v1645
        %v1649 = vmul.f32 %v1639, %v1648
        %1650 = vrot.lane.b32.xlu0 %v1048, 56
        %v1651 = vpop.permute.xlu0 %1650
        %v1654 = vsel %vm1063, %v1647, 0
        %1656 = vmatprep.subr.mxu0 0.0
        %1657 = vmatpush1.msra.mxu0 %v1651
        %1658 = vmatprep.subr.mxu0 0.0
        %1659 = vmatpush1.msra.mxu0 0.0
        %1660 = vmatprep.subr.mxu0 0.0
        %1661 = vmatpush1.msra.mxu0 0.0
        %1662 = vmatprep.subr.mxu0 0.0
        %1663 = vmatpush1.msra.mxu0 0.0
        %1664 = vmatprep.subr.mxu0 0.0
        %1665 = vmatpush1.msra.mxu0 0.0
        %1666 = vmatprep.subr.mxu0 0.0
        %1667 = vmatpush1.msra.mxu0 0.0
        %1668 = vmatprep.subr.mxu0 0.0
        %1669 = vmatpush1.msra.mxu0 0.0
        %1670 = vmatprep.subr.mxu0 0.0
        %1671 = vmatpush1.msra.mxu0 0.0
        %1672 = vmatprep.subr.mxu0 0.0
        %1673 = vmatpush1.msra.mxu0 0.0
        %1674 = vmatprep.subr.mxu0 0.0
        %1675 = vmatpush1.msra.mxu0 0.0
        %1676 = vmatprep.subr.mxu0 0.0
        %1677 = vmatpush1.msra.mxu0 0.0
        %1678 = vmatprep.subr.mxu0 0.0
        %1679 = vmatpush1.msra.mxu0 0.0
        %1680 = vmatprep.subr.mxu0 0.0
        %1681 = vmatpush1.msra.mxu0 0.0
        %1682 = vmatprep.subr.mxu0 0.0
        %1683 = vmatpush1.msra.mxu0 0.0
        %1684 = vmatprep.subr.mxu0 0.0
        %1685 = vmatpush1.msra.mxu0 0.0
        %1686 = vmatprep.subr.mxu0 0.0
        %1687 = vmatpush1.msra.mxu0 0.0
        %1688 = vmatprep.subr.mxu0 0.0
        %1689 = vmatpush1.msra.mxu0 0.0
        %1690 = vmatprep.subr.mxu0 0.0
        %1691 = vmatpush1.msra.mxu0 0.0
        %1692 = vmatprep.subr.mxu0 0.0
        %1693 = vmatpush1.msra.mxu0 0.0
        %1694 = vmatprep.subr.mxu0 0.0
        %1695 = vmatpush1.msra.mxu0 0.0
        %1696 = vmatprep.subr.mxu0 0.0
        %1697 = vmatpush1.msra.mxu0 0.0
        %1698 = vmatprep.subr.mxu0 0.0
        %1699 = vmatpush1.msra.mxu0 0.0
        %1700 = vmatprep.subr.mxu0 0.0
        %1701 = vmatpush1.msra.mxu0 0.0
        %1702 = vmatprep.subr.mxu0 0.0
        %1703 = vmatpush1.msra.mxu0 0.0
        %1704 = vmatprep.subr.mxu0 0.0
        %1705 = vmatpush1.msra.mxu0 0.0
        %1706 = vmatprep.subr.mxu0 0.0
        %1707 = vmatpush1.msra.mxu0 0.0
        %1708 = vmatprep.subr.mxu0 0.0
        %1709 = vmatpush1.msra.mxu0 0.0
        %1710 = vmatprep.subr.mxu0 0.0
        %1711 = vmatpush1.msra.mxu0 0.0
        %1712 = vmatprep.subr.mxu0 0.0
        %1713 = vmatpush1.msra.mxu0 0.0
        %1714 = vmatprep.subr.mxu0 0.0
        %1715 = vmatpush1.msra.mxu0 0.0
        %1716 = vmatprep.subr.mxu0 0.0
        %1717 = vmatpush1.msra.mxu0 0.0
        %1718 = vmatprep.subr.mxu0 0.0
        %1719 = vmatpush1.msra.mxu0 0.0
        %1720 = vmatprep.mubr.f32.mxu0 0.0
        %1721 = vmatmul.mubr.f32.gmra.mrb[0].mxu0 %v1654
        %v1722 = vpop.f32.mrb[0].mxu0
        %v1723 = vadd.f32 0.0, %v1722
        %v1724 = vpop.f32.mrb[0].mxu0
        %1725 = vdwg.mxu0
        %1726 = vrot.lane.b32.xlu0 %v1053, 56
        %v1727 = vpop.permute.xlu0 %1726
        %v1730 = vsel %vm1063, %v1649, 0
        %1732 = vmatprep.subr.mxu0 0.0
        %1733 = vmatpush1.msra.mxu0 %v1727
        %1734 = vmatprep.subr.mxu0 0.0
        %1735 = vmatpush1.msra.mxu0 0.0
        %1736 = vmatprep.subr.mxu0 0.0
        %1737 = vmatpush1.msra.mxu0 0.0
        %1738 = vmatprep.subr.mxu0 0.0
        %1739 = vmatpush1.msra.mxu0 0.0
        %1740 = vmatprep.subr.mxu0 0.0
        %1741 = vmatpush1.msra.mxu0 0.0
        %1742 = vmatprep.subr.mxu0 0.0
        %1743 = vmatpush1.msra.mxu0 0.0
        %1744 = vmatprep.subr.mxu0 0.0
        %1745 = vmatpush1.msra.mxu0 0.0
        %1746 = vmatprep.subr.mxu0 0.0
        %1747 = vmatpush1.msra.mxu0 0.0
        %1748 = vmatprep.subr.mxu0 0.0
        %1749 = vmatpush1.msra.mxu0 0.0
        %1750 = vmatprep.subr.mxu0 0.0
        %1751 = vmatpush1.msra.mxu0 0.0
        %1752 = vmatprep.subr.mxu0 0.0
        %1753 = vmatpush1.msra.mxu0 0.0
        %1754 = vmatprep.subr.mxu0 0.0
        %1755 = vmatpush1.msra.mxu0 0.0
        %1756 = vmatprep.subr.mxu0 0.0
        %1757 = vmatpush1.msra.mxu0 0.0
        %1758 = vmatprep.subr.mxu0 0.0
        %1759 = vmatpush1.msra.mxu0 0.0
        %1760 = vmatprep.subr.mxu0 0.0
        %1761 = vmatpush1.msra.mxu0 0.0
        %1762 = vmatprep.subr.mxu0 0.0
        %1763 = vmatpush1.msra.mxu0 0.0
        %1764 = vmatprep.subr.mxu0 0.0
        %1765 = vmatpush1.msra.mxu0 0.0
        %1766 = vmatprep.subr.mxu0 0.0
        %1767 = vmatpush1.msra.mxu0 0.0
        %1768 = vmatprep.subr.mxu0 0.0
        %1769 = vmatpush1.msra.mxu0 0.0
        %1770 = vmatprep.subr.mxu0 0.0
        %1771 = vmatpush1.msra.mxu0 0.0
        %1772 = vmatprep.subr.mxu0 0.0
        %1773 = vmatpush1.msra.mxu0 0.0
        %1774 = vmatprep.subr.mxu0 0.0
        %1775 = vmatpush1.msra.mxu0 0.0
        %1776 = vmatprep.subr.mxu0 0.0
        %1777 = vmatpush1.msra.mxu0 0.0
        %1778 = vmatprep.subr.mxu0 0.0
        %1779 = vmatpush1.msra.mxu0 0.0
        %1780 = vmatprep.subr.mxu0 0.0
        %1781 = vmatpush1.msra.mxu0 0.0
        %1782 = vmatprep.subr.mxu0 0.0
        %1783 = vmatpush1.msra.mxu0 0.0
        %1784 = vmatprep.subr.mxu0 0.0
        %1785 = vmatpush1.msra.mxu0 0.0
        %1786 = vmatprep.subr.mxu0 0.0
        %1787 = vmatpush1.msra.mxu0 0.0
        %1788 = vmatprep.subr.mxu0 0.0
        %1789 = vmatpush1.msra.mxu0 0.0
        %1790 = vmatprep.subr.mxu0 0.0
        %1791 = vmatpush1.msra.mxu0 0.0
        %1792 = vmatprep.subr.mxu0 0.0
        %1793 = vmatpush1.msra.mxu0 0.0
        %1794 = vmatprep.subr.mxu0 0.0
        %1795 = vmatpush1.msra.mxu0 0.0
        %1796 = vmatprep.mubr.f32.mxu0 0.0
        %1797 = vmatmul.mubr.f32.gmra.mrb[0].mxu0 %v1730
        %v1798 = vpop.f32.mrb[0].mxu0
        %v1799 = vadd.f32 0.0, %v1798
        %v1800 = vpop.f32.mrb[0].mxu0
        %1801 = vdwg.mxu0
        %v1803 = vsel %vm1063, %v1723, 0
        %v1806 = vsel %vm1063, %v1799, 0
        %1808 = vmatprep.subr.mxu0 0.0
        %1809 = vmatpush1.msra.mxu0 %v1057
        %1810 = vmatprep.subr.mxu0 0.0
        %1811 = vmatpush1.msra.mxu0 0.0
        %1812 = vmatprep.subr.mxu0 0.0
        %1813 = vmatpush1.msra.mxu0 0.0
        %1814 = vmatprep.subr.mxu0 0.0
        %1815 = vmatpush1.msra.mxu0 0.0
        %1816 = vmatprep.subr.mxu0 0.0
        %1817 = vmatpush1.msra.mxu0 0.0
        %1818 = vmatprep.subr.mxu0 0.0
        %1819 = vmatpush1.msra.mxu0 0.0
        %1820 = vmatprep.subr.mxu0 0.0
        %1821 = vmatpush1.msra.mxu0 0.0
        %1822 = vmatprep.subr.mxu0 0.0
        %1823 = vmatpush1.msra.mxu0 0.0
        %1824 = vmatprep.subr.mxu0 0.0
        %1825 = vmatpush1.msra.mxu0 0.0
        %1826 = vmatprep.subr.mxu0 0.0
        %1827 = vmatpush1.msra.mxu0 0.0
        %1828 = vmatprep.subr.mxu0 0.0
        %1829 = vmatpush1.msra.mxu0 0.0
        %1830 = vmatprep.subr.mxu0 0.0
        %1831 = vmatpush1.msra.mxu0 0.0
        %1832 = vmatprep.subr.mxu0 0.0
        %1833 = vmatpush1.msra.mxu0 0.0
        %1834 = vmatprep.subr.mxu0 0.0
        %1835 = vmatpush1.msra.mxu0 0.0
        %1836 = vmatprep.subr.mxu0 0.0
        %1837 = vmatpush1.msra.mxu0 0.0
        %1838 = vmatprep.subr.mxu0 0.0
        %1839 = vmatpush1.msra.mxu0 0.0
        %1840 = vmatprep.subr.mxu0 0.0
        %1841 = vmatpush1.msra.mxu0 0.0
        %1842 = vmatprep.subr.mxu0 0.0
        %1843 = vmatpush1.msra.mxu0 0.0
        %1844 = vmatprep.subr.mxu0 0.0
        %1845 = vmatpush1.msra.mxu0 0.0
        %1846 = vmatprep.subr.mxu0 0.0
        %1847 = vmatpush1.msra.mxu0 0.0
        %1848 = vmatprep.subr.mxu0 0.0
        %1849 = vmatpush1.msra.mxu0 0.0
        %1850 = vmatprep.subr.mxu0 0.0
        %1851 = vmatpush1.msra.mxu0 0.0
        %1852 = vmatprep.subr.mxu0 0.0
        %1853 = vmatpush1.msra.mxu0 0.0
        %1854 = vmatprep.subr.mxu0 0.0
        %1855 = vmatpush1.msra.mxu0 0.0
        %1856 = vmatprep.subr.mxu0 0.0
        %1857 = vmatpush1.msra.mxu0 0.0
        %1858 = vmatprep.subr.mxu0 0.0
        %1859 = vmatpush1.msra.mxu0 0.0
        %1860 = vmatprep.subr.mxu0 0.0
        %1861 = vmatpush1.msra.mxu0 0.0
        %1862 = vmatprep.subr.mxu0 0.0
        %1863 = vmatpush1.msra.mxu0 0.0
        %1864 = vmatprep.subr.mxu0 0.0
        %1865 = vmatpush1.msra.mxu0 0.0
        %1866 = vmatprep.subr.mxu0 0.0
        %1867 = vmatpush1.msra.mxu0 0.0
        %1868 = vmatprep.subr.mxu0 0.0
        %1869 = vmatpush1.msra.mxu0 0.0
        %1870 = vmatprep.subr.mxu0 0.0
        %1871 = vmatpush1.msra.mxu0 0.0
        %1872 = vmatprep.mubr.f32.mxu0 0.0
        %1873 = vmatmul.mubr.f32.gmra.mrb[0].mxu0 %v1803
        %v1874 = vpop.f32.mrb[0].mxu0
        %v1875 = vadd.f32 0.0, %v1874
        %v1876 = vpop.f32.mrb[0].mxu0
        %1877 = vmatprep.mubr.f32.mxu0 0.0
        %1878 = vmatmul.mubr.f32.gmra.mrb[0].mxu0 %v1806
        %v1879 = vpop.f32.mrb[0].mxu0
        %v1880 = vadd.f32 0.0, %v1879
        %v1881 = vpop.f32.mrb[0].mxu0
        %1882 = vdwg.mxu0
        %v1883 = vadd.f32 %v1470, %v1875
        %v1884 = vadd.f32 %v1471, %v1880
        %1885 = vrot.lane.b32.xlu0 %v1048, 112
        %v1886 = vpop.permute.xlu0 %1885
        %1887 = vrot.lane.b32.xlu0 %v1048, 80
        %v1888 = vpop.permute.xlu0 %1887
        %v1889 = vsel %vm1063, %v1886, 0
        %v1891 = vsel %vm1063, %v1888, 0
        %1893 = vmatprep.subr.mxu0 0.0
        %1894 = vmatpush1.xpose.msra.mxu0 %v1891
        %1895 = vmatprep.subr.mxu0 0.0
        %1896 = vmatpush1.xpose.msra.mxu0 0.0
        %1897 = vmatprep.subr.mxu0 0.0
        %1898 = vmatpush1.xpose.msra.mxu0 0.0
        %1899 = vmatprep.subr.mxu0 0.0
        %1900 = vmatpush1.xpose.msra.mxu0 0.0
        %1901 = vmatprep.subr.mxu0 0.0
        %1902 = vmatpush1.xpose.msra.mxu0 0.0
        %1903 = vmatprep.subr.mxu0 0.0
        %1904 = vmatpush1.xpose.msra.mxu0 0.0
        %1905 = vmatprep.subr.mxu0 0.0
        %1906 = vmatpush1.xpose.msra.mxu0 0.0
        %1907 = vmatprep.subr.mxu0 0.0
        %1908 = vmatpush1.xpose.msra.mxu0 0.0
        %1909 = vmatprep.subr.mxu0 0.0
        %1910 = vmatpush1.xpose.msra.mxu0 0.0
        %1911 = vmatprep.subr.mxu0 0.0
        %1912 = vmatpush1.xpose.msra.mxu0 0.0
        %1913 = vmatprep.subr.mxu0 0.0
        %1914 = vmatpush1.xpose.msra.mxu0 0.0
        %1915 = vmatprep.subr.mxu0 0.0
        %1916 = vmatpush1.xpose.msra.mxu0 0.0
        %1917 = vmatprep.subr.mxu0 0.0
        %1918 = vmatpush1.xpose.msra.mxu0 0.0
        %1919 = vmatprep.subr.mxu0 0.0
        %1920 = vmatpush1.xpose.msra.mxu0 0.0
        %1921 = vmatprep.subr.mxu0 0.0
        %1922 = vmatpush1.xpose.msra.mxu0 0.0
        %1923 = vmatprep.subr.mxu0 0.0
        %1924 = vmatpush1.xpose.msra.mxu0 0.0
        %1925 = vmatprep.subr.mxu0 0.0
        %1926 = vmatpush1.xpose.msra.mxu0 0.0
        %1927 = vmatprep.subr.mxu0 0.0
        %1928 = vmatpush1.xpose.msra.mxu0 0.0
        %1929 = vmatprep.subr.mxu0 0.0
        %1930 = vmatpush1.xpose.msra.mxu0 0.0
        %1931 = vmatprep.subr.mxu0 0.0
        %1932 = vmatpush1.xpose.msra.mxu0 0.0
        %1933 = vmatprep.subr.mxu0 0.0
        %1934 = vmatpush1.xpose.msra.mxu0 0.0
        %1935 = vmatprep.subr.mxu0 0.0
        %1936 = vmatpush1.xpose.msra.mxu0 0.0
        %1937 = vmatprep.subr.mxu0 0.0
        %1938 = vmatpush1.xpose.msra.mxu0 0.0
        %1939 = vmatprep.subr.mxu0 0.0
        %1940 = vmatpush1.xpose.msra.mxu0 0.0
        %1941 = vmatprep.subr.mxu0 0.0
        %1942 = vmatpush1.xpose.msra.mxu0 0.0
        %1943 = vmatprep.subr.mxu0 0.0
        %1944 = vmatpush1.xpose.msra.mxu0 0.0
        %1945 = vmatprep.subr.mxu0 0.0
        %1946 = vmatpush1.xpose.msra.mxu0 0.0
        %1947 = vmatprep.subr.mxu0 0.0
        %1948 = vmatpush1.xpose.msra.mxu0 0.0
        %1949 = vmatprep.subr.mxu0 0.0
        %1950 = vmatpush1.xpose.msra.mxu0 0.0
        %1951 = vmatprep.subr.mxu0 0.0
        %1952 = vmatpush1.xpose.msra.mxu0 0.0
        %1953 = vmatprep.subr.mxu0 0.0
        %1954 = vmatpush1.xpose.msra.mxu0 0.0
        %1955 = vmatprep.subr.mxu0 0.0
        %1956 = vmatpush1.xpose.msra.mxu0 0.0
        %1957 = vmatprep.mubr.f32.mxu0 0.0
        %1958 = vmatmul.mubr.f32.gmra.mrb[0].mxu0 %v1889
        %v1959 = vpop.f32.mrb[0].mxu0
        %v1960 = vadd.f32 0.0, %v1959
        %v1961 = vpop.f32.mrb[0].mxu0
        %1962 = vdwg.mxu0
        %1963 = vrot.lane.b32.xlu0 %v1053, 112
        %v1964 = vpop.permute.xlu0 %1963
        %1965 = vrot.lane.b32.xlu0 %v1053, 80
        %v1966 = vpop.permute.xlu0 %1965
        %v1967 = vsel %vm1063, %v1964, 0
        %v1969 = vsel %vm1063, %v1966, 0
        %1971 = vmatprep.subr.mxu0 0.0
        %1972 = vmatpush1.xpose.msra.mxu0 %v1969
        %1973 = vmatprep.subr.mxu0 0.0
        %1974 = vmatpush1.xpose.msra.mxu0 0.0
        %1975 = vmatprep.subr.mxu0 0.0
        %1976 = vmatpush1.xpose.msra.mxu0 0.0
        %1977 = vmatprep.subr.mxu0 0.0
        %1978 = vmatpush1.xpose.msra.mxu0 0.0
        %1979 = vmatprep.subr.mxu0 0.0
        %1980 = vmatpush1.xpose.msra.mxu0 0.0
        %1981 = vmatprep.subr.mxu0 0.0
        %1982 = vmatpush1.xpose.msra.mxu0 0.0
        %1983 = vmatprep.subr.mxu0 0.0
        %1984 = vmatpush1.xpose.msra.mxu0 0.0
        %1985 = vmatprep.subr.mxu0 0.0
        %1986 = vmatpush1.xpose.msra.mxu0 0.0
        %1987 = vmatprep.subr.mxu0 0.0
        %1988 = vmatpush1.xpose.msra.mxu0 0.0
        %1989 = vmatprep.subr.mxu0 0.0
        %1990 = vmatpush1.xpose.msra.mxu0 0.0
        %1991 = vmatprep.subr.mxu0 0.0
        %1992 = vmatpush1.xpose.msra.mxu0 0.0
        %1993 = vmatprep.subr.mxu0 0.0
        %1994 = vmatpush1.xpose.msra.mxu0 0.0
        %1995 = vmatprep.subr.mxu0 0.0
        %1996 = vmatpush1.xpose.msra.mxu0 0.0
        %1997 = vmatprep.subr.mxu0 0.0
        %1998 = vmatpush1.xpose.msra.mxu0 0.0
        %1999 = vmatprep.subr.mxu0 0.0
        %2000 = vmatpush1.xpose.msra.mxu0 0.0
        %2001 = vmatprep.subr.mxu0 0.0
        %2002 = vmatpush1.xpose.msra.mxu0 0.0
        %2003 = vmatprep.subr.mxu0 0.0
        %2004 = vmatpush1.xpose.msra.mxu0 0.0
        %2005 = vmatprep.subr.mxu0 0.0
        %2006 = vmatpush1.xpose.msra.mxu0 0.0
        %2007 = vmatprep.subr.mxu0 0.0
        %2008 = vmatpush1.xpose.msra.mxu0 0.0
        %2009 = vmatprep.subr.mxu0 0.0
        %2010 = vmatpush1.xpose.msra.mxu0 0.0
        %2011 = vmatprep.subr.mxu0 0.0
        %2012 = vmatpush1.xpose.msra.mxu0 0.0
        %2013 = vmatprep.subr.mxu0 0.0
        %2014 = vmatpush1.xpose.msra.mxu0 0.0
        %2015 = vmatprep.subr.mxu0 0.0
        %2016 = vmatpush1.xpose.msra.mxu0 0.0
        %2017 = vmatprep.subr.mxu0 0.0
        %2018 = vmatpush1.xpose.msra.mxu0 0.0
        %2019 = vmatprep.subr.mxu0 0.0
        %2020 = vmatpush1.xpose.msra.mxu0 0.0
        %2021 = vmatprep.subr.mxu0 0.0
        %2022 = vmatpush1.xpose.msra.mxu0 0.0
        %2023 = vmatprep.subr.mxu0 0.0
        %2024 = vmatpush1.xpose.msra.mxu0 0.0
        %2025 = vmatprep.subr.mxu0 0.0
        %2026 = vmatpush1.xpose.msra.mxu0 0.0
        %2027 = vmatprep.subr.mxu0 0.0
        %2028 = vmatpush1.xpose.msra.mxu0 0.0
        %2029 = vmatprep.subr.mxu0 0.0
        %2030 = vmatpush1.xpose.msra.mxu0 0.0
        %2031 = vmatprep.subr.mxu0 0.0
        %2032 = vmatpush1.xpose.msra.mxu0 0.0
        %2033 = vmatprep.subr.mxu0 0.0
        %2034 = vmatpush1.xpose.msra.mxu0 0.0
        %2035 = vmatprep.mubr.f32.mxu0 0.0
        %2036 = vmatmul.mubr.f32.gmra.mrb[0].mxu0 %v1967
        %v2037 = vpop.f32.mrb[0].mxu0
        %v2038 = vadd.f32 0.0, %v2037
        %v2039 = vpop.f32.mrb[0].mxu0
        %2040 = vdwg.mxu0
        %v2041 = vsel %vm1063, %v1960, -inf
        %2042 = vmax.xlane.f32.xlu0 %v2041
        %v2043 = vpop.xlane.xlu0 %2042
        %v2044 = vsel %vm1063, %v2038, -inf
        %2045 = vmax.xlane.f32.xlu0 %v2044
        %v2046 = vpop.xlane.xlu0 %2045
        %v2047 = vsub.f32 %v1960, %v2043
        %v2048 = vsub.f32 %v2038, %v2046
        %v2049 = vmul.f32 %v2047, 1.442695
        %v2050 = vpow.pop %v2049
        %v2051 = vmul.f32 %v2048, 1.442695
        %v2052 = vpow.pop %v2051
        %v2053 = vsel %vm1063, %v2050, 0.0
        %2054 = vadd.xlane.f32.xlu0 %v2053
        %v2055 = vpop.xlane.xlu0 %2054
        %v2056 = vsel %vm1063, %v2052, 0.0
        %2057 = vadd.xlane.f32.xlu0 %v2056
        %v2058 = vpop.xlane.xlu0 %2057
        %v2059 = vrcp.pop %v2055
        %v2060 = vmul.f32 %v2050, %v2059
        %v2061 = vrcp.pop %v2058
        %v2062 = vmul.f32 %v2052, %v2061
        %2063 = vrot.lane.b32.xlu0 %v1048, 48
        %v2064 = vpop.permute.xlu0 %2063
        %v2067 = vsel %vm1063, %v2060, 0
        %2069 = vmatprep.subr.mxu0 0.0
        %2070 = vmatpush1.msra.mxu0 %v2064
        %2071 = vmatprep.subr.mxu0 0.0
        %2072 = vmatpush1.msra.mxu0 0.0
        %2073 = vmatprep.subr.mxu0 0.0
        %2074 = vmatpush1.msra.mxu0 0.0
        %2075 = vmatprep.subr.mxu0 0.0
        %2076 = vmatpush1.msra.mxu0 0.0
        %2077 = vmatprep.subr.mxu0 0.0
        %2078 = vmatpush1.msra.mxu0 0.0
        %2079 = vmatprep.subr.mxu0 0.0
        %2080 = vmatpush1.msra.mxu0 0.0
        %2081 = vmatprep.subr.mxu0 0.0
        %2082 = vmatpush1.msra.mxu0 0.0
        %2083 = vmatprep.subr.mxu0 0.0
        %2084 = vmatpush1.msra.mxu0 0.0
        %2085 = vmatprep.subr.mxu0 0.0
        %2086 = vmatpush1.msra.mxu0 0.0
        %2087 = vmatprep.subr.mxu0 0.0
        %2088 = vmatpush1.msra.mxu0 0.0
        %2089 = vmatprep.subr.mxu0 0.0
        %2090 = vmatpush1.msra.mxu0 0.0
        %2091 = vmatprep.subr.mxu0 0.0
        %2092 = vmatpush1.msra.mxu0 0.0
        %2093 = vmatprep.subr.mxu0 0.0
        %2094 = vmatpush1.msra.mxu0 0.0
        %2095 = vmatprep.subr.mxu0 0.0
        %2096 = vmatpush1.msra.mxu0 0.0
        %2097 = vmatprep.subr.mxu0 0.0
        %2098 = vmatpush1.msra.mxu0 0.0
        %2099 = vmatprep.subr.mxu0 0.0
        %2100 = vmatpush1.msra.mxu0 0.0
        %2101 = vmatprep.subr.mxu0 0.0
        %2102 = vmatpush1.msra.mxu0 0.0
        %2103 = vmatprep.subr.mxu0 0.0
        %2104 = vmatpush1.msra.mxu0 0.0
        %2105 = vmatprep.subr.mxu0 0.0
        %2106 = vmatpush1.msra.mxu0 0.0
        %2107 = vmatprep.subr.mxu0 0.0
        %2108 = vmatpush1.msra.mxu0 0.0
        %2109 = vmatprep.subr.mxu0 0.0
        %2110 = vmatpush1.msra.mxu0 0.0
        %2111 = vmatprep.subr.mxu0 0.0
        %2112 = vmatpush1.msra.mxu0 0.0
        %2113 = vmatprep.subr.mxu0 0.0
        %2114 = vmatpush1.msra.mxu0 0.0
        %2115 = vmatprep.subr.mxu0 0.0
        %2116 = vmatpush1.msra.mxu0 0.0
        %2117 = vmatprep.subr.mxu0 0.0
        %2118 = vmatpush1.msra.mxu0 0.0
        %2119 = vmatprep.subr.mxu0 0.0
        %2120 = vmatpush1.msra.mxu0 0.0
        %2121 = vmatprep.subr.mxu0 0.0
        %2122 = vmatpush1.msra.mxu0 0.0
        %2123 = vmatprep.subr.mxu0 0.0
        %2124 = vmatpush1.msra.mxu0 0.0
        %2125 = vmatprep.subr.mxu0 0.0
        %2126 = vmatpush1.msra.mxu0 0.0
        %2127 = vmatprep.subr.mxu0 0.0
        %2128 = vmatpush1.msra.mxu0 0.0
        %2129 = vmatprep.subr.mxu0 0.0
        %2130 = vmatpush1.msra.mxu0 0.0
        %2131 = vmatprep.subr.mxu0 0.0
        %2132 = vmatpush1.msra.mxu0 0.0
        %2133 = vmatprep.mubr.f32.mxu0 0.0
        %2134 = vmatmul.mubr.f32.gmra.mrb[0].mxu0 %v2067
        %v2135 = vpop.f32.mrb[0].mxu0
        %v2136 = vadd.f32 0.0, %v2135
        %v2137 = vpop.f32.mrb[0].mxu0
        %2138 = vdwg.mxu0
        %2139 = vrot.lane.b32.xlu0 %v1053, 48
        %v2140 = vpop.permute.xlu0 %2139
        %v2143 = vsel %vm1063, %v2062, 0
        %2145 = vmatprep.subr.mxu0 0.0
        %2146 = vmatpush1.msra.mxu0 %v2140
        %2147 = vmatprep.subr.mxu0 0.0
        %2148 = vmatpush1.msra.mxu0 0.0
        %2149 = vmatprep.subr.mxu0 0.0
        %2150 = vmatpush1.msra.mxu0 0.0
        %2151 = vmatprep.subr.mxu0 0.0
        %2152 = vmatpush1.msra.mxu0 0.0
        %2153 = vmatprep.subr.mxu0 0.0
        %2154 = vmatpush1.msra.mxu0 0.0
        %2155 = vmatprep.subr.mxu0 0.0
        %2156 = vmatpush1.msra.mxu0 0.0
        %2157 = vmatprep.subr.mxu0 0.0
        %2158 = vmatpush1.msra.mxu0 0.0
        %2159 = vmatprep.subr.mxu0 0.0
        %2160 = vmatpush1.msra.mxu0 0.0
        %2161 = vmatprep.subr.mxu0 0.0
        %2162 = vmatpush1.msra.mxu0 0.0
        %2163 = vmatprep.subr.mxu0 0.0
        %2164 = vmatpush1.msra.mxu0 0.0
        %2165 = vmatprep.subr.mxu0 0.0
        %2166 = vmatpush1.msra.mxu0 0.0
        %2167 = vmatprep.subr.mxu0 0.0
        %2168 = vmatpush1.msra.mxu0 0.0
        %2169 = vmatprep.subr.mxu0 0.0
        %2170 = vmatpush1.msra.mxu0 0.0
        %2171 = vmatprep.subr.mxu0 0.0
        %2172 = vmatpush1.msra.mxu0 0.0
        %2173 = vmatprep.subr.mxu0 0.0
        %2174 = vmatpush1.msra.mxu0 0.0
        %2175 = vmatprep.subr.mxu0 0.0
        %2176 = vmatpush1.msra.mxu0 0.0
        %2177 = vmatprep.subr.mxu0 0.0
        %2178 = vmatpush1.msra.mxu0 0.0
        %2179 = vmatprep.subr.mxu0 0.0
        %2180 = vmatpush1.msra.mxu0 0.0
        %2181 = vmatprep.subr.mxu0 0.0
        %2182 = vmatpush1.msra.mxu0 0.0
        %2183 = vmatprep.subr.mxu0 0.0
        %2184 = vmatpush1.msra.mxu0 0.0
        %2185 = vmatprep.subr.mxu0 0.0
        %2186 = vmatpush1.msra.mxu0 0.0
        %2187 = vmatprep.subr.mxu0 0.0
        %2188 = vmatpush1.msra.mxu0 0.0
        %2189 = vmatprep.subr.mxu0 0.0
        %2190 = vmatpush1.msra.mxu0 0.0
        %2191 = vmatprep.subr.mxu0 0.0
        %2192 = vmatpush1.msra.mxu0 0.0
        %2193 = vmatprep.subr.mxu0 0.0
        %2194 = vmatpush1.msra.mxu0 0.0
        %2195 = vmatprep.subr.mxu0 0.0
        %2196 = vmatpush1.msra.mxu0 0.0
        %2197 = vmatprep.subr.mxu0 0.0
        %2198 = vmatpush1.msra.mxu0 0.0
        %2199 = vmatprep.subr.mxu0 0.0
        %2200 = vmatpush1.msra.mxu0 0.0
        %2201 = vmatprep.subr.mxu0 0.0
        %2202 = vmatpush1.msra.mxu0 0.0
        %2203 = vmatprep.subr.mxu0 0.0
        %2204 = vmatpush1.msra.mxu0 0.0
        %2205 = vmatprep.subr.mxu0 0.0
        %2206 = vmatpush1.msra.mxu0 0.0
        %2207 = vmatprep.subr.mxu0 0.0
        %2208 = vmatpush1.msra.mxu0 0.0
        %2209 = vmatprep.mubr.f32.mxu0 0.0
        %2210 = vmatmul.mubr.f32.gmra.mrb[0].mxu0 %v2143
        %v2211 = vpop.f32.mrb[0].mxu0
        %v2212 = vadd.f32 0.0, %v2211
        %v2213 = vpop.f32.mrb[0].mxu0
        %2214 = vdwg.mxu0
        %v2216 = vsel %vm1063, %v2136, 0
        %v2219 = vsel %vm1063, %v2212, 0
        %2221 = vmatprep.subr.mxu0 0.0
        %2222 = vmatpush1.msra.mxu0 %v1058
        %2223 = vmatprep.subr.mxu0 0.0
        %2224 = vmatpush1.msra.mxu0 0.0
        %2225 = vmatprep.subr.mxu0 0.0
        %2226 = vmatpush1.msra.mxu0 0.0
        %2227 = vmatprep.subr.mxu0 0.0
        %2228 = vmatpush1.msra.mxu0 0.0
        %2229 = vmatprep.subr.mxu0 0.0
        %2230 = vmatpush1.msra.mxu0 0.0
        %2231 = vmatprep.subr.mxu0 0.0
        %2232 = vmatpush1.msra.mxu0 0.0
        %2233 = vmatprep.subr.mxu0 0.0
        %2234 = vmatpush1.msra.mxu0 0.0
        %2235 = vmatprep.subr.mxu0 0.0
        %2236 = vmatpush1.msra.mxu0 0.0
        %2237 = vmatprep.subr.mxu0 0.0
        %2238 = vmatpush1.msra.mxu0 0.0
        %2239 = vmatprep.subr.mxu0 0.0
        %2240 = vmatpush1.msra.mxu0 0.0
        %2241 = vmatprep.subr.mxu0 0.0
        %2242 = vmatpush1.msra.mxu0 0.0
        %2243 = vmatprep.subr.mxu0 0.0
        %2244 = vmatpush1.msra.mxu0 0.0
        %2245 = vmatprep.subr.mxu0 0.0
        %2246 = vmatpush1.msra.mxu0 0.0
        %2247 = vmatprep.subr.mxu0 0.0
        %2248 = vmatpush1.msra.mxu0 0.0
        %2249 = vmatprep.subr.mxu0 0.0
        %2250 = vmatpush1.msra.mxu0 0.0
        %2251 = vmatprep.subr.mxu0 0.0
        %2252 = vmatpush1.msra.mxu0 0.0
        %2253 = vmatprep.subr.mxu0 0.0
        %2254 = vmatpush1.msra.mxu0 0.0
        %2255 = vmatprep.subr.mxu0 0.0
        %2256 = vmatpush1.msra.mxu0 0.0
        %2257 = vmatprep.subr.mxu0 0.0
        %2258 = vmatpush1.msra.mxu0 0.0
        %2259 = vmatprep.subr.mxu0 0.0
        %2260 = vmatpush1.msra.mxu0 0.0
        %2261 = vmatprep.subr.mxu0 0.0
        %2262 = vmatpush1.msra.mxu0 0.0
        %2263 = vmatprep.subr.mxu0 0.0
        %2264 = vmatpush1.msra.mxu0 0.0
        %2265 = vmatprep.subr.mxu0 0.0
        %2266 = vmatpush1.msra.mxu0 0.0
        %2267 = vmatprep.subr.mxu0 0.0
        %2268 = vmatpush1.msra.mxu0 0.0
        %2269 = vmatprep.subr.mxu0 0.0
        %2270 = vmatpush1.msra.mxu0 0.0
        %2271 = vmatprep.subr.mxu0 0.0
        %2272 = vmatpush1.msra.mxu0 0.0
        %2273 = vmatprep.subr.mxu0 0.0
        %2274 = vmatpush1.msra.mxu0 0.0
        %2275 = vmatprep.subr.mxu0 0.0
        %2276 = vmatpush1.msra.mxu0 0.0
        %2277 = vmatprep.subr.mxu0 0.0
        %2278 = vmatpush1.msra.mxu0 0.0
        %2279 = vmatprep.subr.mxu0 0.0
        %2280 = vmatpush1.msra.mxu0 0.0
        %2281 = vmatprep.subr.mxu0 0.0
        %2282 = vmatpush1.msra.mxu0 0.0
        %2283 = vmatprep.subr.mxu0 0.0
        %2284 = vmatpush1.msra.mxu0 0.0
        %2285 = vmatprep.mubr.f32.mxu0 0.0
        %2286 = vmatmul.mubr.f32.gmra.mrb[0].mxu0 %v2216
        %v2287 = vpop.f32.mrb[0].mxu0
        %v2288 = vadd.f32 0.0, %v2287
        %v2289 = vpop.f32.mrb[0].mxu0
        %2290 = vmatprep.mubr.f32.mxu0 0.0
        %2291 = vmatmul.mubr.f32.gmra.mrb[0].mxu0 %v2219
        %v2292 = vpop.f32.mrb[0].mxu0
        %v2293 = vadd.f32 0.0, %v2292
        %v2294 = vpop.f32.mrb[0].mxu0
        %2295 = vdwg.mxu0
        %v2296 = vadd.f32 %v1883, %v2288
        %v2297 = vadd.f32 %v1884, %v2293
        %2298 = vrot.lane.b32.xlu0 %v1048, 104
        %v2299 = vpop.permute.xlu0 %2298
        %2300 = vrot.lane.b32.xlu0 %v1048, 72
        %v2301 = vpop.permute.xlu0 %2300
        %v2302 = vsel %vm1063, %v2299, 0
        %v2304 = vsel %vm1063, %v2301, 0
        %2306 = vmatprep.subr.mxu0 0.0
        %2307 = vmatpush1.xpose.msra.mxu0 %v2304
        %2308 = vmatprep.subr.mxu0 0.0
        %2309 = vmatpush1.xpose.msra.mxu0 0.0
        %2310 = vmatprep.subr.mxu0 0.0
        %2311 = vmatpush1.xpose.msra.mxu0 0.0
        %2312 = vmatprep.subr.mxu0 0.0
        %2313 = vmatpush1.xpose.msra.mxu0 0.0
        %2314 = vmatprep.subr.mxu0 0.0
        %2315 = vmatpush1.xpose.msra.mxu0 0.0
        %2316 = vmatprep.subr.mxu0 0.0
        %2317 = vmatpush1.xpose.msra.mxu0 0.0
        %2318 = vmatprep.subr.mxu0 0.0
        %2319 = vmatpush1.xpose.msra.mxu0 0.0
        %2320 = vmatprep.subr.mxu0 0.0
        %2321 = vmatpush1.xpose.msra.mxu0 0.0
        %2322 = vmatprep.subr.mxu0 0.0
        %2323 = vmatpush1.xpose.msra.mxu0 0.0
        %2324 = vmatprep.subr.mxu0 0.0
        %2325 = vmatpush1.xpose.msra.mxu0 0.0
        %2326 = vmatprep.subr.mxu0 0.0
        %2327 = vmatpush1.xpose.msra.mxu0 0.0
        %2328 = vmatprep.subr.mxu0 0.0
        %2329 = vmatpush1.xpose.msra.mxu0 0.0
        %2330 = vmatprep.subr.mxu0 0.0
        %2331 = vmatpush1.xpose.msra.mxu0 0.0
        %2332 = vmatprep.subr.mxu0 0.0
        %2333 = vmatpush1.xpose.msra.mxu0 0.0
        %2334 = vmatprep.subr.mxu0 0.0
        %2335 = vmatpush1.xpose.msra.mxu0 0.0
        %2336 = vmatprep.subr.mxu0 0.0
        %2337 = vmatpush1.xpose.msra.mxu0 0.0
        %2338 = vmatprep.subr.mxu0 0.0
        %2339 = vmatpush1.xpose.msra.mxu0 0.0
        %2340 = vmatprep.subr.mxu0 0.0
        %2341 = vmatpush1.xpose.msra.mxu0 0.0
        %2342 = vmatprep.subr.mxu0 0.0
        %2343 = vmatpush1.xpose.msra.mxu0 0.0
        %2344 = vmatprep.subr.mxu0 0.0
        %2345 = vmatpush1.xpose.msra.mxu0 0.0
        %2346 = vmatprep.subr.mxu0 0.0
        %2347 = vmatpush1.xpose.msra.mxu0 0.0
        %2348 = vmatprep.subr.mxu0 0.0
        %2349 = vmatpush1.xpose.msra.mxu0 0.0
        %2350 = vmatprep.subr.mxu0 0.0
        %2351 = vmatpush1.xpose.msra.mxu0 0.0
        %2352 = vmatprep.subr.mxu0 0.0
        %2353 = vmatpush1.xpose.msra.mxu0 0.0
        %2354 = vmatprep.subr.mxu0 0.0
        %2355 = vmatpush1.xpose.msra.mxu0 0.0
        %2356 = vmatprep.subr.mxu0 0.0
        %2357 = vmatpush1.xpose.msra.mxu0 0.0
        %2358 = vmatprep.subr.mxu0 0.0
        %2359 = vmatpush1.xpose.msra.mxu0 0.0
        %2360 = vmatprep.subr.mxu0 0.0
        %2361 = vmatpush1.xpose.msra.mxu0 0.0
        %2362 = vmatprep.subr.mxu0 0.0
        %2363 = vmatpush1.xpose.msra.mxu0 0.0
        %2364 = vmatprep.subr.mxu0 0.0
        %2365 = vmatpush1.xpose.msra.mxu0 0.0
        %2366 = vmatprep.subr.mxu0 0.0
        %2367 = vmatpush1.xpose.msra.mxu0 0.0
        %2368 = vmatprep.subr.mxu0 0.0
        %2369 = vmatpush1.xpose.msra.mxu0 0.0
        %2370 = vmatprep.mubr.f32.mxu0 0.0
        %2371 = vmatmul.mubr.f32.gmra.mrb[0].mxu0 %v2302
        %v2372 = vpop.f32.mrb[0].mxu0
        %v2373 = vadd.f32 0.0, %v2372
        %v2374 = vpop.f32.mrb[0].mxu0
        %2375 = vdwg.mxu0
        %2376 = vrot.lane.b32.xlu0 %v1053, 104
        %v2377 = vpop.permute.xlu0 %2376
        %2378 = vrot.lane.b32.xlu0 %v1053, 72
        %v2379 = vpop.permute.xlu0 %2378
        %v2380 = vsel %vm1063, %v2377, 0
        %v2382 = vsel %vm1063, %v2379, 0
        %2384 = vmatprep.subr.mxu0 0.0
        %2385 = vmatpush1.xpose.msra.mxu0 %v2382
        %2386 = vmatprep.subr.mxu0 0.0
        %2387 = vmatpush1.xpose.msra.mxu0 0.0
        %2388 = vmatprep.subr.mxu0 0.0
        %2389 = vmatpush1.xpose.msra.mxu0 0.0
        %2390 = vmatprep.subr.mxu0 0.0
        %2391 = vmatpush1.xpose.msra.mxu0 0.0
        %2392 = vmatprep.subr.mxu0 0.0
        %2393 = vmatpush1.xpose.msra.mxu0 0.0
        %2394 = vmatprep.subr.mxu0 0.0
        %2395 = vmatpush1.xpose.msra.mxu0 0.0
        %2396 = vmatprep.subr.mxu0 0.0
        %2397 = vmatpush1.xpose.msra.mxu0 0.0
        %2398 = vmatprep.subr.mxu0 0.0
        %2399 = vmatpush1.xpose.msra.mxu0 0.0
        %2400 = vmatprep.subr.mxu0 0.0
        %2401 = vmatpush1.xpose.msra.mxu0 0.0
        %2402 = vmatprep.subr.mxu0 0.0
        %2403 = vmatpush1.xpose.msra.mxu0 0.0
        %2404 = vmatprep.subr.mxu0 0.0
        %2405 = vmatpush1.xpose.msra.mxu0 0.0
        %2406 = vmatprep.subr.mxu0 0.0
        %2407 = vmatpush1.xpose.msra.mxu0 0.0
        %2408 = vmatprep.subr.mxu0 0.0
        %2409 = vmatpush1.xpose.msra.mxu0 0.0
        %2410 = vmatprep.subr.mxu0 0.0
        %2411 = vmatpush1.xpose.msra.mxu0 0.0
        %2412 = vmatprep.subr.mxu0 0.0
        %2413 = vmatpush1.xpose.msra.mxu0 0.0
        %2414 = vmatprep.subr.mxu0 0.0
        %2415 = vmatpush1.xpose.msra.mxu0 0.0
        %2416 = vmatprep.subr.mxu0 0.0
        %2417 = vmatpush1.xpose.msra.mxu0 0.0
        %2418 = vmatprep.subr.mxu0 0.0
        %2419 = vmatpush1.xpose.msra.mxu0 0.0
        %2420 = vmatprep.subr.mxu0 0.0
        %2421 = vmatpush1.xpose.msra.mxu0 0.0
        %2422 = vmatprep.subr.mxu0 0.0
        %2423 = vmatpush1.xpose.msra.mxu0 0.0
        %2424 = vmatprep.subr.mxu0 0.0
        %2425 = vmatpush1.xpose.msra.mxu0 0.0
        %2426 = vmatprep.subr.mxu0 0.0
        %2427 = vmatpush1.xpose.msra.mxu0 0.0
        %2428 = vmatprep.subr.mxu0 0.0
        %2429 = vmatpush1.xpose.msra.mxu0 0.0
        %2430 = vmatprep.subr.mxu0 0.0
        %2431 = vmatpush1.xpose.msra.mxu0 0.0
        %2432 = vmatprep.subr.mxu0 0.0
        %2433 = vmatpush1.xpose.msra.mxu0 0.0
        %2434 = vmatprep.subr.mxu0 0.0
        %2435 = vmatpush1.xpose.msra.mxu0 0.0
        %2436 = vmatprep.subr.mxu0 0.0
        %2437 = vmatpush1.xpose.msra.mxu0 0.0
        %2438 = vmatprep.subr.mxu0 0.0
        %2439 = vmatpush1.xpose.msra.mxu0 0.0
        %2440 = vmatprep.subr.mxu0 0.0
        %2441 = vmatpush1.xpose.msra.mxu0 0.0
        %2442 = vmatprep.subr.mxu0 0.0
        %2443 = vmatpush1.xpose.msra.mxu0 0.0
        %2444 = vmatprep.subr.mxu0 0.0
        %2445 = vmatpush1.xpose.msra.mxu0 0.0
        %2446 = vmatprep.subr.mxu0 0.0
        %2447 = vmatpush1.xpose.msra.mxu0 0.0
        %2448 = vmatprep.mubr.f32.mxu0 0.0
        %2449 = vmatmul.mubr.f32.gmra.mrb[0].mxu0 %v2380
        %v2450 = vpop.f32.mrb[0].mxu0
        %v2451 = vadd.f32 0.0, %v2450
        %v2452 = vpop.f32.mrb[0].mxu0
        %2453 = vdwg.mxu0
        %v2454 = vsel %vm1063, %v2373, -inf
        %2455 = vmax.xlane.f32.xlu0 %v2454
        %v2456 = vpop.xlane.xlu0 %2455
        %v2457 = vsel %vm1063, %v2451, -inf
        %2458 = vmax.xlane.f32.xlu0 %v2457
        %v2459 = vpop.xlane.xlu0 %2458
        %v2460 = vsub.f32 %v2373, %v2456
        %v2461 = vsub.f32 %v2451, %v2459
        %v2462 = vmul.f32 %v2460, 1.442695
        %v2463 = vpow.pop %v2462
        %v2464 = vmul.f32 %v2461, 1.442695
        %v2465 = vpow.pop %v2464
        %v2466 = vsel %vm1063, %v2463, 0.0
        %2467 = vadd.xlane.f32.xlu0 %v2466
        %v2468 = vpop.xlane.xlu0 %2467
        %v2469 = vsel %vm1063, %v2465, 0.0
        %2470 = vadd.xlane.f32.xlu0 %v2469
        %v2471 = vpop.xlane.xlu0 %2470
        %v2472 = vrcp.pop %v2468
        %v2473 = vmul.f32 %v2463, %v2472
        %v2474 = vrcp.pop %v2471
        %v2475 = vmul.f32 %v2465, %v2474
        %2476 = vrot.lane.b32.xlu0 %v1048, 40
        %v2477 = vpop.permute.xlu0 %2476
        %v2480 = vsel %vm1063, %v2473, 0
        %2482 = vmatprep.subr.mxu0 0.0
        %2483 = vmatpush1.msra.mxu0 %v2477
        %2484 = vmatprep.subr.mxu0 0.0
        %2485 = vmatpush1.msra.mxu0 0.0
        %2486 = vmatprep.subr.mxu0 0.0
        %2487 = vmatpush1.msra.mxu0 0.0
        %2488 = vmatprep.subr.mxu0 0.0
        %2489 = vmatpush1.msra.mxu0 0.0
        %2490 = vmatprep.subr.mxu0 0.0
        %2491 = vmatpush1.msra.mxu0 0.0
        %2492 = vmatprep.subr.mxu0 0.0
        %2493 = vmatpush1.msra.mxu0 0.0
        %2494 = vmatprep.subr.mxu0 0.0
        %2495 = vmatpush1.msra.mxu0 0.0
        %2496 = vmatprep.subr.mxu0 0.0
        %2497 = vmatpush1.msra.mxu0 0.0
        %2498 = vmatprep.subr.mxu0 0.0
        %2499 = vmatpush1.msra.mxu0 0.0
        %2500 = vmatprep.subr.mxu0 0.0
        %2501 = vmatpush1.msra.mxu0 0.0
        %2502 = vmatprep.subr.mxu0 0.0
        %2503 = vmatpush1.msra.mxu0 0.0
        %2504 = vmatprep.subr.mxu0 0.0
        %2505 = vmatpush1.msra.mxu0 0.0
        %2506 = vmatprep.subr.mxu0 0.0
        %2507 = vmatpush1.msra.mxu0 0.0
        %2508 = vmatprep.subr.mxu0 0.0
        %2509 = vmatpush1.msra.mxu0 0.0
        %2510 = vmatprep.subr.mxu0 0.0
        %2511 = vmatpush1.msra.mxu0 0.0
        %2512 = vmatprep.subr.mxu0 0.0
        %2513 = vmatpush1.msra.mxu0 0.0
        %2514 = vmatprep.subr.mxu0 0.0
        %2515 = vmatpush1.msra.mxu0 0.0
        %2516 = vmatprep.subr.mxu0 0.0
        %2517 = vmatpush1.msra.mxu0 0.0
        %2518 = vmatprep.subr.mxu0 0.0
        %2519 = vmatpush1.msra.mxu0 0.0
        %2520 = vmatprep.subr.mxu0 0.0
        %2521 = vmatpush1.msra.mxu0 0.0
        %2522 = vmatprep.subr.mxu0 0.0
        %2523 = vmatpush1.msra.mxu0 0.0
        %2524 = vmatprep.subr.mxu0 0.0
        %2525 = vmatpush1.msra.mxu0 0.0
        %2526 = vmatprep.subr.mxu0 0.0
        %2527 = vmatpush1.msra.mxu0 0.0
        %2528 = vmatprep.subr.mxu0 0.0
        %2529 = vmatpush1.msra.mxu0 0.0
        %2530 = vmatprep.subr.mxu0 0.0
        %2531 = vmatpush1.msra.mxu0 0.0
        %2532 = vmatprep.subr.mxu0 0.0
        %2533 = vmatpush1.msra.mxu0 0.0
        %2534 = vmatprep.subr.mxu0 0.0
        %2535 = vmatpush1.msra.mxu0 0.0
        %2536 = vmatprep.subr.mxu0 0.0
        %2537 = vmatpush1.msra.mxu0 0.0
        %2538 = vmatprep.subr.mxu0 0.0
        %2539 = vmatpush1.msra.mxu0 0.0
        %2540 = vmatprep.subr.mxu0 0.0
        %2541 = vmatpush1.msra.mxu0 0.0
        %2542 = vmatprep.subr.mxu0 0.0
        %2543 = vmatpush1.msra.mxu0 0.0
        %2544 = vmatprep.subr.mxu0 0.0
        %2545 = vmatpush1.msra.mxu0 0.0
        %2546 = vmatprep.mubr.f32.mxu0 0.0
        %2547 = vmatmul.mubr.f32.gmra.mrb[0].mxu0 %v2480
        %v2548 = vpop.f32.mrb[0].mxu0
        %v2549 = vadd.f32 0.0, %v2548
        %v2550 = vpop.f32.mrb[0].mxu0
        %2551 = vdwg.mxu0
        %2552 = vrot.lane.b32.xlu0 %v1053, 40
        %v2553 = vpop.permute.xlu0 %2552
        %v2556 = vsel %vm1063, %v2475, 0
        %2558 = vmatprep.subr.mxu0 0.0
        %2559 = vmatpush1.msra.mxu0 %v2553
        %2560 = vmatprep.subr.mxu0 0.0
        %2561 = vmatpush1.msra.mxu0 0.0
        %2562 = vmatprep.subr.mxu0 0.0
        %2563 = vmatpush1.msra.mxu0 0.0
        %2564 = vmatprep.subr.mxu0 0.0
        %2565 = vmatpush1.msra.mxu0 0.0
        %2566 = vmatprep.subr.mxu0 0.0
        %2567 = vmatpush1.msra.mxu0 0.0
        %2568 = vmatprep.subr.mxu0 0.0
        %2569 = vmatpush1.msra.mxu0 0.0
        %2570 = vmatprep.subr.mxu0 0.0
        %2571 = vmatpush1.msra.mxu0 0.0
        %2572 = vmatprep.subr.mxu0 0.0
        %2573 = vmatpush1.msra.mxu0 0.0
        %2574 = vmatprep.subr.mxu0 0.0
        %2575 = vmatpush1.msra.mxu0 0.0
        %2576 = vmatprep.subr.mxu0 0.0
        %2577 = vmatpush1.msra.mxu0 0.0
        %2578 = vmatprep.subr.mxu0 0.0
        %2579 = vmatpush1.msra.mxu0 0.0
        %2580 = vmatprep.subr.mxu0 0.0
        %2581 = vmatpush1.msra.mxu0 0.0
        %2582 = vmatprep.subr.mxu0 0.0
        %2583 = vmatpush1.msra.mxu0 0.0
        %2584 = vmatprep.subr.mxu0 0.0
        %2585 = vmatpush1.msra.mxu0 0.0
        %2586 = vmatprep.subr.mxu0 0.0
        %2587 = vmatpush1.msra.mxu0 0.0
        %2588 = vmatprep.subr.mxu0 0.0
        %2589 = vmatpush1.msra.mxu0 0.0
        %2590 = vmatprep.subr.mxu0 0.0
        %2591 = vmatpush1.msra.mxu0 0.0
        %2592 = vmatprep.subr.mxu0 0.0
        %2593 = vmatpush1.msra.mxu0 0.0
        %2594 = vmatprep.subr.mxu0 0.0
        %2595 = vmatpush1.msra.mxu0 0.0
        %2596 = vmatprep.subr.mxu0 0.0
        %2597 = vmatpush1.msra.mxu0 0.0
        %2598 = vmatprep.subr.mxu0 0.0
        %2599 = vmatpush1.msra.mxu0 0.0
        %2600 = vmatprep.subr.mxu0 0.0
        %2601 = vmatpush1.msra.mxu0 0.0
        %2602 = vmatprep.subr.mxu0 0.0
        %2603 = vmatpush1.msra.mxu0 0.0
        %2604 = vmatprep.subr.mxu0 0.0
        %2605 = vmatpush1.msra.mxu0 0.0
        %2606 = vmatprep.subr.mxu0 0.0
        %2607 = vmatpush1.msra.mxu0 0.0
        %2608 = vmatprep.subr.mxu0 0.0
        %2609 = vmatpush1.msra.mxu0 0.0
        %2610 = vmatprep.subr.mxu0 0.0
        %2611 = vmatpush1.msra.mxu0 0.0
        %2612 = vmatprep.subr.mxu0 0.0
        %2613 = vmatpush1.msra.mxu0 0.0
        %2614 = vmatprep.subr.mxu0 0.0
        %2615 = vmatpush1.msra.mxu0 0.0
        %2616 = vmatprep.subr.mxu0 0.0
        %2617 = vmatpush1.msra.mxu0 0.0
        %2618 = vmatprep.subr.mxu0 0.0
        %2619 = vmatpush1.msra.mxu0 0.0
        %2620 = vmatprep.subr.mxu0 0.0
        %2621 = vmatpush1.msra.mxu0 0.0
        %2622 = vmatprep.mubr.f32.mxu0 0.0
        %2623 = vmatmul.mubr.f32.gmra.mrb[0].mxu0 %v2556
        %v2624 = vpop.f32.mrb[0].mxu0
        %v2625 = vadd.f32 0.0, %v2624
        %v2626 = vpop.f32.mrb[0].mxu0
        %2627 = vdwg.mxu0
        %v2629 = vsel %vm1063, %v2549, 0
        %v2632 = vsel %vm1063, %v2625, 0
        %2634 = vmatprep.subr.mxu0 0.0
        %2635 = vmatpush1.msra.mxu0 %v1059
        %2636 = vmatprep.subr.mxu0 0.0
        %2637 = vmatpush1.msra.mxu0 0.0
        %2638 = vmatprep.subr.mxu0 0.0
        %2639 = vmatpush1.msra.mxu0 0.0
        %2640 = vmatprep.subr.mxu0 0.0
        %2641 = vmatpush1.msra.mxu0 0.0
        %2642 = vmatprep.subr.mxu0 0.0
        %2643 = vmatpush1.msra.mxu0 0.0
        %2644 = vmatprep.subr.mxu0 0.0
        %2645 = vmatpush1.msra.mxu0 0.0
        %2646 = vmatprep.subr.mxu0 0.0
        %2647 = vmatpush1.msra.mxu0 0.0
        %2648 = vmatprep.subr.mxu0 0.0
        %2649 = vmatpush1.msra.mxu0 0.0
        %2650 = vmatprep.subr.mxu0 0.0
        %2651 = vmatpush1.msra.mxu0 0.0
        %2652 = vmatprep.subr.mxu0 0.0
        %2653 = vmatpush1.msra.mxu0 0.0
        %2654 = vmatprep.subr.mxu0 0.0
        %2655 = vmatpush1.msra.mxu0 0.0
        %2656 = vmatprep.subr.mxu0 0.0
        %2657 = vmatpush1.msra.mxu0 0.0
        %2658 = vmatprep.subr.mxu0 0.0
        %2659 = vmatpush1.msra.mxu0 0.0
        %2660 = vmatprep.subr.mxu0 0.0
        %2661 = vmatpush1.msra.mxu0 0.0
        %2662 = vmatprep.subr.mxu0 0.0
        %2663 = vmatpush1.msra.mxu0 0.0
        %2664 = vmatprep.subr.mxu0 0.0
        %2665 = vmatpush1.msra.mxu0 0.0
        %2666 = vmatprep.subr.mxu0 0.0
        %2667 = vmatpush1.msra.mxu0 0.0
        %2668 = vmatprep.subr.mxu0 0.0
        %2669 = vmatpush1.msra.mxu0 0.0
        %2670 = vmatprep.subr.mxu0 0.0
        %2671 = vmatpush1.msra.mxu0 0.0
        %2672 = vmatprep.subr.mxu0 0.0
        %2673 = vmatpush1.msra.mxu0 0.0
        %2674 = vmatprep.subr.mxu0 0.0
        %2675 = vmatpush1.msra.mxu0 0.0
        %2676 = vmatprep.subr.mxu0 0.0
        %2677 = vmatpush1.msra.mxu0 0.0
        %2678 = vmatprep.subr.mxu0 0.0
        %2679 = vmatpush1.msra.mxu0 0.0
        %2680 = vmatprep.subr.mxu0 0.0
        %2681 = vmatpush1.msra.mxu0 0.0
        %2682 = vmatprep.subr.mxu0 0.0
        %2683 = vmatpush1.msra.mxu0 0.0
        %2684 = vmatprep.subr.mxu0 0.0
        %2685 = vmatpush1.msra.mxu0 0.0
        %2686 = vmatprep.subr.mxu0 0.0
        %2687 = vmatpush1.msra.mxu0 0.0
        %2688 = vmatprep.subr.mxu0 0.0
        %2689 = vmatpush1.msra.mxu0 0.0
        %2690 = vmatprep.subr.mxu0 0.0
        %2691 = vmatpush1.msra.mxu0 0.0
        %2692 = vmatprep.subr.mxu0 0.0
        %2693 = vmatpush1.msra.mxu0 0.0
        %2694 = vmatprep.subr.mxu0 0.0
        %2695 = vmatpush1.msra.mxu0 0.0
        %2696 = vmatprep.subr.mxu0 0.0
        %2697 = vmatpush1.msra.mxu0 0.0
        %2698 = vmatprep.mubr.f32.mxu0 0.0
        %2699 = vmatmul.mubr.f32.gmra.mrb[0].mxu0 %v2629
        %v2700 = vpop.f32.mrb[0].mxu0
        %v2701 = vadd.f32 0.0, %v2700
        %v2702 = vpop.f32.mrb[0].mxu0
        %2703 = vmatprep.mubr.f32.mxu0 0.0
        %2704 = vmatmul.mubr.f32.gmra.mrb[0].mxu0 %v2632
        %v2705 = vpop.f32.mrb[0].mxu0
        %v2706 = vadd.f32 0.0, %v2705
        %v2707 = vpop.f32.mrb[0].mxu0
        %2708 = vdwg.mxu0
        %v2709 = vadd.f32 %v2296, %v2701
        %v2710 = vadd.f32 %v2297, %v2706
        %v2711 = vld [vmem:[%s943] sm:$0x1]
        %v2712 = vld [vmem:[%s946] sm:$0x1]
        %v2713 = vsel %vm974, %v2709, 0.0
        %2714 = vadd.xlane.f32.xlu0 %v2713
        %v2715 = vpop.xlane.xlu0 %2714
        %v2716 = vsel %vm974, %v2710, 0.0
        %2717 = vadd.xlane.f32.xlu0 %v2716
        %v2718 = vpop.xlane.xlu0 %2717
        %v2719 = vrcp.pop 32.0
        %v2720 = vmul.f32 %v2715, %v2719
        %v2721 = vmul.f32 %v2718, %v2719
        %v2722 = vsub.f32 %v2709, %v2720
        %v2723 = vsub.f32 %v2710, %v2721
        %v2724 = vmul.f32 %v2722, %v2722
        %v2725 = vmul.f32 %v2723, %v2723
        %v2726 = vsel %vm974, %v2724, 0.0
        %2727 = vadd.xlane.f32.xlu0 %v2726
        %v2728 = vpop.xlane.xlu0 %2727
        %v2729 = vsel %vm974, %v2725, 0.0
        %2730 = vadd.xlane.f32.xlu0 %v2729
        %v2731 = vpop.xlane.xlu0 %2730
        %v2732 = vmul.f32 %v2728, %v2719
        %v2733 = vmul.f32 %v2731, %v2719
        %v2734 = vadd.f32 %v2732, 1e-05
        %v2735 = vadd.f32 %v2733, 1e-05
        %v2736 = vrsqrt.pop %v2734
        %v2737 = vrsqrt.pop %v2735
        %v2738 = vmul.f32 %v2722, %v2736
        %v2739 = vmul.f32 %v2723, %v2737
        %v2741 = vlaneseq
        %v2742 = vshrl.u32 %v2741, 7
        %v2743 = vsub.s32 0, %v2742
        %v2744 = vrot.slane %v2711, %v2743
        %v2746 = vmul.f32 %v2738, %v2744
        %v2747 = vmul.f32 %v2739, %v2744
        %v2749 = vlaneseq
        %v2750 = vshrl.u32 %v2749, 7
        %v2751 = vsub.s32 0, %v2750
        %v2752 = vrot.slane %v2712, %v2751
        %v2754 = vadd.f32 %v2746, %v2752
        %v2755 = vadd.f32 %v2747, %v2752
        %v2756 = vld [vmem:[%s929] sm:$0xff]
        %v2757 = vld [vmem:[%s929 + $0x8] sm:$0xff]
        %v2758 = vld [vmem:[%s929 + $0x10] sm:$0xff]
        %v2759 = vld [vmem:[%s929 + $0x18] sm:$0xff]
        %v2761 = vsel %vm974, %v2754, 0
        %v2764 = vsel %vm974, %v2755, 0
        %2766 = vmatprep.subr.mxu0 0.0
        %2767 = vmatpush1.msra.mxu0 %v2756
        %2768 = vmatprep.subr.mxu0 0.0
        %2769 = vmatpush1.msra.mxu0 %v2757
        %2770 = vmatprep.subr.mxu0 0.0
        %2771 = vmatpush1.msra.mxu0 %v2758
        %2772 = vmatprep.subr.mxu0 0.0
        %2773 = vmatpush1.msra.mxu0 %v2759
        %2774 = vmatprep.subr.mxu0 0.0
        %2775 = vmatpush1.msra.mxu0 0.0
        %2776 = vmatprep.subr.mxu0 0.0
        %2777 = vmatpush1.msra.mxu0 0.0
        %2778 = vmatprep.subr.mxu0 0.0
        %2779 = vmatpush1.msra.mxu0 0.0
        %2780 = vmatprep.subr.mxu0 0.0
        %2781 = vmatpush1.msra.mxu0 0.0
        %2782 = vmatprep.subr.mxu0 0.0
        %2783 = vmatpush1.msra.mxu0 0.0
        %2784 = vmatprep.subr.mxu0 0.0
        %2785 = vmatpush1.msra.mxu0 0.0
        %2786 = vmatprep.subr.mxu0 0.0
        %2787 = vmatpush1.msra.mxu0 0.0
        %2788 = vmatprep.subr.mxu0 0.0
        %2789 = vmatpush1.msra.mxu0 0.0
        %2790 = vmatprep.subr.mxu0 0.0
        %2791 = vmatpush1.msra.mxu0 0.0
        %2792 = vmatprep.subr.mxu0 0.0
        %2793 = vmatpush1.msra.mxu0 0.0
        %2794 = vmatprep.subr.mxu0 0.0
        %2795 = vmatpush1.msra.mxu0 0.0
        %2796 = vmatprep.subr.mxu0 0.0
        %2797 = vmatpush1.msra.mxu0 0.0
        %2798 = vmatprep.subr.mxu0 0.0
        %2799 = vmatpush1.msra.mxu0 0.0
        %2800 = vmatprep.subr.mxu0 0.0
        %2801 = vmatpush1.msra.mxu0 0.0
        %2802 = vmatprep.subr.mxu0 0.0
        %2803 = vmatpush1.msra.mxu0 0.0
        %2804 = vmatprep.subr.mxu0 0.0
        %2805 = vmatpush1.msra.mxu0 0.0
        %2806 = vmatprep.subr.mxu0 0.0
        %2807 = vmatpush1.msra.mxu0 0.0
        %2808 = vmatprep.subr.mxu0 0.0
        %2809 = vmatpush1.msra.mxu0 0.0
        %2810 = vmatprep.subr.mxu0 0.0
        %2811 = vmatpush1.msra.mxu0 0.0
        %2812 = vmatprep.subr.mxu0 0.0
        %2813 = vmatpush1.msra.mxu0 0.0
        %2814 = vmatprep.subr.mxu0 0.0
        %2815 = vmatpush1.msra.mxu0 0.0
        %2816 = vmatprep.subr.mxu0 0.0
        %2817 = vmatpush1.msra.mxu0 0.0
        %2818 = vmatprep.subr.mxu0 0.0
        %2819 = vmatpush1.msra.mxu0 0.0
        %2820 = vmatprep.subr.mxu0 0.0
        %2821 = vmatpush1.msra.mxu0 0.0
        %2822 = vmatprep.subr.mxu0 0.0
        %2823 = vmatpush1.msra.mxu0 0.0
        %2824 = vmatprep.subr.mxu0 0.0
        %2825 = vmatpush1.msra.mxu0 0.0
        %2826 = vmatprep.subr.mxu0 0.0
        %2827 = vmatpush1.msra.mxu0 0.0
        %2828 = vmatprep.subr.mxu0 0.0
        %2829 = vmatpush1.msra.mxu0 0.0
        %2830 = vmatprep.mubr.f32.mxu0 0.0
        %2831 = vmatmul.mubr.f32.gmra.mrb[0].mxu0 %v2761
        %v2832 = vpop.f32.mrb[0].mxu0
        %v2833 = vadd.f32 0.0, %v2832
        %v2834 = vpop.f32.mrb[0].mxu0
        %2835 = vmatprep.mubr.f32.mxu0 0.0
        %2836 = vmatmul.mubr.f32.gmra.mrb[0].mxu0 %v2764
        %v2837 = vpop.f32.mrb[0].mxu0
        %v2838 = vadd.f32 0.0, %v2837
        %v2839 = vpop.f32.mrb[0].mxu0
        %2840 = vdwg.mxu0
        %v2841 = vld [vmem:[#allocation6] sm:$0xff]
        %v2842 = vld [vmem:[#allocation6 + $0x8] sm:$0xff]
        %v2843 = vld [vmem:[%s779] sm:$0xff]
        %v2844 = vld [vmem:[%s779 + $0x8] sm:$0xff]
        %v2845 = vld [vmem:[%s779 + $0x10] sm:$0xff]
        %v2846 = vld [vmem:[%s779 + $0x18] sm:$0xff]
        %v2848 = vsel %vm974, %v2841, 0
        %v2851 = vsel %vm974, %v2842, 0
        %2853 = vmatprep.subr.mxu0 0.0
        %2854 = vmatpush1.msra.mxu0 %v2843
        %2855 = vmatprep.subr.mxu0 0.0
        %2856 = vmatpush1.msra.mxu0 %v2844
        %2857 = vmatprep.subr.mxu0 0.0
        %2858 = vmatpush1.msra.mxu0 %v2845
        %2859 = vmatprep.subr.mxu0 0.0
        %2860 = vmatpush1.msra.mxu0 %v2846
        %2861 = vmatprep.subr.mxu0 0.0
        %2862 = vmatpush1.msra.mxu0 0.0
        %2863 = vmatprep.subr.mxu0 0.0
        %2864 = vmatpush1.msra.mxu0 0.0
        %2865 = vmatprep.subr.mxu0 0.0
        %2866 = vmatpush1.msra.mxu0 0.0
        %2867 = vmatprep.subr.mxu0 0.0
        %2868 = vmatpush1.msra.mxu0 0.0
        %2869 = vmatprep.subr.mxu0 0.0
        %2870 = vmatpush1.msra.mxu0 0.0
        %2871 = vmatprep.subr.mxu0 0.0
        %2872 = vmatpush1.msra.mxu0 0.0
        %2873 = vmatprep.subr.mxu0 0.0
        %2874 = vmatpush1.msra.mxu0 0.0
        %2875 = vmatprep.subr.mxu0 0.0
        %2876 = vmatpush1.msra.mxu0 0.0
        %2877 = vmatprep.subr.mxu0 0.0
        %2878 = vmatpush1.msra.mxu0 0.0
        %2879 = vmatprep.subr.mxu0 0.0
        %2880 = vmatpush1.msra.mxu0 0.0
        %2881 = vmatprep.subr.mxu0 0.0
        %2882 = vmatpush1.msra.mxu0 0.0
        %2883 = vmatprep.subr.mxu0 0.0
        %2884 = vmatpush1.msra.mxu0 0.0
        %2885 = vmatprep.subr.mxu0 0.0
        %2886 = vmatpush1.msra.mxu0 0.0
        %2887 = vmatprep.subr.mxu0 0.0
        %2888 = vmatpush1.msra.mxu0 0.0
        %2889 = vmatprep.subr.mxu0 0.0
        %2890 = vmatpush1.msra.mxu0 0.0
        %2891 = vmatprep.subr.mxu0 0.0
        %2892 = vmatpush1.msra.mxu0 0.0
        %2893 = vmatprep.subr.mxu0 0.0
        %2894 = vmatpush1.msra.mxu0 0.0
        %2895 = vmatprep.subr.mxu0 0.0
        %2896 = vmatpush1.msra.mxu0 0.0
        %2897 = vmatprep.subr.mxu0 0.0
        %2898 = vmatpush1.msra.mxu0 0.0
        %2899 = vmatprep.subr.mxu0 0.0
        %2900 = vmatpush1.msra.mxu0 0.0
        %2901 = vmatprep.subr.mxu0 0.0
        %2902 = vmatpush1.msra.mxu0 0.0
        %2903 = vmatprep.subr.mxu0 0.0
        %2904 = vmatpush1.msra.mxu0 0.0
        %2905 = vmatprep.subr.mxu0 0.0
        %2906 = vmatpush1.msra.mxu0 0.0
        %2907 = vmatprep.subr.mxu0 0.0
        %2908 = vmatpush1.msra.mxu0 0.0
        %2909 = vmatprep.subr.mxu0 0.0
        %2910 = vmatpush1.msra.mxu0 0.0
        %2911 = vmatprep.subr.mxu0 0.0
        %2912 = vmatpush1.msra.mxu0 0.0
        %2913 = vmatprep.subr.mxu0 0.0
        %2914 = vmatpush1.msra.mxu0 0.0
        %2915 = vmatprep.subr.mxu0 0.0
        %2916 = vmatpush1.msra.mxu0 0.0
        %2917 = vmatprep.mubr.f32.mxu0 0.0
        %2918 = vmatmul.mubr.f32.gmra.mrb[0].mxu0 %v2848
        %v2919 = vpop.f32.mrb[0].mxu0
        %v2920 = vadd.f32 0.0, %v2919
        %v2921 = vpop.f32.mrb[0].mxu0
        %2922 = vmatprep.mubr.f32.mxu0 0.0
        %2923 = vmatmul.mubr.f32.gmra.mrb[0].mxu0 %v2851
        %v2924 = vpop.f32.mrb[0].mxu0
        %v2925 = vadd.f32 0.0, %v2924
        %v2926 = vpop.f32.mrb[0].mxu0
        %2927 = vdwg.mxu0
        %v2928 = vld [vmem:[#allocation8] sm:$0xff]
        %v2929 = vld [vmem:[#allocation8 + $0x8] sm:$0xff]
        %v2930 = vld [vmem:[%s788] sm:$0xff]
        %v2931 = vld [vmem:[%s788 + $0x8] sm:$0xff]
        %v2932 = vld [vmem:[%s788 + $0x10] sm:$0xff]
        %v2933 = vld [vmem:[%s788 + $0x18] sm:$0xff]
        %v2935 = vsel %vm974, %v2928, 0
        %v2938 = vsel %vm974, %v2929, 0
        %2940 = vmatprep.subr.mxu0 0.0
        %2941 = vmatpush1.msra.mxu0 %v2930
        %2942 = vmatprep.subr.mxu0 0.0
        %2943 = vmatpush1.msra.mxu0 %v2931
        %2944 = vmatprep.subr.mxu0 0.0
        %2945 = vmatpush1.msra.mxu0 %v2932
        %2946 = vmatprep.subr.mxu0 0.0
        %2947 = vmatpush1.msra.mxu0 %v2933
        %2948 = vmatprep.subr.mxu0 0.0
        %2949 = vmatpush1.msra.mxu0 0.0
        %2950 = vmatprep.subr.mxu0 0.0
        %2951 = vmatpush1.msra.mxu0 0.0
        %2952 = vmatprep.subr.mxu0 0.0
        %2953 = vmatpush1.msra.mxu0 0.0
        %2954 = vmatprep.subr.mxu0 0.0
        %2955 = vmatpush1.msra.mxu0 0.0
        %2956 = vmatprep.subr.mxu0 0.0
        %2957 = vmatpush1.msra.mxu0 0.0
        %2958 = vmatprep.subr.mxu0 0.0
        %2959 = vmatpush1.msra.mxu0 0.0
        %2960 = vmatprep.subr.mxu0 0.0
        %2961 = vmatpush1.msra.mxu0 0.0
        %2962 = vmatprep.subr.mxu0 0.0
        %2963 = vmatpush1.msra.mxu0 0.0
        %2964 = vmatprep.subr.mxu0 0.0
        %2965 = vmatpush1.msra.mxu0 0.0
        %2966 = vmatprep.subr.mxu0 0.0
        %2967 = vmatpush1.msra.mxu0 0.0
        %2968 = vmatprep.subr.mxu0 0.0
        %2969 = vmatpush1.msra.mxu0 0.0
        %2970 = vmatprep.subr.mxu0 0.0
        %2971 = vmatpush1.msra.mxu0 0.0
        %2972 = vmatprep.subr.mxu0 0.0
        %2973 = vmatpush1.msra.mxu0 0.0
        %2974 = vmatprep.subr.mxu0 0.0
        %2975 = vmatpush1.msra.mxu0 0.0
        %2976 = vmatprep.subr.mxu0 0.0
        %2977 = vmatpush1.msra.mxu0 0.0
        %2978 = vmatprep.subr.mxu0 0.0
        %2979 = vmatpush1.msra.mxu0 0.0
        %2980 = vmatprep.subr.mxu0 0.0
        %2981 = vmatpush1.msra.mxu0 0.0
        %2982 = vmatprep.subr.mxu0 0.0
        %2983 = vmatpush1.msra.mxu0 0.0
        %2984 = vmatprep.subr.mxu0 0.0
        %2985 = vmatpush1.msra.mxu0 0.0
        %2986 = vmatprep.subr.mxu0 0.0
        %2987 = vmatpush1.msra.mxu0 0.0
        %2988 = vmatprep.subr.mxu0 0.0
        %2989 = vmatpush1.msra.mxu0 0.0
        %2990 = vmatprep.subr.mxu0 0.0
        %2991 = vmatpush1.msra.mxu0 0.0
        %2992 = vmatprep.subr.mxu0 0.0
        %2993 = vmatpush1.msra.mxu0 0.0
        %2994 = vmatprep.subr.mxu0 0.0
        %2995 = vmatpush1.msra.mxu0 0.0
        %2996 = vmatprep.subr.mxu0 0.0
        %2997 = vmatpush1.msra.mxu0 0.0
        %2998 = vmatprep.subr.mxu0 0.0
        %2999 = vmatpush1.msra.mxu0 0.0
        %3000 = vmatprep.subr.mxu0 0.0
        %3001 = vmatpush1.msra.mxu0 0.0
        %3002 = vmatprep.subr.mxu0 0.0
        %3003 = vmatpush1.msra.mxu0 0.0
        %3004 = vmatprep.mubr.f32.mxu0 0.0
        %3005 = vmatmul.mubr.f32.gmra.mrb[0].mxu0 %v2935
        %v3006 = vpop.f32.mrb[0].mxu0
        %v3007 = vadd.f32 0.0, %v3006
        %v3008 = vpop.f32.mrb[0].mxu0
        %3009 = vmatprep.mubr.f32.mxu0 0.0
        %3010 = vmatmul.mubr.f32.gmra.mrb[0].mxu0 %v2938
        %v3011 = vpop.f32.mrb[0].mxu0
        %v3012 = vadd.f32 0.0, %v3011
        %v3013 = vpop.f32.mrb[0].mxu0
        %3014 = vdwg.mxu0
        %v3015 = vld [vmem:[%s797] sm:$0xff]
        %v3016 = vld [vmem:[%s797 + $0x8] sm:$0xff]
        %v3017 = vld [vmem:[%s797 + $0x10] sm:$0xff]
        %v3018 = vld [vmem:[%s797 + $0x18] sm:$0xff]
        %v3020 = vsel %vm1063, %v2833, 0
        %v3023 = vsel %vm1063, %v2920, 0
        %3025 = vmatprep.subr.mxu0 0.0
        %3026 = vmatpush1.xpose.msra.mxu0 %v3023
        %3027 = vmatprep.subr.mxu0 0.0
        %3028 = vmatpush1.xpose.msra.mxu0 0.0
        %3029 = vmatprep.subr.mxu0 0.0
        %3030 = vmatpush1.xpose.msra.mxu0 0.0
        %3031 = vmatprep.subr.mxu0 0.0
        %3032 = vmatpush1.xpose.msra.mxu0 0.0
        %3033 = vmatprep.subr.mxu0 0.0
        %3034 = vmatpush1.xpose.msra.mxu0 0.0
        %3035 = vmatprep.subr.mxu0 0.0
        %3036 = vmatpush1.xpose.msra.mxu0 0.0
        %3037 = vmatprep.subr.mxu0 0.0
        %3038 = vmatpush1.xpose.msra.mxu0 0.0
        %3039 = vmatprep.subr.mxu0 0.0
        %3040 = vmatpush1.xpose.msra.mxu0 0.0
        %3041 = vmatprep.subr.mxu0 0.0
        %3042 = vmatpush1.xpose.msra.mxu0 0.0
        %3043 = vmatprep.subr.mxu0 0.0
        %3044 = vmatpush1.xpose.msra.mxu0 0.0
        %3045 = vmatprep.subr.mxu0 0.0
        %3046 = vmatpush1.xpose.msra.mxu0 0.0
        %3047 = vmatprep.subr.mxu0 0.0
        %3048 = vmatpush1.xpose.msra.mxu0 0.0
        %3049 = vmatprep.subr.mxu0 0.0
        %3050 = vmatpush1.xpose.msra.mxu0 0.0
        %3051 = vmatprep.subr.mxu0 0.0
        %3052 = vmatpush1.xpose.msra.mxu0 0.0
        %3053 = vmatprep.subr.mxu0 0.0
        %3054 = vmatpush1.xpose.msra.mxu0 0.0
        %3055 = vmatprep.subr.mxu0 0.0
        %3056 = vmatpush1.xpose.msra.mxu0 0.0
        %3057 = vmatprep.subr.mxu0 0.0
        %3058 = vmatpush1.xpose.msra.mxu0 0.0
        %3059 = vmatprep.subr.mxu0 0.0
        %3060 = vmatpush1.xpose.msra.mxu0 0.0
        %3061 = vmatprep.subr.mxu0 0.0
        %3062 = vmatpush1.xpose.msra.mxu0 0.0
        %3063 = vmatprep.subr.mxu0 0.0
        %3064 = vmatpush1.xpose.msra.mxu0 0.0
        %3065 = vmatprep.subr.mxu0 0.0
        %3066 = vmatpush1.xpose.msra.mxu0 0.0
        %3067 = vmatprep.subr.mxu0 0.0
        %3068 = vmatpush1.xpose.msra.mxu0 0.0
        %3069 = vmatprep.subr.mxu0 0.0
        %3070 = vmatpush1.xpose.msra.mxu0 0.0
        %3071 = vmatprep.subr.mxu0 0.0
        %3072 = vmatpush1.xpose.msra.mxu0 0.0
        %3073 = vmatprep.subr.mxu0 0.0
        %3074 = vmatpush1.xpose.msra.mxu0 0.0
        %3075 = vmatprep.subr.mxu0 0.0
        %3076 = vmatpush1.xpose.msra.mxu0 0.0
        %3077 = vmatprep.subr.mxu0 0.0
        %3078 = vmatpush1.xpose.msra.mxu0 0.0
        %3079 = vmatprep.subr.mxu0 0.0
        %3080 = vmatpush1.xpose.msra.mxu0 0.0
        %3081 = vmatprep.subr.mxu0 0.0
        %3082 = vmatpush1.xpose.msra.mxu0 0.0
        %3083 = vmatprep.subr.mxu0 0.0
        %3084 = vmatpush1.xpose.msra.mxu0 0.0
        %3085 = vmatprep.subr.mxu0 0.0
        %3086 = vmatpush1.xpose.msra.mxu0 0.0
        %3087 = vmatprep.subr.mxu0 0.0
        %3088 = vmatpush1.xpose.msra.mxu0 0.0
        %3089 = vmatprep.mubr.f32.mxu0 0.0
        %3090 = vmatmul.mubr.f32.gmra.mrb[0].mxu0 %v3020
        %v3091 = vpop.f32.mrb[0].mxu0
        %v3092 = vadd.f32 0.0, %v3091
        %v3093 = vpop.f32.mrb[0].mxu0
        %3094 = vdwg.mxu0
        %v3096 = vsel %vm1063, %v2838, 0
        %v3099 = vsel %vm1063, %v2925, 0
        %3101 = vmatprep.subr.mxu0 0.0
        %3102 = vmatpush1.xpose.msra.mxu0 %v3099
        %3103 = vmatprep.subr.mxu0 0.0
        %3104 = vmatpush1.xpose.msra.mxu0 0.0
        %3105 = vmatprep.subr.mxu0 0.0
        %3106 = vmatpush1.xpose.msra.mxu0 0.0
        %3107 = vmatprep.subr.mxu0 0.0
        %3108 = vmatpush1.xpose.msra.mxu0 0.0
        %3109 = vmatprep.subr.mxu0 0.0
        %3110 = vmatpush1.xpose.msra.mxu0 0.0
        %3111 = vmatprep.subr.mxu0 0.0
        %3112 = vmatpush1.xpose.msra.mxu0 0.0
        %3113 = vmatprep.subr.mxu0 0.0
        %3114 = vmatpush1.xpose.msra.mxu0 0.0
        %3115 = vmatprep.subr.mxu0 0.0
        %3116 = vmatpush1.xpose.msra.mxu0 0.0
        %3117 = vmatprep.subr.mxu0 0.0
        %3118 = vmatpush1.xpose.msra.mxu0 0.0
        %3119 = vmatprep.subr.mxu0 0.0
        %3120 = vmatpush1.xpose.msra.mxu0 0.0
        %3121 = vmatprep.subr.mxu0 0.0
        %3122 = vmatpush1.xpose.msra.mxu0 0.0
        %3123 = vmatprep.subr.mxu0 0.0
        %3124 = vmatpush1.xpose.msra.mxu0 0.0
        %3125 = vmatprep.subr.mxu0 0.0
        %3126 = vmatpush1.xpose.msra.mxu0 0.0
        %3127 = vmatprep.subr.mxu0 0.0
        %3128 = vmatpush1.xpose.msra.mxu0 0.0
        %3129 = vmatprep.subr.mxu0 0.0
        %3130 = vmatpush1.xpose.msra.mxu0 0.0
        %3131 = vmatprep.subr.mxu0 0.0
        %3132 = vmatpush1.xpose.msra.mxu0 0.0
        %3133 = vmatprep.subr.mxu0 0.0
        %3134 = vmatpush1.xpose.msra.mxu0 0.0
        %3135 = vmatprep.subr.mxu0 0.0
        %3136 = vmatpush1.xpose.msra.mxu0 0.0
        %3137 = vmatprep.subr.mxu0 0.0
        %3138 = vmatpush1.xpose.msra.mxu0 0.0
        %3139 = vmatprep.subr.mxu0 0.0
        %3140 = vmatpush1.xpose.msra.mxu0 0.0
        %3141 = vmatprep.subr.mxu0 0.0
        %3142 = vmatpush1.xpose.msra.mxu0 0.0
        %3143 = vmatprep.subr.mxu0 0.0
        %3144 = vmatpush1.xpose.msra.mxu0 0.0
        %3145 = vmatprep.subr.mxu0 0.0
        %3146 = vmatpush1.xpose.msra.mxu0 0.0
        %3147 = vmatprep.subr.mxu0 0.0
        %3148 = vmatpush1.xpose.msra.mxu0 0.0
        %3149 = vmatprep.subr.mxu0 0.0
        %3150 = vmatpush1.xpose.msra.mxu0 0.0
        %3151 = vmatprep.subr.mxu0 0.0
        %3152 = vmatpush1.xpose.msra.mxu0 0.0
        %3153 = vmatprep.subr.mxu0 0.0
        %3154 = vmatpush1.xpose.msra.mxu0 0.0
        %3155 = vmatprep.subr.mxu0 0.0
        %3156 = vmatpush1.xpose.msra.mxu0 0.0
        %3157 = vmatprep.subr.mxu0 0.0
        %3158 = vmatpush1.xpose.msra.mxu0 0.0
        %3159 = vmatprep.subr.mxu0 0.0
        %3160 = vmatpush1.xpose.msra.mxu0 0.0
        %3161 = vmatprep.subr.mxu0 0.0
        %3162 = vmatpush1.xpose.msra.mxu0 0.0
        %3163 = vmatprep.subr.mxu0 0.0
        %3164 = vmatpush1.xpose.msra.mxu0 0.0
        %3165 = vmatprep.mubr.f32.mxu0 0.0
        %3166 = vmatmul.mubr.f32.gmra.mrb[0].mxu0 %v3096
        %v3167 = vpop.f32.mrb[0].mxu0
        %v3168 = vadd.f32 0.0, %v3167
        %v3169 = vpop.f32.mrb[0].mxu0
        %3170 = vdwg.mxu0
        %v3171 = vsel %vm1063, %v3092, -inf
        %3172 = vmax.xlane.f32.xlu0 %v3171
        %v3173 = vpop.xlane.xlu0 %3172
        %v3174 = vsel %vm1063, %v3168, -inf
        %3175 = vmax.xlane.f32.xlu0 %v3174
        %v3176 = vpop.xlane.xlu0 %3175
        %v3177 = vsub.f32 %v3092, %v3173
        %v3178 = vsub.f32 %v3168, %v3176
        %v3179 = vmul.f32 %v3177, 1.442695
        %v3180 = vpow.pop %v3179
        %v3181 = vmul.f32 %v3178, 1.442695
        %v3182 = vpow.pop %v3181
        %v3183 = vsel %vm1063, %v3180, 0.0
        %3184 = vadd.xlane.f32.xlu0 %v3183
        %v3185 = vpop.xlane.xlu0 %3184
        %v3186 = vsel %vm1063, %v3182, 0.0
        %3187 = vadd.xlane.f32.xlu0 %v3186
        %v3188 = vpop.xlane.xlu0 %3187
        %v3189 = vrcp.pop %v3185
        %v3190 = vmul.f32 %v3180, %v3189
        %v3191 = vrcp.pop %v3188
        %v3192 = vmul.f32 %v3182, %v3191
        %v3194 = vsel %vm1063, %v3190, 0
        %3196 = vmatprep.subr.mxu0 0.0
        %3197 = vmatpush1.msra.mxu0 %v3007
        %3198 = vmatprep.subr.mxu0 0.0
        %3199 = vmatpush1.msra.mxu0 0.0
        %3200 = vmatprep.subr.mxu0 0.0
        %3201 = vmatpush1.msra.mxu0 0.0
        %3202 = vmatprep.subr.mxu0 0.0
        %3203 = vmatpush1.msra.mxu0 0.0
        %3204 = vmatprep.subr.mxu0 0.0
        %3205 = vmatpush1.msra.mxu0 0.0
        %3206 = vmatprep.subr.mxu0 0.0
        %3207 = vmatpush1.msra.mxu0 0.0
        %3208 = vmatprep.subr.mxu0 0.0
        %3209 = vmatpush1.msra.mxu0 0.0
        %3210 = vmatprep.subr.mxu0 0.0
        %3211 = vmatpush1.msra.mxu0 0.0
        %3212 = vmatprep.subr.mxu0 0.0
        %3213 = vmatpush1.msra.mxu0 0.0
        %3214 = vmatprep.subr.mxu0 0.0
        %3215 = vmatpush1.msra.mxu0 0.0
        %3216 = vmatprep.subr.mxu0 0.0
        %3217 = vmatpush1.msra.mxu0 0.0
        %3218 = vmatprep.subr.mxu0 0.0
        %3219 = vmatpush1.msra.mxu0 0.0
        %3220 = vmatprep.subr.mxu0 0.0
        %3221 = vmatpush1.msra.mxu0 0.0
        %3222 = vmatprep.subr.mxu0 0.0
        %3223 = vmatpush1.msra.mxu0 0.0
        %3224 = vmatprep.subr.mxu0 0.0
        %3225 = vmatpush1.msra.mxu0 0.0
        %3226 = vmatprep.subr.mxu0 0.0
        %3227 = vmatpush1.msra.mxu0 0.0
        %3228 = vmatprep.subr.mxu0 0.0
        %3229 = vmatpush1.msra.mxu0 0.0
        %3230 = vmatprep.subr.mxu0 0.0
        %3231 = vmatpush1.msra.mxu0 0.0
        %3232 = vmatprep.subr.mxu0 0.0
        %3233 = vmatpush1.msra.mxu0 0.0
        %3234 = vmatprep.subr.mxu0 0.0
        %3235 = vmatpush1.msra.mxu0 0.0
        %3236 = vmatprep.subr.mxu0 0.0
        %3237 = vmatpush1.msra.mxu0 0.0
        %3238 = vmatprep.subr.mxu0 0.0
        %3239 = vmatpush1.msra.mxu0 0.0
        %3240 = vmatprep.subr.mxu0 0.0
        %3241 = vmatpush1.msra.mxu0 0.0
        %3242 = vmatprep.subr.mxu0 0.0
        %3243 = vmatpush1.msra.mxu0 0.0
        %3244 = vmatprep.subr.mxu0 0.0
        %3245 = vmatpush1.msra.mxu0 0.0
        %3246 = vmatprep.subr.mxu0 0.0
        %3247 = vmatpush1.msra.mxu0 0.0
        %3248 = vmatprep.subr.mxu0 0.0
        %3249 = vmatpush1.msra.mxu0 0.0
        %3250 = vmatprep.subr.mxu0 0.0
        %3251 = vmatpush1.msra.mxu0 0.0
        %3252 = vmatprep.subr.mxu0 0.0
        %3253 = vmatpush1.msra.mxu0 0.0
        %3254 = vmatprep.subr.mxu0 0.0
        %3255 = vmatpush1.msra.mxu0 0.0
        %3256 = vmatprep.subr.mxu0 0.0
        %3257 = vmatpush1.msra.mxu0 0.0
        %3258 = vmatprep.subr.mxu0 0.0
        %3259 = vmatpush1.msra.mxu0 0.0
        %3260 = vmatprep.mubr.f32.mxu0 0.0
        %3261 = vmatmul.mubr.f32.gmra.mrb[0].mxu0 %v3194
        %v3262 = vpop.f32.mrb[0].mxu0
        %v3263 = vadd.f32 0.0, %v3262
        %v3264 = vpop.f32.mrb[0].mxu0
        %3265 = vdwg.mxu0
        %v3267 = vsel %vm1063, %v3192, 0
        %3269 = vmatprep.subr.mxu0 0.0
        %3270 = vmatpush1.msra.mxu0 %v3012
        %3271 = vmatprep.subr.mxu0 0.0
        %3272 = vmatpush1.msra.mxu0 0.0
        %3273 = vmatprep.subr.mxu0 0.0
        %3274 = vmatpush1.msra.mxu0 0.0
        %3275 = vmatprep.subr.mxu0 0.0
        %3276 = vmatpush1.msra.mxu0 0.0
        %3277 = vmatprep.subr.mxu0 0.0
        %3278 = vmatpush1.msra.mxu0 0.0
        %3279 = vmatprep.subr.mxu0 0.0
        %3280 = vmatpush1.msra.mxu0 0.0
        %3281 = vmatprep.subr.mxu0 0.0
        %3282 = vmatpush1.msra.mxu0 0.0
        %3283 = vmatprep.subr.mxu0 0.0
        %3284 = vmatpush1.msra.mxu0 0.0
        %3285 = vmatprep.subr.mxu0 0.0
        %3286 = vmatpush1.msra.mxu0 0.0
        %3287 = vmatprep.subr.mxu0 0.0
        %3288 = vmatpush1.msra.mxu0 0.0
        %3289 = vmatprep.subr.mxu0 0.0
        %3290 = vmatpush1.msra.mxu0 0.0
        %3291 = vmatprep.subr.mxu0 0.0
        %3292 = vmatpush1.msra.mxu0 0.0
        %3293 = vmatprep.subr.mxu0 0.0
        %3294 = vmatpush1.msra.mxu0 0.0
        %3295 = vmatprep.subr.mxu0 0.0
        %3296 = vmatpush1.msra.mxu0 0.0
        %3297 = vmatprep.subr.mxu0 0.0
        %3298 = vmatpush1.msra.mxu0 0.0
        %3299 = vmatprep.subr.mxu0 0.0
        %3300 = vmatpush1.msra.mxu0 0.0
        %3301 = vmatprep.subr.mxu0 0.0
        %3302 = vmatpush1.msra.mxu0 0.0
        %3303 = vmatprep.subr.mxu0 0.0
        %3304 = vmatpush1.msra.mxu0 0.0
        %3305 = vmatprep.subr.mxu0 0.0
        %3306 = vmatpush1.msra.mxu0 0.0
        %3307 = vmatprep.subr.mxu0 0.0
        %3308 = vmatpush1.msra.mxu0 0.0
        %3309 = vmatprep.subr.mxu0 0.0
        %3310 = vmatpush1.msra.mxu0 0.0
        %3311 = vmatprep.subr.mxu0 0.0
        %3312 = vmatpush1.msra.mxu0 0.0
        %3313 = vmatprep.subr.mxu0 0.0
        %3314 = vmatpush1.msra.mxu0 0.0
        %3315 = vmatprep.subr.mxu0 0.0
        %3316 = vmatpush1.msra.mxu0 0.0
        %3317 = vmatprep.subr.mxu0 0.0
        %3318 = vmatpush1.msra.mxu0 0.0
        %3319 = vmatprep.subr.mxu0 0.0
        %3320 = vmatpush1.msra.mxu0 0.0
        %3321 = vmatprep.subr.mxu0 0.0
        %3322 = vmatpush1.msra.mxu0 0.0
        %3323 = vmatprep.subr.mxu0 0.0
        %3324 = vmatpush1.msra.mxu0 0.0
        %3325 = vmatprep.subr.mxu0 0.0
        %3326 = vmatpush1.msra.mxu0 0.0
        %3327 = vmatprep.subr.mxu0 0.0
        %3328 = vmatpush1.msra.mxu0 0.0
        %3329 = vmatprep.subr.mxu0 0.0
        %3330 = vmatpush1.msra.mxu0 0.0
        %3331 = vmatprep.subr.mxu0 0.0
        %3332 = vmatpush1.msra.mxu0 0.0
        %3333 = vmatprep.mubr.f32.mxu0 0.0
        %3334 = vmatmul.mubr.f32.gmra.mrb[0].mxu0 %v3267
        %v3335 = vpop.f32.mrb[0].mxu0
        %v3336 = vadd.f32 0.0, %v3335
        %v3337 = vpop.f32.mrb[0].mxu0
        %3338 = vdwg.mxu0
        %v3340 = vsel %vm1063, %v3263, 0
        %v3343 = vsel %vm1063, %v3336, 0
        %3345 = vmatprep.subr.mxu0 0.0
        %3346 = vmatpush1.msra.mxu0 %v3015
        %3347 = vmatprep.subr.mxu0 0.0
        %3348 = vmatpush1.msra.mxu0 0.0
        %3349 = vmatprep.subr.mxu0 0.0
        %3350 = vmatpush1.msra.mxu0 0.0
        %3351 = vmatprep.subr.mxu0 0.0
        %3352 = vmatpush1.msra.mxu0 0.0
        %3353 = vmatprep.subr.mxu0 0.0
        %3354 = vmatpush1.msra.mxu0 0.0
        %3355 = vmatprep.subr.mxu0 0.0
        %3356 = vmatpush1.msra.mxu0 0.0
        %3357 = vmatprep.subr.mxu0 0.0
        %3358 = vmatpush1.msra.mxu0 0.0
        %3359 = vmatprep.subr.mxu0 0.0
        %3360 = vmatpush1.msra.mxu0 0.0
        %3361 = vmatprep.subr.mxu0 0.0
        %3362 = vmatpush1.msra.mxu0 0.0
        %3363 = vmatprep.subr.mxu0 0.0
        %3364 = vmatpush1.msra.mxu0 0.0
        %3365 = vmatprep.subr.mxu0 0.0
        %3366 = vmatpush1.msra.mxu0 0.0
        %3367 = vmatprep.subr.mxu0 0.0
        %3368 = vmatpush1.msra.mxu0 0.0
        %3369 = vmatprep.subr.mxu0 0.0
        %3370 = vmatpush1.msra.mxu0 0.0
        %3371 = vmatprep.subr.mxu0 0.0
        %3372 = vmatpush1.msra.mxu0 0.0
        %3373 = vmatprep.subr.mxu0 0.0
        %3374 = vmatpush1.msra.mxu0 0.0
        %3375 = vmatprep.subr.mxu0 0.0
        %3376 = vmatpush1.msra.mxu0 0.0
        %3377 = vmatprep.subr.mxu0 0.0
        %3378 = vmatpush1.msra.mxu0 0.0
        %3379 = vmatprep.subr.mxu0 0.0
        %3380 = vmatpush1.msra.mxu0 0.0
        %3381 = vmatprep.subr.mxu0 0.0
        %3382 = vmatpush1.msra.mxu0 0.0
        %3383 = vmatprep.subr.mxu0 0.0
        %3384 = vmatpush1.msra.mxu0 0.0
        %3385 = vmatprep.subr.mxu0 0.0
        %3386 = vmatpush1.msra.mxu0 0.0
        %3387 = vmatprep.subr.mxu0 0.0
        %3388 = vmatpush1.msra.mxu0 0.0
        %3389 = vmatprep.subr.mxu0 0.0
        %3390 = vmatpush1.msra.mxu0 0.0
        %3391 = vmatprep.subr.mxu0 0.0
        %3392 = vmatpush1.msra.mxu0 0.0
        %3393 = vmatprep.subr.mxu0 0.0
        %3394 = vmatpush1.msra.mxu0 0.0
        %3395 = vmatprep.subr.mxu0 0.0
        %3396 = vmatpush1.msra.mxu0 0.0
        %3397 = vmatprep.subr.mxu0 0.0
        %3398 = vmatpush1.msra.mxu0 0.0
        %3399 = vmatprep.subr.mxu0 0.0
        %3400 = vmatpush1.msra.mxu0 0.0
        %3401 = vmatprep.subr.mxu0 0.0
        %3402 = vmatpush1.msra.mxu0 0.0
        %3403 = vmatprep.subr.mxu0 0.0
        %3404 = vmatpush1.msra.mxu0 0.0
        %3405 = vmatprep.subr.mxu0 0.0
        %3406 = vmatpush1.msra.mxu0 0.0
        %3407 = vmatprep.subr.mxu0 0.0
        %3408 = vmatpush1.msra.mxu0 0.0
        %3409 = vmatprep.mubr.f32.mxu0 0.0
        %3410 = vmatmul.mubr.f32.gmra.mrb[0].mxu0 %v3340
        %v3411 = vpop.f32.mrb[0].mxu0
        %v3412 = vadd.f32 0.0, %v3411
        %v3413 = vpop.f32.mrb[0].mxu0
        %3414 = vmatprep.mubr.f32.mxu0 0.0
        %3415 = vmatmul.mubr.f32.gmra.mrb[0].mxu0 %v3343
        %v3416 = vpop.f32.mrb[0].mxu0
        %v3417 = vadd.f32 0.0, %v3416
        %v3418 = vpop.f32.mrb[0].mxu0
        %3419 = vdwg.mxu0
        %v3420 = vadd.f32 %v2754, %v3412
        %v3421 = vadd.f32 %v2755, %v3417
        %3422 = vrot.lane.b32.xlu0 %v2833, 120
        %v3423 = vpop.permute.xlu0 %3422
        %3424 = vrot.lane.b32.xlu0 %v2920, 120
        %v3425 = vpop.permute.xlu0 %3424
        %v3426 = vsel %vm1063, %v3423, 0
        %v3428 = vsel %vm1063, %v3425, 0
        %3430 = vmatprep.subr.mxu0 0.0
        %3431 = vmatpush1.xpose.msra.mxu0 %v3428
        %3432 = vmatprep.subr.mxu0 0.0
        %3433 = vmatpush1.xpose.msra.mxu0 0.0
        %3434 = vmatprep.subr.mxu0 0.0
        %3435 = vmatpush1.xpose.msra.mxu0 0.0
        %3436 = vmatprep.subr.mxu0 0.0
        %3437 = vmatpush1.xpose.msra.mxu0 0.0
        %3438 = vmatprep.subr.mxu0 0.0
        %3439 = vmatpush1.xpose.msra.mxu0 0.0
        %3440 = vmatprep.subr.mxu0 0.0
        %3441 = vmatpush1.xpose.msra.mxu0 0.0
        %3442 = vmatprep.subr.mxu0 0.0
        %3443 = vmatpush1.xpose.msra.mxu0 0.0
        %3444 = vmatprep.subr.mxu0 0.0
        %3445 = vmatpush1.xpose.msra.mxu0 0.0
        %3446 = vmatprep.subr.mxu0 0.0
        %3447 = vmatpush1.xpose.msra.mxu0 0.0
        %3448 = vmatprep.subr.mxu0 0.0
        %3449 = vmatpush1.xpose.msra.mxu0 0.0
        %3450 = vmatprep.subr.mxu0 0.0
        %3451 = vmatpush1.xpose.msra.mxu0 0.0
        %3452 = vmatprep.subr.mxu0 0.0
        %3453 = vmatpush1.xpose.msra.mxu0 0.0
        %3454 = vmatprep.subr.mxu0 0.0
        %3455 = vmatpush1.xpose.msra.mxu0 0.0
        %3456 = vmatprep.subr.mxu0 0.0
        %3457 = vmatpush1.xpose.msra.mxu0 0.0
        %3458 = vmatprep.subr.mxu0 0.0
        %3459 = vmatpush1.xpose.msra.mxu0 0.0
        %3460 = vmatprep.subr.mxu0 0.0
        %3461 = vmatpush1.xpose.msra.mxu0 0.0
        %3462 = vmatprep.subr.mxu0 0.0
        %3463 = vmatpush1.xpose.msra.mxu0 0.0
        %3464 = vmatprep.subr.mxu0 0.0
        %3465 = vmatpush1.xpose.msra.mxu0 0.0
        %3466 = vmatprep.subr.mxu0 0.0
        %3467 = vmatpush1.xpose.msra.mxu0 0.0
        %3468 = vmatprep.subr.mxu0 0.0
        %3469 = vmatpush1.xpose.msra.mxu0 0.0
        %3470 = vmatprep.subr.mxu0 0.0
        %3471 = vmatpush1.xpose.msra.mxu0 0.0
        %3472 = vmatprep.subr.mxu0 0.0
        %3473 = vmatpush1.xpose.msra.mxu0 0.0
        %3474 = vmatprep.subr.mxu0 0.0
        %3475 = vmatpush1.xpose.msra.mxu0 0.0
        %3476 = vmatprep.subr.mxu0 0.0
        %3477 = vmatpush1.xpose.msra.mxu0 0.0
        %3478 = vmatprep.subr.mxu0 0.0
        %3479 = vmatpush1.xpose.msra.mxu0 0.0
        %3480 = vmatprep.subr.mxu0 0.0
        %3481 = vmatpush1.xpose.msra.mxu0 0.0
        %3482 = vmatprep.subr.mxu0 0.0
        %3483 = vmatpush1.xpose.msra.mxu0 0.0
        %3484 = vmatprep.subr.mxu0 0.0
        %3485 = vmatpush1.xpose.msra.mxu0 0.0
        %3486 = vmatprep.subr.mxu0 0.0
        %3487 = vmatpush1.xpose.msra.mxu0 0.0
        %3488 = vmatprep.subr.mxu0 0.0
        %3489 = vmatpush1.xpose.msra.mxu0 0.0
        %3490 = vmatprep.subr.mxu0 0.0
        %3491 = vmatpush1.xpose.msra.mxu0 0.0
        %3492 = vmatprep.subr.mxu0 0.0
        %3493 = vmatpush1.xpose.msra.mxu0 0.0
        %3494 = vmatprep.mubr.f32.mxu0 0.0
        %3495 = vmatmul.mubr.f32.gmra.mrb[0].mxu0 %v3426
        %v3496 = vpop.f32.mrb[0].mxu0
        %v3497 = vadd.f32 0.0, %v3496
        %v3498 = vpop.f32.mrb[0].mxu0
        %3499 = vdwg.mxu0
        %3500 = vrot.lane.b32.xlu0 %v2838, 120
        %v3501 = vpop.permute.xlu0 %3500
        %3502 = vrot.lane.b32.xlu0 %v2925, 120
        %v3503 = vpop.permute.xlu0 %3502
        %v3504 = vsel %vm1063, %v3501, 0
        %v3506 = vsel %vm1063, %v3503, 0
        %3508 = vmatprep.subr.mxu0 0.0
        %3509 = vmatpush1.xpose.msra.mxu0 %v3506
        %3510 = vmatprep.subr.mxu0 0.0
        %3511 = vmatpush1.xpose.msra.mxu0 0.0
        %3512 = vmatprep.subr.mxu0 0.0
        %3513 = vmatpush1.xpose.msra.mxu0 0.0
        %3514 = vmatprep.subr.mxu0 0.0
        %3515 = vmatpush1.xpose.msra.mxu0 0.0
        %3516 = vmatprep.subr.mxu0 0.0
        %3517 = vmatpush1.xpose.msra.mxu0 0.0
        %3518 = vmatprep.subr.mxu0 0.0
        %3519 = vmatpush1.xpose.msra.mxu0 0.0
        %3520 = vmatprep.subr.mxu0 0.0
        %3521 = vmatpush1.xpose.msra.mxu0 0.0
        %3522 = vmatprep.subr.mxu0 0.0
        %3523 = vmatpush1.xpose.msra.mxu0 0.0
        %3524 = vmatprep.subr.mxu0 0.0
        %3525 = vmatpush1.xpose.msra.mxu0 0.0
        %3526 = vmatprep.subr.mxu0 0.0
        %3527 = vmatpush1.xpose.msra.mxu0 0.0
        %3528 = vmatprep.subr.mxu0 0.0
        %3529 = vmatpush1.xpose.msra.mxu0 0.0
        %3530 = vmatprep.subr.mxu0 0.0
        %3531 = vmatpush1.xpose.msra.mxu0 0.0
        %3532 = vmatprep.subr.mxu0 0.0
        %3533 = vmatpush1.xpose.msra.mxu0 0.0
        %3534 = vmatprep.subr.mxu0 0.0
        %3535 = vmatpush1.xpose.msra.mxu0 0.0
        %3536 = vmatprep.subr.mxu0 0.0
        %3537 = vmatpush1.xpose.msra.mxu0 0.0
        %3538 = vmatprep.subr.mxu0 0.0
        %3539 = vmatpush1.xpose.msra.mxu0 0.0
        %3540 = vmatprep.subr.mxu0 0.0
        %3541 = vmatpush1.xpose.msra.mxu0 0.0
        %3542 = vmatprep.subr.mxu0 0.0
        %3543 = vmatpush1.xpose.msra.mxu0 0.0
        %3544 = vmatprep.subr.mxu0 0.0
        %3545 = vmatpush1.xpose.msra.mxu0 0.0
        %3546 = vmatprep.subr.mxu0 0.0
        %3547 = vmatpush1.xpose.msra.mxu0 0.0
        %3548 = vmatprep.subr.mxu0 0.0
        %3549 = vmatpush1.xpose.msra.mxu0 0.0
        %3550 = vmatprep.subr.mxu0 0.0
        %3551 = vmatpush1.xpose.msra.mxu0 0.0
        %3552 = vmatprep.subr.mxu0 0.0
        %3553 = vmatpush1.xpose.msra.mxu0 0.0
        %3554 = vmatprep.subr.mxu0 0.0
        %3555 = vmatpush1.xpose.msra.mxu0 0.0
        %3556 = vmatprep.subr.mxu0 0.0
        %3557 = vmatpush1.xpose.msra.mxu0 0.0
        %3558 = vmatprep.subr.mxu0 0.0
        %3559 = vmatpush1.xpose.msra.mxu0 0.0
        %3560 = vmatprep.subr.mxu0 0.0
        %3561 = vmatpush1.xpose.msra.mxu0 0.0
        %3562 = vmatprep.subr.mxu0 0.0
        %3563 = vmatpush1.xpose.msra.mxu0 0.0
        %3564 = vmatprep.subr.mxu0 0.0
        %3565 = vmatpush1.xpose.msra.mxu0 0.0
        %3566 = vmatprep.subr.mxu0 0.0
        %3567 = vmatpush1.xpose.msra.mxu0 0.0
        %3568 = vmatprep.subr.mxu0 0.0
        %3569 = vmatpush1.xpose.msra.mxu0 0.0
        %3570 = vmatprep.subr.mxu0 0.0
        %3571 = vmatpush1.xpose.msra.mxu0 0.0
        %3572 = vmatprep.mubr.f32.mxu0 0.0
        %3573 = vmatmul.mubr.f32.gmra.mrb[0].mxu0 %v3504
        %v3574 = vpop.f32.mrb[0].mxu0
        %v3575 = vadd.f32 0.0, %v3574
        %v3576 = vpop.f32.mrb[0].mxu0
        %3577 = vdwg.mxu0
        %v3578 = vsel %vm1063, %v3497, -inf
        %3579 = vmax.xlane.f32.xlu0 %v3578
        %v3580 = vpop.xlane.xlu0 %3579
        %v3581 = vsel %vm1063, %v3575, -inf
        %3582 = vmax.xlane.f32.xlu0 %v3581
        %v3583 = vpop.xlane.xlu0 %3582
        %v3584 = vsub.f32 %v3497, %v3580
        %v3585 = vsub.f32 %v3575, %v3583
        %v3586 = vmul.f32 %v3584, 1.442695
        %v3587 = vpow.pop %v3586
        %v3588 = vmul.f32 %v3585, 1.442695
        %v3589 = vpow.pop %v3588
        %v3590 = vsel %vm1063, %v3587, 0.0
        %3591 = vadd.xlane.f32.xlu0 %v3590
        %v3592 = vpop.xlane.xlu0 %3591
        %v3593 = vsel %vm1063, %v3589, 0.0
        %3594 = vadd.xlane.f32.xlu0 %v3593
        %v3595 = vpop.xlane.xlu0 %3594
        %v3596 = vrcp.pop %v3592
        %v3597 = vmul.f32 %v3587, %v3596
        %v3598 = vrcp.pop %v3595
        %v3599 = vmul.f32 %v3589, %v3598
        %3601 = vrot.lane.b32.xlu0 %v3007, 120
        %v3602 = vpop.permute.xlu0 %3601
        %v3605 = vsel %vm1063, %v3597, 0
        %3607 = vmatprep.subr.mxu0 0.0
        %3608 = vmatpush1.msra.mxu0 %v3602
        %3609 = vmatprep.subr.mxu0 0.0
        %3610 = vmatpush1.msra.mxu0 0.0
        %3611 = vmatprep.subr.mxu0 0.0
        %3612 = vmatpush1.msra.mxu0 0.0
        %3613 = vmatprep.subr.mxu0 0.0
        %3614 = vmatpush1.msra.mxu0 0.0
        %3615 = vmatprep.subr.mxu0 0.0
        %3616 = vmatpush1.msra.mxu0 0.0
        %3617 = vmatprep.subr.mxu0 0.0
        %3618 = vmatpush1.msra.mxu0 0.0
        %3619 = vmatprep.subr.mxu0 0.0
        %3620 = vmatpush1.msra.mxu0 0.0
        %3621 = vmatprep.subr.mxu0 0.0
        %3622 = vmatpush1.msra.mxu0 0.0
        %3623 = vmatprep.subr.mxu0 0.0
        %3624 = vmatpush1.msra.mxu0 0.0
        %3625 = vmatprep.subr.mxu0 0.0
        %3626 = vmatpush1.msra.mxu0 0.0
        %3627 = vmatprep.subr.mxu0 0.0
        %3628 = vmatpush1.msra.mxu0 0.0
        %3629 = vmatprep.subr.mxu0 0.0
        %3630 = vmatpush1.msra.mxu0 0.0
        %3631 = vmatprep.subr.mxu0 0.0
        %3632 = vmatpush1.msra.mxu0 0.0
        %3633 = vmatprep.subr.mxu0 0.0
        %3634 = vmatpush1.msra.mxu0 0.0
        %3635 = vmatprep.subr.mxu0 0.0
        %3636 = vmatpush1.msra.mxu0 0.0
        %3637 = vmatprep.subr.mxu0 0.0
        %3638 = vmatpush1.msra.mxu0 0.0
        %3639 = vmatprep.subr.mxu0 0.0
        %3640 = vmatpush1.msra.mxu0 0.0
        %3641 = vmatprep.subr.mxu0 0.0
        %3642 = vmatpush1.msra.mxu0 0.0
        %3643 = vmatprep.subr.mxu0 0.0
        %3644 = vmatpush1.msra.mxu0 0.0
        %3645 = vmatprep.subr.mxu0 0.0
        %3646 = vmatpush1.msra.mxu0 0.0
        %3647 = vmatprep.subr.mxu0 0.0
        %3648 = vmatpush1.msra.mxu0 0.0
        %3649 = vmatprep.subr.mxu0 0.0
        %3650 = vmatpush1.msra.mxu0 0.0
        %3651 = vmatprep.subr.mxu0 0.0
        %3652 = vmatpush1.msra.mxu0 0.0
        %3653 = vmatprep.subr.mxu0 0.0
        %3654 = vmatpush1.msra.mxu0 0.0
        %3655 = vmatprep.subr.mxu0 0.0
        %3656 = vmatpush1.msra.mxu0 0.0
        %3657 = vmatprep.subr.mxu0 0.0
        %3658 = vmatpush1.msra.mxu0 0.0
        %3659 = vmatprep.subr.mxu0 0.0
        %3660 = vmatpush1.msra.mxu0 0.0
        %3661 = vmatprep.subr.mxu0 0.0
        %3662 = vmatpush1.msra.mxu0 0.0
        %3663 = vmatprep.subr.mxu0 0.0
        %3664 = vmatpush1.msra.mxu0 0.0
        %3665 = vmatprep.subr.mxu0 0.0
        %3666 = vmatpush1.msra.mxu0 0.0
        %3667 = vmatprep.subr.mxu0 0.0
        %3668 = vmatpush1.msra.mxu0 0.0
        %3669 = vmatprep.subr.mxu0 0.0
        %3670 = vmatpush1.msra.mxu0 0.0
        %3671 = vmatprep.mubr.f32.mxu0 0.0
        %3672 = vmatmul.mubr.f32.gmra.mrb[0].mxu0 %v3605
        %v3673 = vpop.f32.mrb[0].mxu0
        %v3674 = vadd.f32 0.0, %v3673
        %v3675 = vpop.f32.mrb[0].mxu0
        %3676 = vdwg.mxu0
        %3678 = vrot.lane.b32.xlu0 %v3012, 120
        %v3679 = vpop.permute.xlu0 %3678
        %v3682 = vsel %vm1063, %v3599, 0
        %3684 = vmatprep.subr.mxu0 0.0
        %3685 = vmatpush1.msra.mxu0 %v3679
        %3686 = vmatprep.subr.mxu0 0.0
        %3687 = vmatpush1.msra.mxu0 0.0
        %3688 = vmatprep.subr.mxu0 0.0
        %3689 = vmatpush1.msra.mxu0 0.0
        %3690 = vmatprep.subr.mxu0 0.0
        %3691 = vmatpush1.msra.mxu0 0.0
        %3692 = vmatprep.subr.mxu0 0.0
        %3693 = vmatpush1.msra.mxu0 0.0
        %3694 = vmatprep.subr.mxu0 0.0
        %3695 = vmatpush1.msra.mxu0 0.0
        %3696 = vmatprep.subr.mxu0 0.0
        %3697 = vmatpush1.msra.mxu0 0.0
        %3698 = vmatprep.subr.mxu0 0.0
        %3699 = vmatpush1.msra.mxu0 0.0
        %3700 = vmatprep.subr.mxu0 0.0
        %3701 = vmatpush1.msra.mxu0 0.0
        %3702 = vmatprep.subr.mxu0 0.0
        %3703 = vmatpush1.msra.mxu0 0.0
        %3704 = vmatprep.subr.mxu0 0.0
        %3705 = vmatpush1.msra.mxu0 0.0
        %3706 = vmatprep.subr.mxu0 0.0
        %3707 = vmatpush1.msra.mxu0 0.0
        %3708 = vmatprep.subr.mxu0 0.0
        %3709 = vmatpush1.msra.mxu0 0.0
        %3710 = vmatprep.subr.mxu0 0.0
        %3711 = vmatpush1.msra.mxu0 0.0
        %3712 = vmatprep.subr.mxu0 0.0
        %3713 = vmatpush1.msra.mxu0 0.0
        %3714 = vmatprep.subr.mxu0 0.0
        %3715 = vmatpush1.msra.mxu0 0.0
        %3716 = vmatprep.subr.mxu0 0.0
        %3717 = vmatpush1.msra.mxu0 0.0
        %3718 = vmatprep.subr.mxu0 0.0
        %3719 = vmatpush1.msra.mxu0 0.0
        %3720 = vmatprep.subr.mxu0 0.0
        %3721 = vmatpush1.msra.mxu0 0.0
        %3722 = vmatprep.subr.mxu0 0.0
        %3723 = vmatpush1.msra.mxu0 0.0
        %3724 = vmatprep.subr.mxu0 0.0
        %3725 = vmatpush1.msra.mxu0 0.0
        %3726 = vmatprep.subr.mxu0 0.0
        %3727 = vmatpush1.msra.mxu0 0.0
        %3728 = vmatprep.subr.mxu0 0.0
        %3729 = vmatpush1.msra.mxu0 0.0
        %3730 = vmatprep.subr.mxu0 0.0
        %3731 = vmatpush1.msra.mxu0 0.0
        %3732 = vmatprep.subr.mxu0 0.0
        %3733 = vmatpush1.msra.mxu0 0.0
        %3734 = vmatprep.subr.mxu0 0.0
        %3735 = vmatpush1.msra.mxu0 0.0
        %3736 = vmatprep.subr.mxu0 0.0
        %3737 = vmatpush1.msra.mxu0 0.0
        %3738 = vmatprep.subr.mxu0 0.0
        %3739 = vmatpush1.msra.mxu0 0.0
        %3740 = vmatprep.subr.mxu0 0.0
        %3741 = vmatpush1.msra.mxu0 0.0
        %3742 = vmatprep.subr.mxu0 0.0
        %3743 = vmatpush1.msra.mxu0 0.0
        %3744 = vmatprep.subr.mxu0 0.0
        %3745 = vmatpush1.msra.mxu0 0.0
        %3746 = vmatprep.subr.mxu0 0.0
        %3747 = vmatpush1.msra.mxu0 0.0
        %3748 = vmatprep.mubr.f32.mxu0 0.0
        %3749 = vmatmul.mubr.f32.gmra.mrb[0].mxu0 %v3682
        %v3750 = vpop.f32.mrb[0].mxu0
        %v3751 = vadd.f32 0.0, %v3750
        %v3752 = vpop.f32.mrb[0].mxu0
        %3753 = vdwg.mxu0
        %v3755 = vsel %vm1063, %v3674, 0
        %v3758 = vsel %vm1063, %v3751, 0
        %3760 = vmatprep.subr.mxu0 0.0
        %3761 = vmatpush1.msra.mxu0 %v3016
        %3762 = vmatprep.subr.mxu0 0.0
        %3763 = vmatpush1.msra.mxu0 0.0
        %3764 = vmatprep.subr.mxu0 0.0
        %3765 = vmatpush1.msra.mxu0 0.0
        %3766 = vmatprep.subr.mxu0 0.0
        %3767 = vmatpush1.msra.mxu0 0.0
        %3768 = vmatprep.subr.mxu0 0.0
        %3769 = vmatpush1.msra.mxu0 0.0
        %3770 = vmatprep.subr.mxu0 0.0
        %3771 = vmatpush1.msra.mxu0 0.0
        %3772 = vmatprep.subr.mxu0 0.0
        %3773 = vmatpush1.msra.mxu0 0.0
        %3774 = vmatprep.subr.mxu0 0.0
        %3775 = vmatpush1.msra.mxu0 0.0
        %3776 = vmatprep.subr.mxu0 0.0
        %3777 = vmatpush1.msra.mxu0 0.0
        %3778 = vmatprep.subr.mxu0 0.0
        %3779 = vmatpush1.msra.mxu0 0.0
        %3780 = vmatprep.subr.mxu0 0.0
        %3781 = vmatpush1.msra.mxu0 0.0
        %3782 = vmatprep.subr.mxu0 0.0
        %3783 = vmatpush1.msra.mxu0 0.0
        %3784 = vmatprep.subr.mxu0 0.0
        %3785 = vmatpush1.msra.mxu0 0.0
        %3786 = vmatprep.subr.mxu0 0.0
        %3787 = vmatpush1.msra.mxu0 0.0
        %3788 = vmatprep.subr.mxu0 0.0
        %3789 = vmatpush1.msra.mxu0 0.0
        %3790 = vmatprep.subr.mxu0 0.0
        %3791 = vmatpush1.msra.mxu0 0.0
        %3792 = vmatprep.subr.mxu0 0.0
        %3793 = vmatpush1.msra.mxu0 0.0
        %3794 = vmatprep.subr.mxu0 0.0
        %3795 = vmatpush1.msra.mxu0 0.0
        %3796 = vmatprep.subr.mxu0 0.0
        %3797 = vmatpush1.msra.mxu0 0.0
        %3798 = vmatprep.subr.mxu0 0.0
        %3799 = vmatpush1.msra.mxu0 0.0
        %3800 = vmatprep.subr.mxu0 0.0
        %3801 = vmatpush1.msra.mxu0 0.0
        %3802 = vmatprep.subr.mxu0 0.0
        %3803 = vmatpush1.msra.mxu0 0.0
        %3804 = vmatprep.subr.mxu0 0.0
        %3805 = vmatpush1.msra.mxu0 0.0
        %3806 = vmatprep.subr.mxu0 0.0
        %3807 = vmatpush1.msra.mxu0 0.0
        %3808 = vmatprep.subr.mxu0 0.0
        %3809 = vmatpush1.msra.mxu0 0.0
        %3810 = vmatprep.subr.mxu0 0.0
        %3811 = vmatpush1.msra.mxu0 0.0
        %3812 = vmatprep.subr.mxu0 0.0
        %3813 = vmatpush1.msra.mxu0 0.0
        %3814 = vmatprep.subr.mxu0 0.0
        %3815 = vmatpush1.msra.mxu0 0.0
        %3816 = vmatprep.subr.mxu0 0.0
        %3817 = vmatpush1.msra.mxu0 0.0
        %3818 = vmatprep.subr.mxu0 0.0
        %3819 = vmatpush1.msra.mxu0 0.0
        %3820 = vmatprep.subr.mxu0 0.0
        %3821 = vmatpush1.msra.mxu0 0.0
        %3822 = vmatprep.subr.mxu0 0.0
        %3823 = vmatpush1.msra.mxu0 0.0
        %3824 = vmatprep.mubr.f32.mxu0 0.0
        %3825 = vmatmul.mubr.f32.gmra.mrb[0].mxu0 %v3755
        %v3826 = vpop.f32.mrb[0].mxu0
        %v3827 = vadd.f32 0.0, %v3826
        %v3828 = vpop.f32.mrb[0].mxu0
        %3829 = vmatprep.mubr.f32.mxu0 0.0
        %3830 = vmatmul.mubr.f32.gmra.mrb[0].mxu0 %v3758
        %v3831 = vpop.f32.mrb[0].mxu0
        %v3832 = vadd.f32 0.0, %v3831
        %v3833 = vpop.f32.mrb[0].mxu0
        %3834 = vdwg.mxu0
        %v3835 = vadd.f32 %v3420, %v3827
        %v3836 = vadd.f32 %v3421, %v3832
        %3837 = vrot.lane.b32.xlu0 %v2833, 112
        %v3838 = vpop.permute.xlu0 %3837
        %3839 = vrot.lane.b32.xlu0 %v2920, 112
        %v3840 = vpop.permute.xlu0 %3839
        %v3841 = vsel %vm1063, %v3838, 0
        %v3843 = vsel %vm1063, %v3840, 0
        %3845 = vmatprep.subr.mxu0 0.0
        %3846 = vmatpush1.xpose.msra.mxu0 %v3843
        %3847 = vmatprep.subr.mxu0 0.0
        %3848 = vmatpush1.xpose.msra.mxu0 0.0
        %3849 = vmatprep.subr.mxu0 0.0
        %3850 = vmatpush1.xpose.msra.mxu0 0.0
        %3851 = vmatprep.subr.mxu0 0.0
        %3852 = vmatpush1.xpose.msra.mxu0 0.0
        %3853 = vmatprep.subr.mxu0 0.0
        %3854 = vmatpush1.xpose.msra.mxu0 0.0
        %3855 = vmatprep.subr.mxu0 0.0
        %3856 = vmatpush1.xpose.msra.mxu0 0.0
        %3857 = vmatprep.subr.mxu0 0.0
        %3858 = vmatpush1.xpose.msra.mxu0 0.0
        %3859 = vmatprep.subr.mxu0 0.0
        %3860 = vmatpush1.xpose.msra.mxu0 0.0
        %3861 = vmatprep.subr.mxu0 0.0
        %3862 = vmatpush1.xpose.msra.mxu0 0.0
        %3863 = vmatprep.subr.mxu0 0.0
        %3864 = vmatpush1.xpose.msra.mxu0 0.0
        %3865 = vmatprep.subr.mxu0 0.0
        %3866 = vmatpush1.xpose.msra.mxu0 0.0
        %3867 = vmatprep.subr.mxu0 0.0
        %3868 = vmatpush1.xpose.msra.mxu0 0.0
        %3869 = vmatprep.subr.mxu0 0.0
        %3870 = vmatpush1.xpose.msra.mxu0 0.0
        %3871 = vmatprep.subr.mxu0 0.0
        %3872 = vmatpush1.xpose.msra.mxu0 0.0
        %3873 = vmatprep.subr.mxu0 0.0
        %3874 = vmatpush1.xpose.msra.mxu0 0.0
        %3875 = vmatprep.subr.mxu0 0.0
        %3876 = vmatpush1.xpose.msra.mxu0 0.0
        %3877 = vmatprep.subr.mxu0 0.0
        %3878 = vmatpush1.xpose.msra.mxu0 0.0
        %3879 = vmatprep.subr.mxu0 0.0
        %3880 = vmatpush1.xpose.msra.mxu0 0.0
        %3881 = vmatprep.subr.mxu0 0.0
        %3882 = vmatpush1.xpose.msra.mxu0 0.0
        %3883 = vmatprep.subr.mxu0 0.0
        %3884 = vmatpush1.xpose.msra.mxu0 0.0
        %3885 = vmatprep.subr.mxu0 0.0
        %3886 = vmatpush1.xpose.msra.mxu0 0.0
        %3887 = vmatprep.subr.mxu0 0.0
        %3888 = vmatpush1.xpose.msra.mxu0 0.0
        %3889 = vmatprep.subr.mxu0 0.0
        %3890 = vmatpush1.xpose.msra.mxu0 0.0
        %3891 = vmatprep.subr.mxu0 0.0
        %3892 = vmatpush1.xpose.msra.mxu0 0.0
        %3893 = vmatprep.subr.mxu0 0.0
        %3894 = vmatpush1.xpose.msra.mxu0 0.0
        %3895 = vmatprep.subr.mxu0 0.0
        %3896 = vmatpush1.xpose.msra.mxu0 0.0
        %3897 = vmatprep.subr.mxu0 0.0
        %3898 = vmatpush1.xpose.msra.mxu0 0.0
        %3899 = vmatprep.subr.mxu0 0.0
        %3900 = vmatpush1.xpose.msra.mxu0 0.0
        %3901 = vmatprep.subr.mxu0 0.0
        %3902 = vmatpush1.xpose.msra.mxu0 0.0
        %3903 = vmatprep.subr.mxu0 0.0
        %3904 = vmatpush1.xpose.msra.mxu0 0.0
        %3905 = vmatprep.subr.mxu0 0.0
        %3906 = vmatpush1.xpose.msra.mxu0 0.0
        %3907 = vmatprep.subr.mxu0 0.0
        %3908 = vmatpush1.xpose.msra.mxu0 0.0
        %3909 = vmatprep.mubr.f32.mxu0 0.0
        %3910 = vmatmul.mubr.f32.gmra.mrb[0].mxu0 %v3841
        %v3911 = vpop.f32.mrb[0].mxu0
        %v3912 = vadd.f32 0.0, %v3911
        %v3913 = vpop.f32.mrb[0].mxu0
        %3914 = vdwg.mxu0
        %3915 = vrot.lane.b32.xlu0 %v2838, 112
        %v3916 = vpop.permute.xlu0 %3915
        %3917 = vrot.lane.b32.xlu0 %v2925, 112
        %v3918 = vpop.permute.xlu0 %3917
        %v3919 = vsel %vm1063, %v3916, 0
        %v3921 = vsel %vm1063, %v3918, 0
        %3923 = vmatprep.subr.mxu0 0.0
        %3924 = vmatpush1.xpose.msra.mxu0 %v3921
        %3925 = vmatprep.subr.mxu0 0.0
        %3926 = vmatpush1.xpose.msra.mxu0 0.0
        %3927 = vmatprep.subr.mxu0 0.0
        %3928 = vmatpush1.xpose.msra.mxu0 0.0
        %3929 = vmatprep.subr.mxu0 0.0
        %3930 = vmatpush1.xpose.msra.mxu0 0.0
        %3931 = vmatprep.subr.mxu0 0.0
        %3932 = vmatpush1.xpose.msra.mxu0 0.0
        %3933 = vmatprep.subr.mxu0 0.0
        %3934 = vmatpush1.xpose.msra.mxu0 0.0
        %3935 = vmatprep.subr.mxu0 0.0
        %3936 = vmatpush1.xpose.msra.mxu0 0.0
        %3937 = vmatprep.subr.mxu0 0.0
        %3938 = vmatpush1.xpose.msra.mxu0 0.0
        %3939 = vmatprep.subr.mxu0 0.0
        %3940 = vmatpush1.xpose.msra.mxu0 0.0
        %3941 = vmatprep.subr.mxu0 0.0
        %3942 = vmatpush1.xpose.msra.mxu0 0.0
        %3943 = vmatprep.subr.mxu0 0.0
        %3944 = vmatpush1.xpose.msra.mxu0 0.0
        %3945 = vmatprep.subr.mxu0 0.0
        %3946 = vmatpush1.xpose.msra.mxu0 0.0
        %3947 = vmatprep.subr.mxu0 0.0
        %3948 = vmatpush1.xpose.msra.mxu0 0.0
        %3949 = vmatprep.subr.mxu0 0.0
        %3950 = vmatpush1.xpose.msra.mxu0 0.0
        %3951 = vmatprep.subr.mxu0 0.0
        %3952 = vmatpush1.xpose.msra.mxu0 0.0
        %3953 = vmatprep.subr.mxu0 0.0
        %3954 = vmatpush1.xpose.msra.mxu0 0.0
        %3955 = vmatprep.subr.mxu0 0.0
        %3956 = vmatpush1.xpose.msra.mxu0 0.0
        %3957 = vmatprep.subr.mxu0 0.0
        %3958 = vmatpush1.xpose.msra.mxu0 0.0
        %3959 = vmatprep.subr.mxu0 0.0
        %3960 = vmatpush1.xpose.msra.mxu0 0.0
        %3961 = vmatprep.subr.mxu0 0.0
        %3962 = vmatpush1.xpose.msra.mxu0 0.0
        %3963 = vmatprep.subr.mxu0 0.0
        %3964 = vmatpush1.xpose.msra.mxu0 0.0
        %3965 = vmatprep.subr.mxu0 0.0
        %3966 = vmatpush1.xpose.msra.mxu0 0.0
        %3967 = vmatprep.subr.mxu0 0.0
        %3968 = vmatpush1.xpose.msra.mxu0 0.0
        %3969 = vmatprep.subr.mxu0 0.0
        %3970 = vmatpush1.xpose.msra.mxu0 0.0
        %3971 = vmatprep.subr.mxu0 0.0
        %3972 = vmatpush1.xpose.msra.mxu0 0.0
        %3973 = vmatprep.subr.mxu0 0.0
        %3974 = vmatpush1.xpose.msra.mxu0 0.0
        %3975 = vmatprep.subr.mxu0 0.0
        %3976 = vmatpush1.xpose.msra.mxu0 0.0
        %3977 = vmatprep.subr.mxu0 0.0
        %3978 = vmatpush1.xpose.msra.mxu0 0.0
        %3979 = vmatprep.subr.mxu0 0.0
        %3980 = vmatpush1.xpose.msra.mxu0 0.0
        %3981 = vmatprep.subr.mxu0 0.0
        %3982 = vmatpush1.xpose.msra.mxu0 0.0
        %3983 = vmatprep.subr.mxu0 0.0
        %3984 = vmatpush1.xpose.msra.mxu0 0.0
        %3985 = vmatprep.subr.mxu0 0.0
        %3986 = vmatpush1.xpose.msra.mxu0 0.0
        %3987 = vmatprep.mubr.f32.mxu0 0.0
        %3988 = vmatmul.mubr.f32.gmra.mrb[0].mxu0 %v3919
        %v3989 = vpop.f32.mrb[0].mxu0
        %v3990 = vadd.f32 0.0, %v3989
        %v3991 = vpop.f32.mrb[0].mxu0
        %3992 = vdwg.mxu0
        %v3993 = vsel %vm1063, %v3912, -inf
        %3994 = vmax.xlane.f32.xlu0 %v3993
        %v3995 = vpop.xlane.xlu0 %3994
        %v3996 = vsel %vm1063, %v3990, -inf
        %3997 = vmax.xlane.f32.xlu0 %v3996
        %v3998 = vpop.xlane.xlu0 %3997
        %v3999 = vsub.f32 %v3912, %v3995
        %v4000 = vsub.f32 %v3990, %v3998
        %v4001 = vmul.f32 %v3999, 1.442695
        %v4002 = vpow.pop %v4001
        %v4003 = vmul.f32 %v4000, 1.442695
        %v4004 = vpow.pop %v4003
        %v4005 = vsel %vm1063, %v4002, 0.0
        %4006 = vadd.xlane.f32.xlu0 %v4005
        %v4007 = vpop.xlane.xlu0 %4006
        %v4008 = vsel %vm1063, %v4004, 0.0
        %4009 = vadd.xlane.f32.xlu0 %v4008
        %v4010 = vpop.xlane.xlu0 %4009
        %v4011 = vrcp.pop %v4007
        %v4012 = vmul.f32 %v4002, %v4011
        %v4013 = vrcp.pop %v4010
        %v4014 = vmul.f32 %v4004, %v4013
        %4015 = vrot.lane.b32.xlu0 %v3007, 112
        %v4016 = vpop.permute.xlu0 %4015
        %v4019 = vsel %vm1063, %v4012, 0
        %4021 = vmatprep.subr.mxu0 0.0
        %4022 = vmatpush1.msra.mxu0 %v4016
        %4023 = vmatprep.subr.mxu0 0.0
        %4024 = vmatpush1.msra.mxu0 0.0
        %4025 = vmatprep.subr.mxu0 0.0
        %4026 = vmatpush1.msra.mxu0 0.0
        %4027 = vmatprep.subr.mxu0 0.0
        %4028 = vmatpush1.msra.mxu0 0.0
        %4029 = vmatprep.subr.mxu0 0.0
        %4030 = vmatpush1.msra.mxu0 0.0
        %4031 = vmatprep.subr.mxu0 0.0
        %4032 = vmatpush1.msra.mxu0 0.0
        %4033 = vmatprep.subr.mxu0 0.0
        %4034 = vmatpush1.msra.mxu0 0.0
        %4035 = vmatprep.subr.mxu0 0.0
        %4036 = vmatpush1.msra.mxu0 0.0
        %4037 = vmatprep.subr.mxu0 0.0
        %4038 = vmatpush1.msra.mxu0 0.0
        %4039 = vmatprep.subr.mxu0 0.0
        %4040 = vmatpush1.msra.mxu0 0.0
        %4041 = vmatprep.subr.mxu0 0.0
        %4042 = vmatpush1.msra.mxu0 0.0
        %4043 = vmatprep.subr.mxu0 0.0
        %4044 = vmatpush1.msra.mxu0 0.0
        %4045 = vmatprep.subr.mxu0 0.0
        %4046 = vmatpush1.msra.mxu0 0.0
        %4047 = vmatprep.subr.mxu0 0.0
        %4048 = vmatpush1.msra.mxu0 0.0
        %4049 = vmatprep.subr.mxu0 0.0
        %4050 = vmatpush1.msra.mxu0 0.0
        %4051 = vmatprep.subr.mxu0 0.0
        %4052 = vmatpush1.msra.mxu0 0.0
        %4053 = vmatprep.subr.mxu0 0.0
        %4054 = vmatpush1.msra.mxu0 0.0
        %4055 = vmatprep.subr.mxu0 0.0
        %4056 = vmatpush1.msra.mxu0 0.0
        %4057 = vmatprep.subr.mxu0 0.0
        %4058 = vmatpush1.msra.mxu0 0.0
        %4059 = vmatprep.subr.mxu0 0.0
        %4060 = vmatpush1.msra.mxu0 0.0
        %4061 = vmatprep.subr.mxu0 0.0
        %4062 = vmatpush1.msra.mxu0 0.0
        %4063 = vmatprep.subr.mxu0 0.0
        %4064 = vmatpush1.msra.mxu0 0.0
        %4065 = vmatprep.subr.mxu0 0.0
        %4066 = vmatpush1.msra.mxu0 0.0
        %4067 = vmatprep.subr.mxu0 0.0
        %4068 = vmatpush1.msra.mxu0 0.0
        %4069 = vmatprep.subr.mxu0 0.0
        %4070 = vmatpush1.msra.mxu0 0.0
        %4071 = vmatprep.subr.mxu0 0.0
        %4072 = vmatpush1.msra.mxu0 0.0
        %4073 = vmatprep.subr.mxu0 0.0
        %4074 = vmatpush1.msra.mxu0 0.0
        %4075 = vmatprep.subr.mxu0 0.0
        %4076 = vmatpush1.msra.mxu0 0.0
        %4077 = vmatprep.subr.mxu0 0.0
        %4078 = vmatpush1.msra.mxu0 0.0
        %4079 = vmatprep.subr.mxu0 0.0
        %4080 = vmatpush1.msra.mxu0 0.0
        %4081 = vmatprep.subr.mxu0 0.0
        %4082 = vmatpush1.msra.mxu0 0.0
        %4083 = vmatprep.subr.mxu0 0.0
        %4084 = vmatpush1.msra.mxu0 0.0
        %4085 = vmatprep.mubr.f32.mxu0 0.0
        %4086 = vmatmul.mubr.f32.gmra.mrb[0].mxu0 %v4019
        %v4087 = vpop.f32.mrb[0].mxu0
        %v4088 = vadd.f32 0.0, %v4087
        %v4089 = vpop.f32.mrb[0].mxu0
        %4090 = vdwg.mxu0
        %4091 = vrot.lane.b32.xlu0 %v3012, 112
        %v4092 = vpop.permute.xlu0 %4091
        %v4095 = vsel %vm1063, %v4014, 0
        %4097 = vmatprep.subr.mxu0 0.0
        %4098 = vmatpush1.msra.mxu0 %v4092
        %4099 = vmatprep.subr.mxu0 0.0
        %4100 = vmatpush1.msra.mxu0 0.0
        %4101 = vmatprep.subr.mxu0 0.0
        %4102 = vmatpush1.msra.mxu0 0.0
        %4103 = vmatprep.subr.mxu0 0.0
        %4104 = vmatpush1.msra.mxu0 0.0
        %4105 = vmatprep.subr.mxu0 0.0
        %4106 = vmatpush1.msra.mxu0 0.0
        %4107 = vmatprep.subr.mxu0 0.0
        %4108 = vmatpush1.msra.mxu0 0.0
        %4109 = vmatprep.subr.mxu0 0.0
        %4110 = vmatpush1.msra.mxu0 0.0
        %4111 = vmatprep.subr.mxu0 0.0
        %4112 = vmatpush1.msra.mxu0 0.0
        %4113 = vmatprep.subr.mxu0 0.0
        %4114 = vmatpush1.msra.mxu0 0.0
        %4115 = vmatprep.subr.mxu0 0.0
        %4116 = vmatpush1.msra.mxu0 0.0
        %4117 = vmatprep.subr.mxu0 0.0
        %4118 = vmatpush1.msra.mxu0 0.0
        %4119 = vmatprep.subr.mxu0 0.0
        %4120 = vmatpush1.msra.mxu0 0.0
        %4121 = vmatprep.subr.mxu0 0.0
        %4122 = vmatpush1.msra.mxu0 0.0
        %4123 = vmatprep.subr.mxu0 0.0
        %4124 = vmatpush1.msra.mxu0 0.0
        %4125 = vmatprep.subr.mxu0 0.0
        %4126 = vmatpush1.msra.mxu0 0.0
        %4127 = vmatprep.subr.mxu0 0.0
        %4128 = vmatpush1.msra.mxu0 0.0
        %4129 = vmatprep.subr.mxu0 0.0
        %4130 = vmatpush1.msra.mxu0 0.0
        %4131 = vmatprep.subr.mxu0 0.0
        %4132 = vmatpush1.msra.mxu0 0.0
        %4133 = vmatprep.subr.mxu0 0.0
        %4134 = vmatpush1.msra.mxu0 0.0
        %4135 = vmatprep.subr.mxu0 0.0
        %4136 = vmatpush1.msra.mxu0 0.0
        %4137 = vmatprep.subr.mxu0 0.0
        %4138 = vmatpush1.msra.mxu0 0.0
        %4139 = vmatprep.subr.mxu0 0.0
        %4140 = vmatpush1.msra.mxu0 0.0
        %4141 = vmatprep.subr.mxu0 0.0
        %4142 = vmatpush1.msra.mxu0 0.0
        %4143 = vmatprep.subr.mxu0 0.0
        %4144 = vmatpush1.msra.mxu0 0.0
        %4145 = vmatprep.subr.mxu0 0.0
        %4146 = vmatpush1.msra.mxu0 0.0
        %4147 = vmatprep.subr.mxu0 0.0
        %4148 = vmatpush1.msra.mxu0 0.0
        %4149 = vmatprep.subr.mxu0 0.0
        %4150 = vmatpush1.msra.mxu0 0.0
        %4151 = vmatprep.subr.mxu0 0.0
        %4152 = vmatpush1.msra.mxu0 0.0
        %4153 = vmatprep.subr.mxu0 0.0
        %4154 = vmatpush1.msra.mxu0 0.0
        %4155 = vmatprep.subr.mxu0 0.0
        %4156 = vmatpush1.msra.mxu0 0.0
        %4157 = vmatprep.subr.mxu0 0.0
        %4158 = vmatpush1.msra.mxu0 0.0
        %4159 = vmatprep.subr.mxu0 0.0
        %4160 = vmatpush1.msra.mxu0 0.0
        %4161 = vmatprep.mubr.f32.mxu0 0.0
        %4162 = vmatmul.mubr.f32.gmra.mrb[0].mxu0 %v4095
        %v4163 = vpop.f32.mrb[0].mxu0
        %v4164 = vadd.f32 0.0, %v4163
        %v4165 = vpop.f32.mrb[0].mxu0
        %4166 = vdwg.mxu0
        %v4168 = vsel %vm1063, %v4088, 0
        %v4171 = vsel %vm1063, %v4164, 0
        %4173 = vmatprep.subr.mxu0 0.0
        %4174 = vmatpush1.msra.mxu0 %v3017
        %4175 = vmatprep.subr.mxu0 0.0
        %4176 = vmatpush1.msra.mxu0 0.0
        %4177 = vmatprep.subr.mxu0 0.0
        %4178 = vmatpush1.msra.mxu0 0.0
        %4179 = vmatprep.subr.mxu0 0.0
        %4180 = vmatpush1.msra.mxu0 0.0
        %4181 = vmatprep.subr.mxu0 0.0
        %4182 = vmatpush1.msra.mxu0 0.0
        %4183 = vmatprep.subr.mxu0 0.0
        %4184 = vmatpush1.msra.mxu0 0.0
        %4185 = vmatprep.subr.mxu0 0.0
        %4186 = vmatpush1.msra.mxu0 0.0
        %4187 = vmatprep.subr.mxu0 0.0
        %4188 = vmatpush1.msra.mxu0 0.0
        %4189 = vmatprep.subr.mxu0 0.0
        %4190 = vmatpush1.msra.mxu0 0.0
        %4191 = vmatprep.subr.mxu0 0.0
        %4192 = vmatpush1.msra.mxu0 0.0
        %4193 = vmatprep.subr.mxu0 0.0
        %4194 = vmatpush1.msra.mxu0 0.0
        %4195 = vmatprep.subr.mxu0 0.0
        %4196 = vmatpush1.msra.mxu0 0.0
        %4197 = vmatprep.subr.mxu0 0.0
        %4198 = vmatpush1.msra.mxu0 0.0
        %4199 = vmatprep.subr.mxu0 0.0
        %4200 = vmatpush1.msra.mxu0 0.0
        %4201 = vmatprep.subr.mxu0 0.0
        %4202 = vmatpush1.msra.mxu0 0.0
        %4203 = vmatprep.subr.mxu0 0.0
        %4204 = vmatpush1.msra.mxu0 0.0
        %4205 = vmatprep.subr.mxu0 0.0
        %4206 = vmatpush1.msra.mxu0 0.0
        %4207 = vmatprep.subr.mxu0 0.0
        %4208 = vmatpush1.msra.mxu0 0.0
        %4209 = vmatprep.subr.mxu0 0.0
        %4210 = vmatpush1.msra.mxu0 0.0
        %4211 = vmatprep.subr.mxu0 0.0
        %4212 = vmatpush1.msra.mxu0 0.0
        %4213 = vmatprep.subr.mxu0 0.0
        %4214 = vmatpush1.msra.mxu0 0.0
        %4215 = vmatprep.subr.mxu0 0.0
        %4216 = vmatpush1.msra.mxu0 0.0
        %4217 = vmatprep.subr.mxu0 0.0
        %4218 = vmatpush1.msra.mxu0 0.0
        %4219 = vmatprep.subr.mxu0 0.0
        %4220 = vmatpush1.msra.mxu0 0.0
        %4221 = vmatprep.subr.mxu0 0.0
        %4222 = vmatpush1.msra.mxu0 0.0
        %4223 = vmatprep.subr.mxu0 0.0
        %4224 = vmatpush1.msra.mxu0 0.0
        %4225 = vmatprep.subr.mxu0 0.0
        %4226 = vmatpush1.msra.mxu0 0.0
        %4227 = vmatprep.subr.mxu0 0.0
        %4228 = vmatpush1.msra.mxu0 0.0
        %4229 = vmatprep.subr.mxu0 0.0
        %4230 = vmatpush1.msra.mxu0 0.0
        %4231 = vmatprep.subr.mxu0 0.0
        %4232 = vmatpush1.msra.mxu0 0.0
        %4233 = vmatprep.subr.mxu0 0.0
        %4234 = vmatpush1.msra.mxu0 0.0
        %4235 = vmatprep.subr.mxu0 0.0
        %4236 = vmatpush1.msra.mxu0 0.0
        %4237 = vmatprep.mubr.f32.mxu0 0.0
        %4238 = vmatmul.mubr.f32.gmra.mrb[0].mxu0 %v4168
        %v4239 = vpop.f32.mrb[0].mxu0
        %v4240 = vadd.f32 0.0, %v4239
        %v4241 = vpop.f32.mrb[0].mxu0
        %4242 = vmatprep.mubr.f32.mxu0 0.0
        %4243 = vmatmul.mubr.f32.gmra.mrb[0].mxu0 %v4171
        %v4244 = vpop.f32.mrb[0].mxu0
        %v4245 = vadd.f32 0.0, %v4244
        %v4246 = vpop.f32.mrb[0].mxu0
        %4247 = vdwg.mxu0
        %v4248 = vadd.f32 %v3835, %v4240
        %v4249 = vadd.f32 %v3836, %v4245
        %4250 = vrot.lane.b32.xlu0 %v2833, 104
        %v4251 = vpop.permute.xlu0 %4250
        %4252 = vrot.lane.b32.xlu0 %v2920, 104
        %v4253 = vpop.permute.xlu0 %4252
        %v4254 = vsel %vm1063, %v4251, 0
        %v4256 = vsel %vm1063, %v4253, 0
        %4258 = vmatprep.subr.mxu0 0.0
        %4259 = vmatpush1.xpose.msra.mxu0 %v4256
        %4260 = vmatprep.subr.mxu0 0.0
        %4261 = vmatpush1.xpose.msra.mxu0 0.0
        %4262 = vmatprep.subr.mxu0 0.0
        %4263 = vmatpush1.xpose.msra.mxu0 0.0
        %4264 = vmatprep.subr.mxu0 0.0
        %4265 = vmatpush1.xpose.msra.mxu0 0.0
        %4266 = vmatprep.subr.mxu0 0.0
        %4267 = vmatpush1.xpose.msra.mxu0 0.0
        %4268 = vmatprep.subr.mxu0 0.0
        %4269 = vmatpush1.xpose.msra.mxu0 0.0
        %4270 = vmatprep.subr.mxu0 0.0
        %4271 = vmatpush1.xpose.msra.mxu0 0.0
        %4272 = vmatprep.subr.mxu0 0.0
        %4273 = vmatpush1.xpose.msra.mxu0 0.0
        %4274 = vmatprep.subr.mxu0 0.0
        %4275 = vmatpush1.xpose.msra.mxu0 0.0
        %4276 = vmatprep.subr.mxu0 0.0
        %4277 = vmatpush1.xpose.msra.mxu0 0.0
        %4278 = vmatprep.subr.mxu0 0.0
        %4279 = vmatpush1.xpose.msra.mxu0 0.0
        %4280 = vmatprep.subr.mxu0 0.0
        %4281 = vmatpush1.xpose.msra.mxu0 0.0
        %4282 = vmatprep.subr.mxu0 0.0
        %4283 = vmatpush1.xpose.msra.mxu0 0.0
        %4284 = vmatprep.subr.mxu0 0.0
        %4285 = vmatpush1.xpose.msra.mxu0 0.0
        %4286 = vmatprep.subr.mxu0 0.0
        %4287 = vmatpush1.xpose.msra.mxu0 0.0
        %4288 = vmatprep.subr.mxu0 0.0
        %4289 = vmatpush1.xpose.msra.mxu0 0.0
        %4290 = vmatprep.subr.mxu0 0.0
        %4291 = vmatpush1.xpose.msra.mxu0 0.0
        %4292 = vmatprep.subr.mxu0 0.0
        %4293 = vmatpush1.xpose.msra.mxu0 0.0
        %4294 = vmatprep.subr.mxu0 0.0
        %4295 = vmatpush1.xpose.msra.mxu0 0.0
        %4296 = vmatprep.subr.mxu0 0.0
        %4297 = vmatpush1.xpose.msra.mxu0 0.0
        %4298 = vmatprep.subr.mxu0 0.0
        %4299 = vmatpush1.xpose.msra.mxu0 0.0
        %4300 = vmatprep.subr.mxu0 0.0
        %4301 = vmatpush1.xpose.msra.mxu0 0.0
        %4302 = vmatprep.subr.mxu0 0.0
        %4303 = vmatpush1.xpose.msra.mxu0 0.0
        %4304 = vmatprep.subr.mxu0 0.0
        %4305 = vmatpush1.xpose.msra.mxu0 0.0
        %4306 = vmatprep.subr.mxu0 0.0
        %4307 = vmatpush1.xpose.msra.mxu0 0.0
        %4308 = vmatprep.subr.mxu0 0.0
        %4309 = vmatpush1.xpose.msra.mxu0 0.0
        %4310 = vmatprep.subr.mxu0 0.0
        %4311 = vmatpush1.xpose.msra.mxu0 0.0
        %4312 = vmatprep.subr.mxu0 0.0
        %4313 = vmatpush1.xpose.msra.mxu0 0.0
        %4314 = vmatprep.subr.mxu0 0.0
        %4315 = vmatpush1.xpose.msra.mxu0 0.0
        %4316 = vmatprep.subr.mxu0 0.0
        %4317 = vmatpush1.xpose.msra.mxu0 0.0
        %4318 = vmatprep.subr.mxu0 0.0
        %4319 = vmatpush1.xpose.msra.mxu0 0.0
        %4320 = vmatprep.subr.mxu0 0.0
        %4321 = vmatpush1.xpose.msra.mxu0 0.0
        %4322 = vmatprep.mubr.f32.mxu0 0.0
        %4323 = vmatmul.mubr.f32.gmra.mrb[0].mxu0 %v4254
        %v4324 = vpop.f32.mrb[0].mxu0
        %v4325 = vadd.f32 0.0, %v4324
        %v4326 = vpop.f32.mrb[0].mxu0
        %4327 = vdwg.mxu0
        %4328 = vrot.lane.b32.xlu0 %v2838, 104
        %v4329 = vpop.permute.xlu0 %4328
        %4330 = vrot.lane.b32.xlu0 %v2925, 104
        %v4331 = vpop.permute.xlu0 %4330
        %v4332 = vsel %vm1063, %v4329, 0
        %v4334 = vsel %vm1063, %v4331, 0
        %4336 = vmatprep.subr.mxu0 0.0
        %4337 = vmatpush1.xpose.msra.mxu0 %v4334
        %4338 = vmatprep.subr.mxu0 0.0
        %4339 = vmatpush1.xpose.msra.mxu0 0.0
        %4340 = vmatprep.subr.mxu0 0.0
        %4341 = vmatpush1.xpose.msra.mxu0 0.0
        %4342 = vmatprep.subr.mxu0 0.0
        %4343 = vmatpush1.xpose.msra.mxu0 0.0
        %4344 = vmatprep.subr.mxu0 0.0
        %4345 = vmatpush1.xpose.msra.mxu0 0.0
        %4346 = vmatprep.subr.mxu0 0.0
        %4347 = vmatpush1.xpose.msra.mxu0 0.0
        %4348 = vmatprep.subr.mxu0 0.0
        %4349 = vmatpush1.xpose.msra.mxu0 0.0
        %4350 = vmatprep.subr.mxu0 0.0
        %4351 = vmatpush1.xpose.msra.mxu0 0.0
        %4352 = vmatprep.subr.mxu0 0.0
        %4353 = vmatpush1.xpose.msra.mxu0 0.0
        %4354 = vmatprep.subr.mxu0 0.0
        %4355 = vmatpush1.xpose.msra.mxu0 0.0
        %4356 = vmatprep.subr.mxu0 0.0
        %4357 = vmatpush1.xpose.msra.mxu0 0.0
        %4358 = vmatprep.subr.mxu0 0.0
        %4359 = vmatpush1.xpose.msra.mxu0 0.0
        %4360 = vmatprep.subr.mxu0 0.0
        %4361 = vmatpush1.xpose.msra.mxu0 0.0
        %4362 = vmatprep.subr.mxu0 0.0
        %4363 = vmatpush1.xpose.msra.mxu0 0.0
        %4364 = vmatprep.subr.mxu0 0.0
        %4365 = vmatpush1.xpose.msra.mxu0 0.0
        %4366 = vmatprep.subr.mxu0 0.0
        %4367 = vmatpush1.xpose.msra.mxu0 0.0
        %4368 = vmatprep.subr.mxu0 0.0
        %4369 = vmatpush1.xpose.msra.mxu0 0.0
        %4370 = vmatprep.subr.mxu0 0.0
        %4371 = vmatpush1.xpose.msra.mxu0 0.0
        %4372 = vmatprep.subr.mxu0 0.0
        %4373 = vmatpush1.xpose.msra.mxu0 0.0
        %4374 = vmatprep.subr.mxu0 0.0
        %4375 = vmatpush1.xpose.msra.mxu0 0.0
        %4376 = vmatprep.subr.mxu0 0.0
        %4377 = vmatpush1.xpose.msra.mxu0 0.0
        %4378 = vmatprep.subr.mxu0 0.0
        %4379 = vmatpush1.xpose.msra.mxu0 0.0
        %4380 = vmatprep.subr.mxu0 0.0
        %4381 = vmatpush1.xpose.msra.mxu0 0.0
        %4382 = vmatprep.subr.mxu0 0.0
        %4383 = vmatpush1.xpose.msra.mxu0 0.0
        %4384 = vmatprep.subr.mxu0 0.0
        %4385 = vmatpush1.xpose.msra.mxu0 0.0
        %4386 = vmatprep.subr.mxu0 0.0
        %4387 = vmatpush1.xpose.msra.mxu0 0.0
        %4388 = vmatprep.subr.mxu0 0.0
        %4389 = vmatpush1.xpose.msra.mxu0 0.0
        %4390 = vmatprep.subr.mxu0 0.0
        %4391 = vmatpush1.xpose.msra.mxu0 0.0
        %4392 = vmatprep.subr.mxu0 0.0
        %4393 = vmatpush1.xpose.msra.mxu0 0.0
        %4394 = vmatprep.subr.mxu0 0.0
        %4395 = vmatpush1.xpose.msra.mxu0 0.0
        %4396 = vmatprep.subr.mxu0 0.0
        %4397 = vmatpush1.xpose.msra.mxu0 0.0
        %4398 = vmatprep.subr.mxu0 0.0
        %4399 = vmatpush1.xpose.msra.mxu0 0.0
        %4400 = vmatprep.mubr.f32.mxu0 0.0
        %4401 = vmatmul.mubr.f32.gmra.mrb[0].mxu0 %v4332
        %v4402 = vpop.f32.mrb[0].mxu0
        %v4403 = vadd.f32 0.0, %v4402
        %v4404 = vpop.f32.mrb[0].mxu0
        %4405 = vdwg.mxu0
        %v4406 = vsel %vm1063, %v4325, -inf
        %4407 = vmax.xlane.f32.xlu0 %v4406
        %v4408 = vpop.xlane.xlu0 %4407
        %v4409 = vsel %vm1063, %v4403, -inf
        %4410 = vmax.xlane.f32.xlu0 %v4409
        %v4411 = vpop.xlane.xlu0 %4410
        %v4412 = vsub.f32 %v4325, %v4408
        %v4413 = vsub.f32 %v4403, %v4411
        %v4414 = vmul.f32 %v4412, 1.442695
        %v4415 = vpow.pop %v4414
        %v4416 = vmul.f32 %v4413, 1.442695
        %v4417 = vpow.pop %v4416
        %v4418 = vsel %vm1063, %v4415, 0.0
        %4419 = vadd.xlane.f32.xlu0 %v4418
        %v4420 = vpop.xlane.xlu0 %4419
        %v4421 = vsel %vm1063, %v4417, 0.0
        %4422 = vadd.xlane.f32.xlu0 %v4421
        %v4423 = vpop.xlane.xlu0 %4422
        %v4424 = vrcp.pop %v4420
        %v4425 = vmul.f32 %v4415, %v4424
        %v4426 = vrcp.pop %v4423
        %v4427 = vmul.f32 %v4417, %v4426
        %4428 = vrot.lane.b32.xlu0 %v3007, 104
        %v4429 = vpop.permute.xlu0 %4428
        %v4432 = vsel %vm1063, %v4425, 0
        %4434 = vmatprep.subr.mxu0 0.0
        %4435 = vmatpush1.msra.mxu0 %v4429
        %4436 = vmatprep.subr.mxu0 0.0
        %4437 = vmatpush1.msra.mxu0 0.0
        %4438 = vmatprep.subr.mxu0 0.0
        %4439 = vmatpush1.msra.mxu0 0.0
        %4440 = vmatprep.subr.mxu0 0.0
        %4441 = vmatpush1.msra.mxu0 0.0
        %4442 = vmatprep.subr.mxu0 0.0
        %4443 = vmatpush1.msra.mxu0 0.0
        %4444 = vmatprep.subr.mxu0 0.0
        %4445 = vmatpush1.msra.mxu0 0.0
        %4446 = vmatprep.subr.mxu0 0.0
        %4447 = vmatpush1.msra.mxu0 0.0
        %4448 = vmatprep.subr.mxu0 0.0
        %4449 = vmatpush1.msra.mxu0 0.0
        %4450 = vmatprep.subr.mxu0 0.0
        %4451 = vmatpush1.msra.mxu0 0.0
        %4452 = vmatprep.subr.mxu0 0.0
        %4453 = vmatpush1.msra.mxu0 0.0
        %4454 = vmatprep.subr.mxu0 0.0
        %4455 = vmatpush1.msra.mxu0 0.0
        %4456 = vmatprep.subr.mxu0 0.0
        %4457 = vmatpush1.msra.mxu0 0.0
        %4458 = vmatprep.subr.mxu0 0.0
        %4459 = vmatpush1.msra.mxu0 0.0
        %4460 = vmatprep.subr.mxu0 0.0
        %4461 = vmatpush1.msra.mxu0 0.0
        %4462 = vmatprep.subr.mxu0 0.0
        %4463 = vmatpush1.msra.mxu0 0.0
        %4464 = vmatprep.subr.mxu0 0.0
        %4465 = vmatpush1.msra.mxu0 0.0
        %4466 = vmatprep.subr.mxu0 0.0
        %4467 = vmatpush1.msra.mxu0 0.0
        %4468 = vmatprep.subr.mxu0 0.0
        %4469 = vmatpush1.msra.mxu0 0.0
        %4470 = vmatprep.subr.mxu0 0.0
        %4471 = vmatpush1.msra.mxu0 0.0
        %4472 = vmatprep.subr.mxu0 0.0
        %4473 = vmatpush1.msra.mxu0 0.0
        %4474 = vmatprep.subr.mxu0 0.0
        %4475 = vmatpush1.msra.mxu0 0.0
        %4476 = vmatprep.subr.mxu0 0.0
        %4477 = vmatpush1.msra.mxu0 0.0
        %4478 = vmatprep.subr.mxu0 0.0
        %4479 = vmatpush1.msra.mxu0 0.0
        %4480 = vmatprep.subr.mxu0 0.0
        %4481 = vmatpush1.msra.mxu0 0.0
        %4482 = vmatprep.subr.mxu0 0.0
        %4483 = vmatpush1.msra.mxu0 0.0
        %4484 = vmatprep.subr.mxu0 0.0
        %4485 = vmatpush1.msra.mxu0 0.0
        %4486 = vmatprep.subr.mxu0 0.0
        %4487 = vmatpush1.msra.mxu0 0.0
        %4488 = vmatprep.subr.mxu0 0.0
        %4489 = vmatpush1.msra.mxu0 0.0
        %4490 = vmatprep.subr.mxu0 0.0
        %4491 = vmatpush1.msra.mxu0 0.0
        %4492 = vmatprep.subr.mxu0 0.0
        %4493 = vmatpush1.msra.mxu0 0.0
        %4494 = vmatprep.subr.mxu0 0.0
        %4495 = vmatpush1.msra.mxu0 0.0
        %4496 = vmatprep.subr.mxu0 0.0
        %4497 = vmatpush1.msra.mxu0 0.0
        %4498 = vmatprep.mubr.f32.mxu0 0.0
        %4499 = vmatmul.mubr.f32.gmra.mrb[0].mxu0 %v4432
        %v4500 = vpop.f32.mrb[0].mxu0
        %v4501 = vadd.f32 0.0, %v4500
        %v4502 = vpop.f32.mrb[0].mxu0
        %4503 = vdwg.mxu0
        %4504 = vrot.lane.b32.xlu0 %v3012, 104
        %v4505 = vpop.permute.xlu0 %4504
        %v4508 = vsel %vm1063, %v4427, 0
        %4510 = vmatprep.subr.mxu0 0.0
        %4511 = vmatpush1.msra.mxu0 %v4505
        %4512 = vmatprep.subr.mxu0 0.0
        %4513 = vmatpush1.msra.mxu0 0.0
        %4514 = vmatprep.subr.mxu0 0.0
        %4515 = vmatpush1.msra.mxu0 0.0
        %4516 = vmatprep.subr.mxu0 0.0
        %4517 = vmatpush1.msra.mxu0 0.0
        %4518 = vmatprep.subr.mxu0 0.0
        %4519 = vmatpush1.msra.mxu0 0.0
        %4520 = vmatprep.subr.mxu0 0.0
        %4521 = vmatpush1.msra.mxu0 0.0
        %4522 = vmatprep.subr.mxu0 0.0
        %4523 = vmatpush1.msra.mxu0 0.0
        %4524 = vmatprep.subr.mxu0 0.0
        %4525 = vmatpush1.msra.mxu0 0.0
        %4526 = vmatprep.subr.mxu0 0.0
        %4527 = vmatpush1.msra.mxu0 0.0
        %4528 = vmatprep.subr.mxu0 0.0
        %4529 = vmatpush1.msra.mxu0 0.0
        %4530 = vmatprep.subr.mxu0 0.0
        %4531 = vmatpush1.msra.mxu0 0.0
        %4532 = vmatprep.subr.mxu0 0.0
        %4533 = vmatpush1.msra.mxu0 0.0
        %4534 = vmatprep.subr.mxu0 0.0
        %4535 = vmatpush1.msra.mxu0 0.0
        %4536 = vmatprep.subr.mxu0 0.0
        %4537 = vmatpush1.msra.mxu0 0.0
        %4538 = vmatprep.subr.mxu0 0.0
        %4539 = vmatpush1.msra.mxu0 0.0
        %4540 = vmatprep.subr.mxu0 0.0
        %4541 = vmatpush1.msra.mxu0 0.0
        %4542 = vmatprep.subr.mxu0 0.0
        %4543 = vmatpush1.msra.mxu0 0.0
        %4544 = vmatprep.subr.mxu0 0.0
        %4545 = vmatpush1.msra.mxu0 0.0
        %4546 = vmatprep.subr.mxu0 0.0
        %4547 = vmatpush1.msra.mxu0 0.0
        %4548 = vmatprep.subr.mxu0 0.0
        %4549 = vmatpush1.msra.mxu0 0.0
        %4550 = vmatprep.subr.mxu0 0.0
        %4551 = vmatpush1.msra.mxu0 0.0
        %4552 = vmatprep.subr.mxu0 0.0
        %4553 = vmatpush1.msra.mxu0 0.0
        %4554 = vmatprep.subr.mxu0 0.0
        %4555 = vmatpush1.msra.mxu0 0.0
        %4556 = vmatprep.subr.mxu0 0.0
        %4557 = vmatpush1.msra.mxu0 0.0
        %4558 = vmatprep.subr.mxu0 0.0
        %4559 = vmatpush1.msra.mxu0 0.0
        %4560 = vmatprep.subr.mxu0 0.0
        %4561 = vmatpush1.msra.mxu0 0.0
        %4562 = vmatprep.subr.mxu0 0.0
        %4563 = vmatpush1.msra.mxu0 0.0
        %4564 = vmatprep.subr.mxu0 0.0
        %4565 = vmatpush1.msra.mxu0 0.0
        %4566 = vmatprep.subr.mxu0 0.0
        %4567 = vmatpush1.msra.mxu0 0.0
        %4568 = vmatprep.subr.mxu0 0.0
        %4569 = vmatpush1.msra.mxu0 0.0
        %4570 = vmatprep.subr.mxu0 0.0
        %4571 = vmatpush1.msra.mxu0 0.0
        %4572 = vmatprep.subr.mxu0 0.0
        %4573 = vmatpush1.msra.mxu0 0.0
        %4574 = vmatprep.mubr.f32.mxu0 0.0
        %4575 = vmatmul.mubr.f32.gmra.mrb[0].mxu0 %v4508
        %v4576 = vpop.f32.mrb[0].mxu0
        %v4577 = vadd.f32 0.0, %v4576
        %v4578 = vpop.f32.mrb[0].mxu0
        %4579 = vdwg.mxu0
        %v4581 = vsel %vm1063, %v4501, 0
        %v4584 = vsel %vm1063, %v4577, 0
        %4586 = vmatprep.subr.mxu0 0.0
        %4587 = vmatpush1.msra.mxu0 %v3018
        %4588 = vmatprep.subr.mxu0 0.0
        %4589 = vmatpush1.msra.mxu0 0.0
        %4590 = vmatprep.subr.mxu0 0.0
        %4591 = vmatpush1.msra.mxu0 0.0
        %4592 = vmatprep.subr.mxu0 0.0
        %4593 = vmatpush1.msra.mxu0 0.0
        %4594 = vmatprep.subr.mxu0 0.0
        %4595 = vmatpush1.msra.mxu0 0.0
        %4596 = vmatprep.subr.mxu0 0.0
        %4597 = vmatpush1.msra.mxu0 0.0
        %4598 = vmatprep.subr.mxu0 0.0
        %4599 = vmatpush1.msra.mxu0 0.0
        %4600 = vmatprep.subr.mxu0 0.0
        %4601 = vmatpush1.msra.mxu0 0.0
        %4602 = vmatprep.subr.mxu0 0.0
        %4603 = vmatpush1.msra.mxu0 0.0
        %4604 = vmatprep.subr.mxu0 0.0
        %4605 = vmatpush1.msra.mxu0 0.0
        %4606 = vmatprep.subr.mxu0 0.0
        %4607 = vmatpush1.msra.mxu0 0.0
        %4608 = vmatprep.subr.mxu0 0.0
        %4609 = vmatpush1.msra.mxu0 0.0
        %4610 = vmatprep.subr.mxu0 0.0
        %4611 = vmatpush1.msra.mxu0 0.0
        %4612 = vmatprep.subr.mxu0 0.0
        %4613 = vmatpush1.msra.mxu0 0.0
        %4614 = vmatprep.subr.mxu0 0.0
        %4615 = vmatpush1.msra.mxu0 0.0
        %4616 = vmatprep.subr.mxu0 0.0
        %4617 = vmatpush1.msra.mxu0 0.0
        %4618 = vmatprep.subr.mxu0 0.0
        %4619 = vmatpush1.msra.mxu0 0.0
        %4620 = vmatprep.subr.mxu0 0.0
        %4621 = vmatpush1.msra.mxu0 0.0
        %4622 = vmatprep.subr.mxu0 0.0
        %4623 = vmatpush1.msra.mxu0 0.0
        %4624 = vmatprep.subr.mxu0 0.0
        %4625 = vmatpush1.msra.mxu0 0.0
        %4626 = vmatprep.subr.mxu0 0.0
        %4627 = vmatpush1.msra.mxu0 0.0
        %4628 = vmatprep.subr.mxu0 0.0
        %4629 = vmatpush1.msra.mxu0 0.0
        %4630 = vmatprep.subr.mxu0 0.0
        %4631 = vmatpush1.msra.mxu0 0.0
        %4632 = vmatprep.subr.mxu0 0.0
        %4633 = vmatpush1.msra.mxu0 0.0
        %4634 = vmatprep.subr.mxu0 0.0
        %4635 = vmatpush1.msra.mxu0 0.0
        %4636 = vmatprep.subr.mxu0 0.0
        %4637 = vmatpush1.msra.mxu0 0.0
        %4638 = vmatprep.subr.mxu0 0.0
        %4639 = vmatpush1.msra.mxu0 0.0
        %4640 = vmatprep.subr.mxu0 0.0
        %4641 = vmatpush1.msra.mxu0 0.0
        %4642 = vmatprep.subr.mxu0 0.0
        %4643 = vmatpush1.msra.mxu0 0.0
        %4644 = vmatprep.subr.mxu0 0.0
        %4645 = vmatpush1.msra.mxu0 0.0
        %4646 = vmatprep.subr.mxu0 0.0
        %4647 = vmatpush1.msra.mxu0 0.0
        %4648 = vmatprep.subr.mxu0 0.0
        %4649 = vmatpush1.msra.mxu0 0.0
        %4650 = vmatprep.mubr.f32.mxu0 0.0
        %4651 = vmatmul.mubr.f32.gmra.mrb[0].mxu0 %v4581
        %v4652 = vpop.f32.mrb[0].mxu0
        %v4653 = vadd.f32 0.0, %v4652
        %v4654 = vpop.f32.mrb[0].mxu0
        %4655 = vmatprep.mubr.f32.mxu0 0.0
        %4656 = vmatmul.mubr.f32.gmra.mrb[0].mxu0 %v4584
        %v4657 = vpop.f32.mrb[0].mxu0
        %v4658 = vadd.f32 0.0, %v4657
        %v4659 = vpop.f32.mrb[0].mxu0
        %4660 = vdwg.mxu0
        %v4661 = vadd.f32 %v4248, %v4653
        %v4662 = vadd.f32 %v4249, %v4658
        %v4663 = vld [vmem:[%s949] sm:$0x1]
        %v4664 = vld [vmem:[%s952] sm:$0x1]
        %v4665 = vsel %vm974, %v4661, 0.0
        %4666 = vadd.xlane.f32.xlu0 %v4665
        %v4667 = vpop.xlane.xlu0 %4666
        %v4668 = vsel %vm974, %v4662, 0.0
        %4669 = vadd.xlane.f32.xlu0 %v4668
        %v4670 = vpop.xlane.xlu0 %4669
        %v4671 = vmul.f32 %v4667, %v2719
        %v4672 = vmul.f32 %v4670, %v2719
        %v4673 = vsub.f32 %v4661, %v4671
        %v4674 = vsub.f32 %v4662, %v4672
        %v4675 = vmul.f32 %v4673, %v4673
        %v4676 = vmul.f32 %v4674, %v4674
        %v4677 = vsel %vm974, %v4675, 0.0
        %4678 = vadd.xlane.f32.xlu0 %v4677
        %v4679 = vpop.xlane.xlu0 %4678
        %v4680 = vsel %vm974, %v4676, 0.0
        %4681 = vadd.xlane.f32.xlu0 %v4680
        %v4682 = vpop.xlane.xlu0 %4681
        %v4683 = vmul.f32 %v4679, %v2719
        %v4684 = vmul.f32 %v4682, %v2719
        %v4685 = vadd.f32 %v4683, 1e-05
        %v4686 = vadd.f32 %v4684, 1e-05
        %v4687 = vrsqrt.pop %v4685
        %v4688 = vrsqrt.pop %v4686
        %v4689 = vmul.f32 %v4673, %v4687
        %v4690 = vmul.f32 %v4674, %v4688
        %v4692 = vlaneseq
        %v4693 = vshrl.u32 %v4692, 7
        %v4694 = vsub.s32 0, %v4693
        %v4695 = vrot.slane %v4663, %v4694
        %v4697 = vmul.f32 %v4689, %v4695
        %v4698 = vmul.f32 %v4690, %v4695
        %v4700 = vlaneseq
        %v4701 = vshrl.u32 %v4700, 7
        %v4702 = vsub.s32 0, %v4701
        %v4703 = vrot.slane %v4664, %v4702
        %v4705 = vadd.f32 %v4697, %v4703
        %v4706 = vadd.f32 %v4698, %v4703
        %v4707 = vld [vmem:[%s806] sm:$0xff]
        %v4708 = vld [vmem:[%s806 + $0x8] sm:$0xff]
        %v4709 = vld [vmem:[%s806 + $0x10] sm:$0xff]
        %v4710 = vld [vmem:[%s806 + $0x18] sm:$0xff]
        %v4711 = vld [vmem:[%s932] sm:$0x1]
        %v4713 = vlaneseq
        %v4714 = vshrl.u32 %v4713, 7
        %v4715 = vsub.s32 0, %v4714
        %v4716 = vrot.slane %v4711, %v4715
        %v4719 = vsel %vm974, %v4705, 0
        %v4722 = vsel %vm974, %v4706, 0
        %4724 = vmatprep.subr.mxu0 0.0
        %4725 = vmatpush1.msra.mxu0 %v4707
        %4726 = vmatprep.subr.mxu0 0.0
        %4727 = vmatpush1.msra.mxu0 %v4708
        %4728 = vmatprep.subr.mxu0 0.0
        %4729 = vmatpush1.msra.mxu0 %v4709
        %4730 = vmatprep.subr.mxu0 0.0
        %4731 = vmatpush1.msra.mxu0 %v4710
        %4732 = vmatprep.subr.mxu0 0.0
        %4733 = vmatpush1.msra.mxu0 0.0
        %4734 = vmatprep.subr.mxu0 0.0
        %4735 = vmatpush1.msra.mxu0 0.0
        %4736 = vmatprep.subr.mxu0 0.0
        %4737 = vmatpush1.msra.mxu0 0.0
        %4738 = vmatprep.subr.mxu0 0.0
        %4739 = vmatpush1.msra.mxu0 0.0
        %4740 = vmatprep.subr.mxu0 0.0
        %4741 = vmatpush1.msra.mxu0 0.0
        %4742 = vmatprep.subr.mxu0 0.0
        %4743 = vmatpush1.msra.mxu0 0.0
        %4744 = vmatprep.subr.mxu0 0.0
        %4745 = vmatpush1.msra.mxu0 0.0
        %4746 = vmatprep.subr.mxu0 0.0
        %4747 = vmatpush1.msra.mxu0 0.0
        %4748 = vmatprep.subr.mxu0 0.0
        %4749 = vmatpush1.msra.mxu0 0.0
        %4750 = vmatprep.subr.mxu0 0.0
        %4751 = vmatpush1.msra.mxu0 0.0
        %4752 = vmatprep.subr.mxu0 0.0
        %4753 = vmatpush1.msra.mxu0 0.0
        %4754 = vmatprep.subr.mxu0 0.0
        %4755 = vmatpush1.msra.mxu0 0.0
        %4756 = vmatprep.subr.mxu0 0.0
        %4757 = vmatpush1.msra.mxu0 0.0
        %4758 = vmatprep.subr.mxu0 0.0
        %4759 = vmatpush1.msra.mxu0 0.0
        %4760 = vmatprep.subr.mxu0 0.0
        %4761 = vmatpush1.msra.mxu0 0.0
        %4762 = vmatprep.subr.mxu0 0.0
        %4763 = vmatpush1.msra.mxu0 0.0
        %4764 = vmatprep.subr.mxu0 0.0
        %4765 = vmatpush1.msra.mxu0 0.0
        %4766 = vmatprep.subr.mxu0 0.0
        %4767 = vmatpush1.msra.mxu0 0.0
        %4768 = vmatprep.subr.mxu0 0.0
        %4769 = vmatpush1.msra.mxu0 0.0
        %4770 = vmatprep.subr.mxu0 0.0
        %4771 = vmatpush1.msra.mxu0 0.0
        %4772 = vmatprep.subr.mxu0 0.0
        %4773 = vmatpush1.msra.mxu0 0.0
        %4774 = vmatprep.subr.mxu0 0.0
        %4775 = vmatpush1.msra.mxu0 0.0
        %4776 = vmatprep.subr.mxu0 0.0
        %4777 = vmatpush1.msra.mxu0 0.0
        %4778 = vmatprep.subr.mxu0 0.0
        %4779 = vmatpush1.msra.mxu0 0.0
        %4780 = vmatprep.subr.mxu0 0.0
        %4781 = vmatpush1.msra.mxu0 0.0
        %4782 = vmatprep.subr.mxu0 0.0
        %4783 = vmatpush1.msra.mxu0 0.0
        %4784 = vmatprep.subr.mxu0 0.0
        %4785 = vmatpush1.msra.mxu0 0.0
        %4786 = vmatprep.subr.mxu0 0.0
        %4787 = vmatpush1.msra.mxu0 0.0
        %4788 = vmatprep.mubr.f32.mxu0 0.0
        %4789 = vmatmul.mubr.f32.gmra.mrb[0].mxu0 %v4719
        %v4790 = vpop.f32.mrb[0].mxu0
        %v4791 = vadd.f32 %v4716, %v4790
        %v4792 = vpop.f32.mrb[0].mxu0
        %4793 = vmatprep.mubr.f32.mxu0 0.0
        %4794 = vmatmul.mubr.f32.gmra.mrb[0].mxu0 %v4722
        %v4795 = vpop.f32.mrb[0].mxu0
        %v4796 = vadd.f32 %v4716, %v4795
        %v4797 = vpop.f32.mrb[0].mxu0
        %4798 = vdwg.mxu0
        %v4799 = vmax.f32 %v4791, 0.0
        %v4800 = vmax.f32 %v4796, 0.0
        %v4801 = vld [vmem:[%s937] sm:$0xff]
        %v4802 = vld [vmem:[%s937 + $0x8] sm:$0xff]
        %v4803 = vld [vmem:[%s937 + $0x10] sm:$0xff]
        %v4804 = vld [vmem:[%s937 + $0x18] sm:$0xff]
        %v4805 = vld [vmem:[%s937 + $0x20] sm:$0xff]
        %v4806 = vld [vmem:[%s937 + $0x28] sm:$0xff]
        %v4807 = vld [vmem:[%s937 + $0x30] sm:$0xff]
        %v4808 = vld [vmem:[%s937 + $0x38] sm:$0xff]
        %v4809 = vld [vmem:[%s940] sm:$0x1]
        %v4811 = vlaneseq
        %v4812 = vshrl.u32 %v4811, 7
        %v4813 = vsub.s32 0, %v4812
        %v4814 = vrot.slane %v4809, %v4813
        %vm4816 = vcmask 523264
        %v4818 = vsel %vm4816, %v4799, 0
        %v4821 = vsel %vm4816, %v4800, 0
        %4823 = vmatprep.subr.mxu0 0.0
        %4824 = vmatpush1.msra.mxu0 %v4801
        %4825 = vmatprep.subr.mxu0 0.0
        %4826 = vmatpush1.msra.mxu0 %v4802
        %4827 = vmatprep.subr.mxu0 0.0
        %4828 = vmatpush1.msra.mxu0 %v4803
        %4829 = vmatprep.subr.mxu0 0.0
        %4830 = vmatpush1.msra.mxu0 %v4804
        %4831 = vmatprep.subr.mxu0 0.0
        %4832 = vmatpush1.msra.mxu0 %v4805
        %4833 = vmatprep.subr.mxu0 0.0
        %4834 = vmatpush1.msra.mxu0 %v4806
        %4835 = vmatprep.subr.mxu0 0.0
        %4836 = vmatpush1.msra.mxu0 %v4807
        %4837 = vmatprep.subr.mxu0 0.0
        %4838 = vmatpush1.msra.mxu0 %v4808
        %4839 = vmatprep.subr.mxu0 0.0
        %4840 = vmatpush1.msra.mxu0 0.0
        %4841 = vmatprep.subr.mxu0 0.0
        %4842 = vmatpush1.msra.mxu0 0.0
        %4843 = vmatprep.subr.mxu0 0.0
        %4844 = vmatpush1.msra.mxu0 0.0
        %4845 = vmatprep.subr.mxu0 0.0
        %4846 = vmatpush1.msra.mxu0 0.0
        %4847 = vmatprep.subr.mxu0 0.0
        %4848 = vmatpush1.msra.mxu0 0.0
        %4849 = vmatprep.subr.mxu0 0.0
        %4850 = vmatpush1.msra.mxu0 0.0
        %4851 = vmatprep.subr.mxu0 0.0
        %4852 = vmatpush1.msra.mxu0 0.0
        %4853 = vmatprep.subr.mxu0 0.0
        %4854 = vmatpush1.msra.mxu0 0.0
        %4855 = vmatprep.subr.mxu0 0.0
        %4856 = vmatpush1.msra.mxu0 0.0
        %4857 = vmatprep.subr.mxu0 0.0
        %4858 = vmatpush1.msra.mxu0 0.0
        %4859 = vmatprep.subr.mxu0 0.0
        %4860 = vmatpush1.msra.mxu0 0.0
        %4861 = vmatprep.subr.mxu0 0.0
        %4862 = vmatpush1.msra.mxu0 0.0
        %4863 = vmatprep.subr.mxu0 0.0
        %4864 = vmatpush1.msra.mxu0 0.0
        %4865 = vmatprep.subr.mxu0 0.0
        %4866 = vmatpush1.msra.mxu0 0.0
        %4867 = vmatprep.subr.mxu0 0.0
        %4868 = vmatpush1.msra.mxu0 0.0
        %4869 = vmatprep.subr.mxu0 0.0
        %4870 = vmatpush1.msra.mxu0 0.0
        %4871 = vmatprep.subr.mxu0 0.0
        %4872 = vmatpush1.msra.mxu0 0.0
        %4873 = vmatprep.subr.mxu0 0.0
        %4874 = vmatpush1.msra.mxu0 0.0
        %4875 = vmatprep.subr.mxu0 0.0
        %4876 = vmatpush1.msra.mxu0 0.0
        %4877 = vmatprep.subr.mxu0 0.0
        %4878 = vmatpush1.msra.mxu0 0.0
        %4879 = vmatprep.subr.mxu0 0.0
        %4880 = vmatpush1.msra.mxu0 0.0
        %4881 = vmatprep.subr.mxu0 0.0
        %4882 = vmatpush1.msra.mxu0 0.0
        %4883 = vmatprep.subr.mxu0 0.0
        %4884 = vmatpush1.msra.mxu0 0.0
        %4885 = vmatprep.subr.mxu0 0.0
        %4886 = vmatpush1.msra.mxu0 0.0
        %4887 = vmatprep.mubr.f32.mxu0 0.0
        %4888 = vmatmul.mubr.f32.gmra.mrb[0].mxu0 %v4818
        %v4889 = vpop.f32.mrb[0].mxu0
        %v4890 = vadd.f32 %v4814, %v4889
        %v4891 = vpop.f32.mrb[0].mxu0
        %4892 = vmatprep.mubr.f32.mxu0 0.0
        %4893 = vmatmul.mubr.f32.gmra.mrb[0].mxu0 %v4821
        %v4894 = vpop.f32.mrb[0].mxu0
        %v4895 = vadd.f32 %v4814, %v4894
        %v4896 = vpop.f32.mrb[0].mxu0
        %4897 = vdwg.mxu0
        %v4898 = vadd.f32 %v4890, %v4705
        %v4899 = vadd.f32 %v4895, %v4706
        %v4900 = vld [vmem:[%s955] sm:$0x1]
        %v4901 = vld [vmem:[%s958] sm:$0x1]
        %v4902 = vsel %vm974, %v4898, 0.0
        %4903 = vadd.xlane.f32.xlu0 %v4902
        %v4904 = vpop.xlane.xlu0 %4903
        %v4905 = vsel %vm974, %v4899, 0.0
        %4906 = vadd.xlane.f32.xlu0 %v4905
        %v4907 = vpop.xlane.xlu0 %4906
        %v4908 = vmul.f32 %v4904, %v2719
        %v4909 = vmul.f32 %v4907, %v2719
        %v4910 = vsub.f32 %v4898, %v4908
        %v4911 = vsub.f32 %v4899, %v4909
        %v4912 = vmul.f32 %v4910, %v4910
        %v4913 = vmul.f32 %v4911, %v4911
        %v4914 = vsel %vm974, %v4912, 0.0
        %4915 = vadd.xlane.f32.xlu0 %v4914
        %v4916 = vpop.xlane.xlu0 %4915
        %v4917 = vsel %vm974, %v4913, 0.0
        %4918 = vadd.xlane.f32.xlu0 %v4917
        %v4919 = vpop.xlane.xlu0 %4918
        %v4920 = vmul.f32 %v4916, %v2719
        %v4921 = vmul.f32 %v4919, %v2719
        %v4922 = vadd.f32 %v4920, 1e-05
        %v4923 = vadd.f32 %v4921, 1e-05
        %v4924 = vrsqrt.pop %v4922
        %v4925 = vrsqrt.pop %v4923
        %v4926 = vmul.f32 %v4910, %v4924
        %v4927 = vmul.f32 %v4911, %v4925
        %v4929 = vlaneseq
        %v4930 = vshrl.u32 %v4929, 7
        %v4931 = vsub.s32 0, %v4930
        %v4932 = vrot.slane %v4900, %v4931
        %v4934 = vmul.f32 %v4926, %v4932
        %v4935 = vmul.f32 %v4927, %v4932
        %v4937 = vlaneseq
        %v4938 = vshrl.u32 %v4937, 7
        %v4939 = vsub.s32 0, %v4938
        %v4940 = vrot.slane %v4901, %v4939
        %v4942 = vadd.f32 %v4934, %v4940
        %v4943 = vadd.f32 %v4935, %v4940
        %4944 = vst.msk [vmem:[#allocation2] sm:$0xff] %vm974, %v4942
        %4945 = vst.msk [vmem:[#allocation2 + $0x8] sm:$0xff] %vm974, %v4943
        %p4946 = scmp.eq.s32.totalorder %s39, 1
        // Predicated region
        $region129: #{tpu_custom_call.1} parent=95 // pred_check
          %p4947 = pneg %p4946
        $region130: #{tpu_custom_call.1} parent=95 // pred_check_branch
          %4949 = sbr.rel (%p4947) target = $region132
        $region131: #{tpu_custom_call.1} parent=95 // pred_region
          %4950 = vst.msk [vmem:[#allocation15] sm:$0xff] %vm974, %v4942
          %4951 = vst.msk [vmem:[#allocation15 + $0x8] sm:$0xff] %vm974, %v4943
        $region132: #{tpu_custom_call.1} parent=95 // pred_fallthru
          _
        // Predicated region
        $region133: #{tpu_custom_call.1} parent=95 // pred_check
          %p4952 = pneg %p531
        $region134: #{tpu_custom_call.1} parent=95 // pred_check_branch
          %4954 = sbr.rel (%p4952) target = $region136
        $region135: #{tpu_custom_call.1} parent=95 // pred_region
          %s4956 = ssub.s32 256, 256
          %4957 = vsyncadd [#allocation5], %s4956
          %s4958 = sshll.u32 [#allocation15], 4
          %s4959 = int_to_ptr.vmem [resolvable:$true] %s4958
          %4964 = dma.vmem_to_hbm [thread:$0]  %s4959, 256, %s19, [#allocation5], 128, 128, 8
        $region136: #{tpu_custom_call.1} parent=95 // pred_fallthru
          _
        // Predicated region
        $region137: #{tpu_custom_call.1} parent=95 // pred_check
          %p4965 = pneg %p531
        $region138: #{tpu_custom_call.1} parent=95 // pred_check_branch
          %4967 = sbr.rel (%p4965) target = $region140
        $region139: #{tpu_custom_call.1} parent=95 // pred_region
          %4968 = dma.done [#allocation5], 256
        $region140: #{tpu_custom_call.1} parent=95 // pred_fallthru
          _
      $region96: #{tpu_custom_call.1} parent=5 // pred_fallthru
        _
      %p4969 = scmp.le.s32.totalorder 2, %s34
      // Predicated region
      $region141: #{tpu_custom_call.1} parent=5 // pred_check
        %p4970 = pneg %p4969
      $region142: #{tpu_custom_call.1} parent=5 // pred_check_branch
        %4972 = sbr.rel (%p4970) target = $region144
      $region143: #{tpu_custom_call.1} parent=5 // pred_region
        %s4973 = ssub.s32 %s34, 2
      $region144: #{tpu_custom_call.1} parent=5 // pred_fallthru
        _
    $region6: #{tpu_custom_call.1} parent=1 // loop_footer
      %s38 = sadd.s32 1, %s34
    $region7: #{tpu_custom_call.1} parent=1 // loop_footer_branch
      %33 = sbr.rel target = $region3
    $region8: #{tpu_custom_call.1} parent=1 // loop_exit
      _
    %4974 = vsyncpa [#allocation4], 1
    %s4975 = scalar_lea.sflag [#allocation4], 1
    %4976 = vsyncpa %s4975, 1
    %4977 = vsyncpa [#allocation7], 1
    %4978 = vsyncpa [#allocation10], 1
    %s4979 = scalar_lea.sflag [#allocation10], 1
    %4980 = vsyncpa %s4979, 1
    %4981 = vsyncpa [#allocation13], 1
    %s4982 = scalar_lea.sflag [#allocation13], 1
    %4983 = vsyncpa %s4982, 1
    %4984 = vsyncpa [#allocation5], 1
    %s4985 = scalar_lea.sflag [#allocation5], 1
    %4986 = vsyncpa %s4985, 1

</llo_original>
